<compile_context>
chip_gen: v6e
topology: v6e:2x2x1
jax: 0.10.0
libtpu: 0.0.40
codegen_flags: <defaults>
</compile_context>

<pallas_src>
import functools

import jax
import jax.numpy as jnp
from jax.experimental import pallas as pl
from jax.experimental.pallas import tpu as pltpu

EPS = 1e-5  # LayerNormalization eps

PARAM_NAMES = (
    "wq", "wk", "wv", "bq", "bk", "bv", "wso", "bso", "g1", "be1",
    "wck", "wcv", "bck", "bcv", "wcq", "bcq", "wco", "bco", "g2", "be2",
    "wf1", "bf1", "wf2", "bf2", "g3", "be3",
)


def _layernorm(h, gamma, beta):
    mean = jnp.mean(h, axis=-1, keepdims=True)
    var = jnp.mean((h - mean) ** 2, axis=-1, keepdims=True)  # biased, like ref
    return gamma * ((h - mean) / jnp.sqrt(var + EPS)) + beta


def decoder_layer_kernel(*refs, num_heads, batch_tile, seq_len,
                         self_mask_mode, cross_mask_mode):
    (x_ref, y_ref, sm_ref, cm_ref,
     wq, wk, wv, bq, bk, bv, wso, bso, g1, be1,
     wck, wcv, bck, bcv, wcq, bcq, wco, bco, g2, be2,
     wf1, bf1, wf2, bf2, g3, be3, o_ref, ctx_ref) = refs

    f32, bf16 = jnp.float32, jnp.bfloat16
    S, Bt, H = seq_len, batch_tile, num_heads
    D = y_ref.shape[-1]
    hd = D // H
    scale = 1.0 / (hd ** 0.5)

    def mxu(a_bf16, w_ref):
        # bf16 operands, f32 accumulation on the MXU.
        return jnp.dot(a_bf16, w_ref[...], preferred_element_type=f32)

    def attention(q_bf, k_bf, v_bf, mask_ref, mode):
        # q/k/v: (Bt*S, D) bf16 (already scaled / biased, cast once).
        # Writes the normalized per-head context into ctx_ref (VMEM scratch).
        q3 = q_bf.reshape(Bt, S, D)
        k3 = k_bf.reshape(Bt, S, D)
        v3 = v_bf.reshape(Bt, S, D)
        if mode == "none":
            madd = None
        elif mode == "shared":                      # (S, S) -> broadcast over Bt
            madd = mask_ref[...].astype(f32)[None, :, :]
        else:                                       # per-batch (Bt, S, S)
            madd = mask_ref[...].astype(f32)
        for h in range(H):
            sl = slice(h * hd, (h + 1) * hd)
            # q.k^T batched over the batch tile; head_dim of BOTH operands is
            # the contraction dim (no explicit transpose / XLU relayout).
            s = jnp.einsum("bqd,bkd->bqk", q3[:, :, sl], k3[:, :, sl],
                           preferred_element_type=f32)
            if madd is not None:
                s = s + madd
            mx = jnp.max(s, axis=-1, keepdims=True)
            e = jnp.exp(s - mx)
            l = jnp.sum(e, axis=-1, keepdims=True)
            ctx_h = jnp.einsum("bqk,bkd->bqd", e.astype(bf16), v3[:, :, sl],
                               preferred_element_type=f32)
            # Deferred softmax normalization: scale the (S, hd) context, not
            # the (S, S) probabilities; reciprocal goes to the EUP slot.
            ctx_h = ctx_h * pl.reciprocal(l, approx=True)
            ctx_ref[:, sl] = ctx_h.reshape(Bt * S, hd)

    x_bf = x_ref[...].astype(bf16)       # encoder output (only used as KV src)
    y0 = y_ref[...].astype(f32)          # decoder stream (f32 for residual/LN)
    y0_bf = y0.astype(bf16)

    # ---------------- self attention ----------------
    # 1/sqrt(hd) folded into q right after the projection (D-wide multiply).
    q = ((mxu(y0_bf, wq) + bq[...]) * scale).astype(bf16)
    k = (mxu(y0_bf, wk) + bk[...]).astype(bf16)
    v = (mxu(y0_bf, wv) + bv[...]).astype(bf16)
    attention(q, k, v, sm_ref, self_mask_mode)
    sa = mxu(ctx_ref[...].astype(bf16), wso) + bso[...]   # one (Bt*S,D)@(D,D)
    # dropout1: identity (inference)
    y1 = _layernorm(sa + y0, g1[...], be1[...])
    y1_bf = y1.astype(bf16)

    # ---------------- encoder-decoder (cross) attention ----------------
    kc = (mxu(x_bf, wck) + bck[...]).astype(bf16)
    vc = (mxu(x_bf, wcv) + bcv[...]).astype(bf16)
    qc = ((mxu(y1_bf, wcq) + bcq[...]) * scale).astype(bf16)
    attention(qc, kc, vc, cm_ref, cross_mask_mode)
    ca = mxu(ctx_ref[...].astype(bf16), wco) + bco[...]
    # dropout2: identity (inference)
    y2 = _layernorm(ca + y1, g2[...], be2[...])
    y2_bf = y2.astype(bf16)

    # ---------------- position-wise FFN ----------------
    h1 = jnp.maximum(mxu(y2_bf, wf1) + bf1[...], 0.0)   # ReLU; inner dropout=id
    ff = mxu(h1.astype(bf16), wf2) + bf2[...]
    # dropout3: identity (inference)
    y3 = _layernorm(ff + y2, g3[...], be3[...])

    # NOTE: inter-layer stream kept f32 for residual precision; switching the
    # out_shape / inputs to bf16 would halve inter-layer HBM traffic.
    o_ref[...] = y3.astype(o_ref.dtype)


def _vmem_limit_bytes(rows, d_model, ffn_hidden, batch_tile, seq_len, params):
    weight_bytes = sum(int(p.size) * p.dtype.itemsize for p in params)
    io_bytes = 2 * (3 * rows * d_model * 4)                 # x, y, out (2-buf)
    act_bytes = 10 * rows * max(d_model, ffn_hidden) * 4    # live activations
    score_bytes = 3 * batch_tile * seq_len * seq_len * 4    # per-head s / e
    scratch_bytes = rows * d_model * 4                      # ctx slab
    need = weight_bytes + io_bytes + act_bytes + score_bytes + scratch_bytes
    # Raise the scoped-VMEM cap above the Mosaic default (16/32 MiB), but stay
    # within v7x's 64 MiB physical VMEM.  On 128 MiB parts (v5e/v6e) this can
    # safely grow to ~100 MiB for bigger batch tiles.
    return int(min(64 * 1024 * 1024, max(32 * 1024 * 1024, 2 * need)))


def decoder_layer(x2d, y2d, smask, cmask, ordered_params, *, num_heads, batch,
                  seq_len, batch_tile, self_mask_mode, cross_mask_mode):
    BS, D = y2d.shape
    assert BS == batch * seq_len
    assert batch % batch_tile == 0
    nb = batch // batch_tile
    rows = batch_tile * seq_len
    ffn_hidden = ordered_params[PARAM_NAMES.index("wf1")].shape[1]

    seq_spec = pl.BlockSpec((rows, D), lambda i: (i, 0))

    def mask_spec(m, mode):
        if mode == "batch":                           # per-batch (B, S, S) mask
            return pl.BlockSpec((batch_tile,) + m.shape[1:],
                                lambda i: (i, 0, 0))
        # "shared"/"none": tiny grid-invariant block, fetched once.
        return pl.BlockSpec(m.shape, lambda i, nd=m.ndim: (0,) * nd)

    # Full-array, grid-invariant blocks -> weights stay resident across steps.
    # (For v7x VMEM headroom these could additionally be single-buffered via
    # pipeline_mode=pl.Buffered(1).)
    param_specs = [pl.BlockSpec(p.shape, lambda i, nd=p.ndim: (0,) * nd)
                   for p in ordered_params]

    kernel = functools.partial(
        decoder_layer_kernel, num_heads=num_heads, batch_tile=batch_tile,
        seq_len=seq_len, self_mask_mode=self_mask_mode,
        cross_mask_mode=cross_mask_mode)

    return pl.pallas_call(
        kernel,
        out_shape=jax.ShapeDtypeStruct((BS, D), jnp.float32),
        grid=(nb,),
        in_specs=[seq_spec, seq_spec, mask_spec(smask, self_mask_mode),
                  mask_spec(cmask, cross_mask_mode)] + param_specs,
        out_specs=pl.BlockSpec((rows, D), lambda i: (i, 0)),
        scratch_shapes=[pltpu.VMEM((rows, D), jnp.float32)],   # ctx slab
        compiler_params=pltpu.CompilerParams(
            dimension_semantics=("parallel",),
            vmem_limit_bytes=_vmem_limit_bytes(rows, D, ffn_hidden, batch_tile,
                                               seq_len, ordered_params)),
    )(x2d, y2d, smask, cmask, *ordered_params)


def decoder_forward(x, y_emb, self_mask, cross_mask, layer_params, *,
                    num_heads, batch_tile=None):
    """Decoder.forward minus SentenceEmbedding: stack of fused DecoderLayers.

    Masks may be additive (S, S) slabs (shared across the batch), per-batch
    (B, S, S), or None (no masking, e.g. the usual all-zeros cross mask)."""
    B, S, D = y_emb.shape
    if batch_tile is None:
        batch_tile = max(1, B // 2)     # >=2 grid steps -> both v7x TCs busy
    while B % batch_tile:
        batch_tile -= 1
    x2d = x.reshape(B * S, D).astype(jnp.float32)
    y2d = y_emb.reshape(B * S, D).astype(jnp.float32)

    def prep_mask(m):
        if m is None:
            return jnp.zeros((1, 1), jnp.bfloat16), "none"
        m = m.astype(jnp.bfloat16)      # safe for {0, -1e9}-style masks
        return (m, "shared") if m.ndim == 2 else (m, "batch")

    sm, sm_mode = prep_mask(self_mask)
    cm, cm_mode = prep_mask(cross_mask)

    for pd in layer_params:
        ordered = tuple(pd[n] for n in PARAM_NAMES)
        y2d = decoder_layer(x2d, y2d, sm, cm, ordered, num_heads=num_heads,
                            batch=B, seq_len=S, batch_tile=batch_tile,
                            self_mask_mode=sm_mode, cross_mask_mode=cm_mode)
    return y2d.reshape(B, S, D)


# -------- host-side parameter prep (reorder interleaved QKV / KV heads) -----
def init_layer_params_torch_layout(key, d_model, ffn_hidden):
    ks = jax.random.split(key, 10)
    w = lambda k, shp: (0.08 * jax.random.normal(k, shp)).astype(jnp.float32)
    f32 = jnp.float32
    return {
        "w_qkv": w(ks[0], (d_model, 3 * d_model)), "b_qkv": w(ks[1], (1, 3 * d_model)),
        "w_so": w(ks[2], (d_model, d_model)),      "b_so": w(ks[3], (1, d_model)),
        "g1": jnp.ones((1, d_model), f32), "be1": jnp.zeros((1, d_model), f32),
        "w_kv": w(ks[4], (d_model, 2 * d_model)),  "b_kv": w(ks[5], (1, 2 * d_model)),
        "w_q": w(ks[6], (d_model, d_model)),       "b_q": w(ks[7], (1, d_model)),
        "w_co": w(ks[8], (d_model, d_model)),      "b_co": w(ks[9], (1, d_model)),
        "g2": jnp.ones((1, d_model), f32), "be2": jnp.zeros((1, d_model), f32),
        "w_f1": w(ks[0], (d_model, ffn_hidden)),   "b_f1": jnp.zeros((1, ffn_hidden), f32),
        "w_f2": w(ks[1], (ffn_hidden, d_model)),   "b_f2": jnp.zeros((1, d_model), f32),
        "g3": jnp.ones((1, d_model), f32), "be3": jnp.zeros((1, d_model), f32),
    }


def prep_layer_params(raw, num_heads):
    """Split interleaved per-head [q|k|v] columns into contiguous Q|K|V blocks,
    cast matmul weights to bf16 (f32 accumulation happens in the kernel)."""
    D = raw["w_qkv"].shape[0]
    H, hd = num_heads, raw["w_qkv"].shape[0] // num_heads
    bf16, f32 = jnp.bfloat16, jnp.float32
    wqkv = raw["w_qkv"].reshape(D, H, 3, hd)
    bqkv = raw["b_qkv"].reshape(1, H, 3, hd)
    wkv = raw["w_kv"].reshape(D, H, 2, hd)
    bkv = raw["b_kv"].reshape(1, H, 2, hd)
    return {
        "wq": wqkv[:, :, 0, :].reshape(D, D).astype(bf16),
        "wk": wqkv[:, :, 1, :].reshape(D, D).astype(bf16),
        "wv": wqkv[:, :, 2, :].reshape(D, D).astype(bf16),
        "bq": bqkv[:, :, 0, :].reshape(1, D).astype(f32),
        "bk": bqkv[:, :, 1, :].reshape(1, D).astype(f32),
        "bv": bqkv[:, :, 2, :].reshape(1, D).astype(f32),
        "wso": raw["w_so"].astype(bf16), "bso": raw["b_so"].astype(f32),
        "g1": raw["g1"].astype(f32), "be1": raw["be1"].astype(f32),
        "wck": wkv[:, :, 0, :].reshape(D, D).astype(bf16),
        "wcv": wkv[:, :, 1, :].reshape(D, D).astype(bf16),
        "bck": bkv[:, :, 0, :].reshape(1, D).astype(f32),
        "bcv": bkv[:, :, 1, :].reshape(1, D).astype(f32),
        "wcq": raw["w_q"].astype(bf16), "bcq": raw["b_q"].astype(f32),
        "wco": raw["w_co"].astype(bf16), "bco": raw["b_co"].astype(f32),
        "g2": raw["g2"].astype(f32), "be2": raw["be2"].astype(f32),
        "wf1": raw["w_f1"].astype(bf16), "bf1": raw["b_f1"].astype(f32),
        "wf2": raw["w_f2"].astype(bf16), "bf2": raw["b_f2"].astype(f32),
        "g3": raw["g3"].astype(f32), "be3": raw["be3"].astype(f32),
    }


# ---------------- pure-JAX reference (same math, same bf16 casts) -----------
def ref_decoder_layer(x, y, smask, cmask, p, num_heads):
    B, S, D = y.shape
    H, hd = num_heads, D // num_heads
    f32, bf16 = jnp.float32, jnp.bfloat16
    scale = 1.0 / (hd ** 0.5)

    def mm(a, w):
        return jnp.einsum("...ik,kj->...ij", a.astype(bf16), w.astype(bf16),
                          preferred_element_type=f32)

    def ln(h, g, be):
        m = jnp.mean(h, -1, keepdims=True)
        v = jnp.mean((h - m) ** 2, -1, keepdims=True)
        return g * ((h - m) / jnp.sqrt(v + EPS)) + be

    def attn(q, k, v, mask):
        qh = q.reshape(B, S, H, hd)
        kh = k.reshape(B, S, H, hd)
        vh = v.reshape(B, S, H, hd)
        s = jnp.einsum("bqhd,bkhd->bhqk", qh.astype(bf16), kh.astype(bf16),
                       preferred_element_type=f32)
        if mask is not None:
            ma = mask.astype(f32)
            if ma.ndim == 3:
                ma = ma[:, None]
            s = s + ma
        pr = jax.nn.softmax(s, axis=-1)
        o = jnp.einsum("bhqk,bkhd->bqhd", pr.astype(bf16), vh.astype(bf16),
                       preferred_element_type=f32)
        return o.reshape(B, S, D)

    q = (mm(y, p["wq"]) + p["bq"]) * scale
    k = mm(y, p["wk"]) + p["bk"]
    v = mm(y, p["wv"]) + p["bv"]
    y1 = ln(mm(attn(q, k, v, smask), p["wso"]) + p["bso"] + y, p["g1"], p["be1"])
    kk = mm(x, p["wck"]) + p["bck"]
    vv = mm(x, p["wcv"]) + p["bcv"]
    qq = (mm(y1, p["wcq"]) + p["bcq"]) * scale
    y2 = ln(mm(attn(qq, kk, vv, cmask), p["wco"]) + p["bco"] + y1, p["g2"], p["be2"])
    ff = mm(jnp.maximum(mm(y2, p["wf1"]) + p["bf1"], 0.0), p["wf2"]) + p["bf2"]
    return ln(ff + y2, p["g3"], p["be3"])


if __name__ == "__main__":
    d_model, ffn_hidden, num_heads, num_layers = 32, 64, 4, 2
    B, S = 2, 8

    key = jax.random.PRNGKey(0)
    kx, ky, kp = jax.random.split(key, 3)
    layer_keys = jax.random.split(kp, num_layers)
    raw_layers = [init_layer_params_torch_layout(k, d_model, ffn_hidden)
                  for k in layer_keys]
    prepped = [prep_layer_params(r, num_heads) for r in raw_layers]

    x = jax.random.normal(kx, (B, S, d_model), jnp.float32)   # encoder output
    y = jax.random.normal(ky, (B, S, d_model), jnp.float32)   # embedded dec in

    causal = jnp.tril(jnp.ones((S, S), jnp.bool_))
    self_mask = jnp.where(causal, 0.0, -1e9).astype(jnp.float32)   # shared (S,S)
    cross_mask = None                       # all-zeros cross mask -> dropped

    out = decoder_forward(x, y, self_mask, cross_mask, prepped,
                          num_heads=num_heads)
    out = jax.block_until_ready(out)

    sm_bf = self_mask.astype(jnp.bfloat16)  # kernel sees bf16 masks
    ref = y
    for pd in prepped:
        ref = ref_decoder_layer(x, ref, sm_bf, None, pd, num_heads)

    assert out.shape == (B, S, d_model)
    err = float(jnp.max(jnp.abs(out - ref)))
    # tolerance covers approx-reciprocal softmax + bf16 MXU operands
    assert err < 1e-2, f"mismatch vs reference: max abs err = {err}"
    print("KERNEL_OK")
</pallas_src>

<mosaic_0001>
module attributes {stable_mosaic.version = 11 : i64} {
  func.func @decoder_layer_kernel(%arg0: i32, %arg1: memref<8x32xf32, #tpu.memory_space<vmem>>, %arg2: memref<8x32xf32, #tpu.memory_space<vmem>>, %arg3: memref<8x8xbf16, #tpu.memory_space<vmem>>, %arg4: memref<1x1xbf16, #tpu.memory_space<vmem>>, %arg5: memref<32x32xbf16, #tpu.memory_space<vmem>>, %arg6: memref<32x32xbf16, #tpu.memory_space<vmem>>, %arg7: memref<32x32xbf16, #tpu.memory_space<vmem>>, %arg8: memref<1x32xf32, #tpu.memory_space<vmem>>, %arg9: memref<1x32xf32, #tpu.memory_space<vmem>>, %arg10: memref<1x32xf32, #tpu.memory_space<vmem>>, %arg11: memref<32x32xbf16, #tpu.memory_space<vmem>>, %arg12: memref<1x32xf32, #tpu.memory_space<vmem>>, %arg13: memref<1x32xf32, #tpu.memory_space<vmem>>, %arg14: memref<1x32xf32, #tpu.memory_space<vmem>>, %arg15: memref<32x32xbf16, #tpu.memory_space<vmem>>, %arg16: memref<32x32xbf16, #tpu.memory_space<vmem>>, %arg17: memref<1x32xf32, #tpu.memory_space<vmem>>, %arg18: memref<1x32xf32, #tpu.memory_space<vmem>>, %arg19: memref<32x32xbf16, #tpu.memory_space<vmem>>, %arg20: memref<1x32xf32, #tpu.memory_space<vmem>>, %arg21: memref<32x32xbf16, #tpu.memory_space<vmem>>, %arg22: memref<1x32xf32, #tpu.memory_space<vmem>>, %arg23: memref<1x32xf32, #tpu.memory_space<vmem>>, %arg24: memref<1x32xf32, #tpu.memory_space<vmem>>, %arg25: memref<32x64xbf16, #tpu.memory_space<vmem>>, %arg26: memref<1x64xf32, #tpu.memory_space<vmem>>, %arg27: memref<64x32xbf16, #tpu.memory_space<vmem>>, %arg28: memref<1x32xf32, #tpu.memory_space<vmem>>, %arg29: memref<1x32xf32, #tpu.memory_space<vmem>>, %arg30: memref<1x32xf32, #tpu.memory_space<vmem>>, %arg31: memref<8x32xf32, #tpu.memory_space<vmem>>, %arg32: memref<8x32xf32, #tpu.memory_space<vmem>>) attributes {dimension_semantics = [#tpu.dimension_semantics<parallel>], iteration_bounds = array<i64: 2>, scalar_prefetch = 0 : i64, scratch_operands = 1 : i64, tpu.core_type = #tpu.core_type<tc>, window_params = [{transform_indices = @transform_0, window_bounds = array<i64: 8, 32>}, {transform_indices = @transform_1, window_bounds = array<i64: 8, 32>}, {pipeline_mode = #tpu.pipeline_mode<synchronous>, transform_indices = @transform_2, window_bounds = array<i64: 8, 8>}, {pipeline_mode = #tpu.pipeline_mode<synchronous>, transform_indices = @transform_3, window_bounds = array<i64: 1, 1>}, {pipeline_mode = #tpu.pipeline_mode<synchronous>, transform_indices = @transform_4, window_bounds = array<i64: 32, 32>}, {pipeline_mode = #tpu.pipeline_mode<synchronous>, transform_indices = @transform_5, window_bounds = array<i64: 32, 32>}, {pipeline_mode = #tpu.pipeline_mode<synchronous>, transform_indices = @transform_6, window_bounds = array<i64: 32, 32>}, {pipeline_mode = #tpu.pipeline_mode<synchronous>, transform_indices = @transform_7, window_bounds = array<i64: 1, 32>}, {pipeline_mode = #tpu.pipeline_mode<synchronous>, transform_indices = @transform_8, window_bounds = array<i64: 1, 32>}, {pipeline_mode = #tpu.pipeline_mode<synchronous>, transform_indices = @transform_9, window_bounds = array<i64: 1, 32>}, {pipeline_mode = #tpu.pipeline_mode<synchronous>, transform_indices = @transform_10, window_bounds = array<i64: 32, 32>}, {pipeline_mode = #tpu.pipeline_mode<synchronous>, transform_indices = @transform_11, window_bounds = array<i64: 1, 32>}, {pipeline_mode = #tpu.pipeline_mode<synchronous>, transform_indices = @transform_12, window_bounds = array<i64: 1, 32>}, {pipeline_mode = #tpu.pipeline_mode<synchronous>, transform_indices = @transform_13, window_bounds = array<i64: 1, 32>}, {pipeline_mode = #tpu.pipeline_mode<synchronous>, transform_indices = @transform_14, window_bounds = array<i64: 32, 32>}, {pipeline_mode = #tpu.pipeline_mode<synchronous>, transform_indices = @transform_15, window_bounds = array<i64: 32, 32>}, {pipeline_mode = #tpu.pipeline_mode<synchronous>, transform_indices = @transform_16, window_bounds = array<i64: 1, 32>}, {pipeline_mode = #tpu.pipeline_mode<synchronous>, transform_indices = @transform_17, window_bounds = array<i64: 1, 32>}, {pipeline_mode = #tpu.pipeline_mode<synchronous>, transform_indices = @transform_18, window_bounds = array<i64: 32, 32>}, {pipeline_mode = #tpu.pipeline_mode<synchronous>, transform_indices = @transform_19, window_bounds = array<i64: 1, 32>}, {pipeline_mode = #tpu.pipeline_mode<synchronous>, transform_indices = @transform_20, window_bounds = array<i64: 32, 32>}, {pipeline_mode = #tpu.pipeline_mode<synchronous>, transform_indices = @transform_21, window_bounds = array<i64: 1, 32>}, {pipeline_mode = #tpu.pipeline_mode<synchronous>, transform_indices = @transform_22, window_bounds = array<i64: 1, 32>}, {pipeline_mode = #tpu.pipeline_mode<synchronous>, transform_indices = @transform_23, window_bounds = array<i64: 1, 32>}, {pipeline_mode = #tpu.pipeline_mode<synchronous>, transform_indices = @transform_24, window_bounds = array<i64: 32, 64>}, {pipeline_mode = #tpu.pipeline_mode<synchronous>, transform_indices = @transform_25, window_bounds = array<i64: 1, 64>}, {pipeline_mode = #tpu.pipeline_mode<synchronous>, transform_indices = @transform_26, window_bounds = array<i64: 64, 32>}, {pipeline_mode = #tpu.pipeline_mode<synchronous>, transform_indices = @transform_27, window_bounds = array<i64: 1, 32>}, {pipeline_mode = #tpu.pipeline_mode<synchronous>, transform_indices = @transform_28, window_bounds = array<i64: 1, 32>}, {pipeline_mode = #tpu.pipeline_mode<synchronous>, transform_indices = @transform_29, window_bounds = array<i64: 1, 32>}, {transform_indices = @transform_30, window_bounds = array<i64: 8, 32>}]} {
    %c0 = arith.constant 0 : index
    %c0_0 = arith.constant 0 : index
    %0 = vector.load %arg1[%c0, %c0_0] : memref<8x32xf32, #tpu.memory_space<vmem>>, vector<8x32xf32>
    %1 = arith.truncf %0 : vector<8x32xf32> to vector<8x32xbf16>
    %c0_1 = arith.constant 0 : index
    %c0_2 = arith.constant 0 : index
    %2 = vector.load %arg2[%c0_1, %c0_2] : memref<8x32xf32, #tpu.memory_space<vmem>>, vector<8x32xf32>
    %3 = arith.truncf %2 : vector<8x32xf32> to vector<8x32xbf16>
    %c0_3 = arith.constant 0 : index
    %c0_4 = arith.constant 0 : index
    %4 = vector.load %arg5[%c0_3, %c0_4] : memref<32x32xbf16, #tpu.memory_space<vmem>>, vector<32x32xbf16>
    %cst = arith.constant dense<0.000000e+00> : vector<8x32xf32>
    %5 = tpu.matmul %3, %4, %cst {dimension_numbers = #tpu.dot_dimension_numbers<[1], [0], [0], [1], [0, 0, 1, 1], [], []>} : vector<8x32xbf16>, vector<32x32xbf16>, vector<8x32xf32> -> vector<8x32xf32>
    %c0_5 = arith.constant 0 : index
    %c0_6 = arith.constant 0 : index
    %6 = vector.load %arg8[%c0_5, %c0_6] : memref<1x32xf32, #tpu.memory_space<vmem>>, vector<1x32xf32>
    %7 = vector.broadcast %6 : vector<1x32xf32> to vector<8x32xf32>
    %8 = arith.addf %5, %7 : vector<8x32xf32>
    %cst_7 = arith.constant 0.353553385 : f32
    %9 = vector.broadcast %cst_7 : f32 to vector<8x32xf32>
    %10 = arith.mulf %8, %9 : vector<8x32xf32>
    %11 = arith.truncf %10 : vector<8x32xf32> to vector<8x32xbf16>
    %c0_8 = arith.constant 0 : index
    %c0_9 = arith.constant 0 : index
    %12 = vector.load %arg6[%c0_8, %c0_9] : memref<32x32xbf16, #tpu.memory_space<vmem>>, vector<32x32xbf16>
    %cst_10 = arith.constant dense<0.000000e+00> : vector<8x32xf32>
    %13 = tpu.matmul %3, %12, %cst_10 {dimension_numbers = #tpu.dot_dimension_numbers<[1], [0], [0], [1], [0, 0, 1, 1], [], []>} : vector<8x32xbf16>, vector<32x32xbf16>, vector<8x32xf32> -> vector<8x32xf32>
    %c0_11 = arith.constant 0 : index
    %c0_12 = arith.constant 0 : index
    %14 = vector.load %arg9[%c0_11, %c0_12] : memref<1x32xf32, #tpu.memory_space<vmem>>, vector<1x32xf32>
    %15 = vector.broadcast %14 : vector<1x32xf32> to vector<8x32xf32>
    %16 = arith.addf %13, %15 : vector<8x32xf32>
    %17 = arith.truncf %16 : vector<8x32xf32> to vector<8x32xbf16>
    %c0_13 = arith.constant 0 : index
    %c0_14 = arith.constant 0 : index
    %18 = vector.load %arg7[%c0_13, %c0_14] : memref<32x32xbf16, #tpu.memory_space<vmem>>, vector<32x32xbf16>
    %cst_15 = arith.constant dense<0.000000e+00> : vector<8x32xf32>
    %19 = tpu.matmul %3, %18, %cst_15 {dimension_numbers = #tpu.dot_dimension_numbers<[1], [0], [0], [1], [0, 0, 1, 1], [], []>} : vector<8x32xbf16>, vector<32x32xbf16>, vector<8x32xf32> -> vector<8x32xf32>
    %c0_16 = arith.constant 0 : index
    %c0_17 = arith.constant 0 : index
    %20 = vector.load %arg10[%c0_16, %c0_17] : memref<1x32xf32, #tpu.memory_space<vmem>>, vector<1x32xf32>
    %21 = vector.broadcast %20 : vector<1x32xf32> to vector<8x32xf32>
    %22 = arith.addf %19, %21 : vector<8x32xf32>
    %23 = arith.truncf %22 : vector<8x32xf32> to vector<8x32xbf16>
    %24 = vector.shape_cast %11 : vector<8x32xbf16> to vector<1x8x32xbf16>
    %25 = vector.shape_cast %17 : vector<8x32xbf16> to vector<1x8x32xbf16>
    %26 = vector.shape_cast %23 : vector<8x32xbf16> to vector<1x8x32xbf16>
    %c0_18 = arith.constant 0 : index
    %c0_19 = arith.constant 0 : index
    %27 = vector.load %arg3[%c0_18, %c0_19] : memref<8x8xbf16, #tpu.memory_space<vmem>>, vector<8x8xbf16>
    %28 = arith.extf %27 : vector<8x8xbf16> to vector<8x8xf32>
    %29 = vector.shape_cast %28 : vector<8x8xf32> to vector<1x8x8xf32>
    %30 = vector.extract_strided_slice %24 {offsets = [0, 0, 0], sizes = [1, 8, 8], strides = [1, 1, 1]} : vector<1x8x32xbf16> to vector<1x8x8xbf16>
    %31 = vector.extract_strided_slice %25 {offsets = [0, 0, 0], sizes = [1, 8, 8], strides = [1, 1, 1]} : vector<1x8x32xbf16> to vector<1x8x8xbf16>
    "tpu.trace_start"() <{level = 10 : i32, message = "bqd,bkd->bqk"}> : () -> ()
    %cst_20 = arith.constant dense<0.000000e+00> : vector<1x8x8xf32>
    %32 = tpu.matmul %30, %31, %cst_20 {dimension_numbers = #tpu.dot_dimension_numbers<[2], [2], [1], [1], [0, 0, 0, 1, 1, 1], [0], [0]>} : vector<1x8x8xbf16>, vector<1x8x8xbf16>, vector<1x8x8xf32> -> vector<1x8x8xf32>
    "tpu.trace_stop"() : () -> ()
    %33 = arith.addf %32, %29 : vector<1x8x8xf32>
    %cst_21 = arith.constant dense<0xFF800000> : vector<1x8xf32>
    %34 = vector.multi_reduction <maximumf>, %33, %cst_21 [2] : vector<1x8x8xf32> to vector<1x8xf32>
    %35 = vector.shape_cast %34 : vector<1x8xf32> to vector<1x8x1xf32>
    %36 = vector.broadcast %35 : vector<1x8x1xf32> to vector<1x8x8xf32>
    %37 = arith.subf %33, %36 : vector<1x8x8xf32>
    %38 = math.exp %37 : vector<1x8x8xf32>
    %cst_22 = arith.constant dense<0.000000e+00> : vector<1x8xf32>
    %39 = vector.multi_reduction <add>, %38, %cst_22 [2] : vector<1x8x8xf32> to vector<1x8xf32>
    %40 = vector.shape_cast %39 : vector<1x8xf32> to vector<1x8x1xf32>
    %41 = arith.truncf %38 : vector<1x8x8xf32> to vector<1x8x8xbf16>
    %42 = vector.extract_strided_slice %26 {offsets = [0, 0, 0], sizes = [1, 8, 8], strides = [1, 1, 1]} : vector<1x8x32xbf16> to vector<1x8x8xbf16>
    "tpu.trace_start"() <{level = 10 : i32, message = "bqk,bkd->bqd"}> : () -> ()
    %cst_23 = arith.constant dense<0.000000e+00> : vector<1x8x8xf32>
    %43 = tpu.matmul %41, %42, %cst_23 {dimension_numbers = #tpu.dot_dimension_numbers<[2], [1], [1], [2], [0, 0, 0, 1, 1, 2], [0], [0]>} : vector<1x8x8xbf16>, vector<1x8x8xbf16>, vector<1x8x8xf32> -> vector<1x8x8xf32>
    "tpu.trace_stop"() : () -> ()
    %44 = tpu.reciprocal %40 {approx = true} : vector<1x8x1xf32> -> vector<1x8x1xf32>
    %45 = vector.broadcast %44 : vector<1x8x1xf32> to vector<1x8x8xf32>
    %46 = arith.mulf %43, %45 : vector<1x8x8xf32>
    %47 = vector.shape_cast %46 : vector<1x8x8xf32> to vector<8x8xf32>
    %c0_24 = arith.constant 0 : index
    %c0_25 = arith.constant 0 : index
    %48 = vector.load %arg32[%c0_24, %c0_25] : memref<8x32xf32, #tpu.memory_space<vmem>>, vector<8x8xf32>
    tpu.vector_store %arg32[%c0_24, %c0_25], %47 {strides = array<i32>} : memref<8x32xf32, #tpu.memory_space<vmem>>, vector<8x8xf32>,
    %49 = vector.extract_strided_slice %24 {offsets = [0, 0, 8], sizes = [1, 8, 8], strides = [1, 1, 1]} : vector<1x8x32xbf16> to vector<1x8x8xbf16>
    %50 = vector.extract_strided_slice %25 {offsets = [0, 0, 8], sizes = [1, 8, 8], strides = [1, 1, 1]} : vector<1x8x32xbf16> to vector<1x8x8xbf16>
    "tpu.trace_start"() <{level = 10 : i32, message = "bqd,bkd->bqk"}> : () -> ()
    %cst_26 = arith.constant dense<0.000000e+00> : vector<1x8x8xf32>
    %51 = tpu.matmul %49, %50, %cst_26 {dimension_numbers = #tpu.dot_dimension_numbers<[2], [2], [1], [1], [0, 0, 0, 1, 1, 1], [0], [0]>} : vector<1x8x8xbf16>, vector<1x8x8xbf16>, vector<1x8x8xf32> -> vector<1x8x8xf32>
    "tpu.trace_stop"() : () -> ()
    %52 = arith.addf %51, %29 : vector<1x8x8xf32>
    %cst_27 = arith.constant dense<0xFF800000> : vector<1x8xf32>
    %53 = vector.multi_reduction <maximumf>, %52, %cst_27 [2] : vector<1x8x8xf32> to vector<1x8xf32>
    %54 = vector.shape_cast %53 : vector<1x8xf32> to vector<1x8x1xf32>
    %55 = vector.broadcast %54 : vector<1x8x1xf32> to vector<1x8x8xf32>
    %56 = arith.subf %52, %55 : vector<1x8x8xf32>
    %57 = math.exp %56 : vector<1x8x8xf32>
    %cst_28 = arith.constant dense<0.000000e+00> : vector<1x8xf32>
    %58 = vector.multi_reduction <add>, %57, %cst_28 [2] : vector<1x8x8xf32> to vector<1x8xf32>
    %59 = vector.shape_cast %58 : vector<1x8xf32> to vector<1x8x1xf32>
    %60 = arith.truncf %57 : vector<1x8x8xf32> to vector<1x8x8xbf16>
    %61 = vector.extract_strided_slice %26 {offsets = [0, 0, 8], sizes = [1, 8, 8], strides = [1, 1, 1]} : vector<1x8x32xbf16> to vector<1x8x8xbf16>
    "tpu.trace_start"() <{level = 10 : i32, message = "bqk,bkd->bqd"}> : () -> ()
    %cst_29 = arith.constant dense<0.000000e+00> : vector<1x8x8xf32>
    %62 = tpu.matmul %60, %61, %cst_29 {dimension_numbers = #tpu.dot_dimension_numbers<[2], [1], [1], [2], [0, 0, 0, 1, 1, 2], [0], [0]>} : vector<1x8x8xbf16>, vector<1x8x8xbf16>, vector<1x8x8xf32> -> vector<1x8x8xf32>
    "tpu.trace_stop"() : () -> ()
    %63 = tpu.reciprocal %59 {approx = true} : vector<1x8x1xf32> -> vector<1x8x1xf32>
    %64 = vector.broadcast %63 : vector<1x8x1xf32> to vector<1x8x8xf32>
    %65 = arith.mulf %62, %64 : vector<1x8x8xf32>
    %66 = vector.shape_cast %65 : vector<1x8x8xf32> to vector<8x8xf32>
    %c0_30 = arith.constant 0 : index
    %c8 = arith.constant 8 : index
    %67 = vector.load %arg32[%c0_30, %c8] : memref<8x32xf32, #tpu.memory_space<vmem>>, vector<8x8xf32>
    tpu.vector_store %arg32[%c0_30, %c8], %66 {strides = array<i32>} : memref<8x32xf32, #tpu.memory_space<vmem>>, vector<8x8xf32>,
    %68 = vector.extract_strided_slice %24 {offsets = [0, 0, 16], sizes = [1, 8, 8], strides = [1, 1, 1]} : vector<1x8x32xbf16> to vector<1x8x8xbf16>
    %69 = vector.extract_strided_slice %25 {offsets = [0, 0, 16], sizes = [1, 8, 8], strides = [1, 1, 1]} : vector<1x8x32xbf16> to vector<1x8x8xbf16>
    "tpu.trace_start"() <{level = 10 : i32, message = "bqd,bkd->bqk"}> : () -> ()
    %cst_31 = arith.constant dense<0.000000e+00> : vector<1x8x8xf32>
    %70 = tpu.matmul %68, %69, %cst_31 {dimension_numbers = #tpu.dot_dimension_numbers<[2], [2], [1], [1], [0, 0, 0, 1, 1, 1], [0], [0]>} : vector<1x8x8xbf16>, vector<1x8x8xbf16>, vector<1x8x8xf32> -> vector<1x8x8xf32>
    "tpu.trace_stop"() : () -> ()
    %71 = arith.addf %70, %29 : vector<1x8x8xf32>
    %cst_32 = arith.constant dense<0xFF800000> : vector<1x8xf32>
    %72 = vector.multi_reduction <maximumf>, %71, %cst_32 [2] : vector<1x8x8xf32> to vector<1x8xf32>
    %73 = vector.shape_cast %72 : vector<1x8xf32> to vector<1x8x1xf32>
    %74 = vector.broadcast %73 : vector<1x8x1xf32> to vector<1x8x8xf32>
    %75 = arith.subf %71, %74 : vector<1x8x8xf32>
    %76 = math.exp %75 : vector<1x8x8xf32>
    %cst_33 = arith.constant dense<0.000000e+00> : vector<1x8xf32>
    %77 = vector.multi_reduction <add>, %76, %cst_33 [2] : vector<1x8x8xf32> to vector<1x8xf32>
    %78 = vector.shape_cast %77 : vector<1x8xf32> to vector<1x8x1xf32>
    %79 = arith.truncf %76 : vector<1x8x8xf32> to vector<1x8x8xbf16>
    %80 = vector.extract_strided_slice %26 {offsets = [0, 0, 16], sizes = [1, 8, 8], strides = [1, 1, 1]} : vector<1x8x32xbf16> to vector<1x8x8xbf16>
    "tpu.trace_start"() <{level = 10 : i32, message = "bqk,bkd->bqd"}> : () -> ()
    %cst_34 = arith.constant dense<0.000000e+00> : vector<1x8x8xf32>
    %81 = tpu.matmul %79, %80, %cst_34 {dimension_numbers = #tpu.dot_dimension_numbers<[2], [1], [1], [2], [0, 0, 0, 1, 1, 2], [0], [0]>} : vector<1x8x8xbf16>, vector<1x8x8xbf16>, vector<1x8x8xf32> -> vector<1x8x8xf32>
    "tpu.trace_stop"() : () -> ()
    %82 = tpu.reciprocal %78 {approx = true} : vector<1x8x1xf32> -> vector<1x8x1xf32>
    %83 = vector.broadcast %82 : vector<1x8x1xf32> to vector<1x8x8xf32>
    %84 = arith.mulf %81, %83 : vector<1x8x8xf32>
    %85 = vector.shape_cast %84 : vector<1x8x8xf32> to vector<8x8xf32>
    %c0_35 = arith.constant 0 : index
    %c16 = arith.constant 16 : index
    %86 = vector.load %arg32[%c0_35, %c16] : memref<8x32xf32, #tpu.memory_space<vmem>>, vector<8x8xf32>
    tpu.vector_store %arg32[%c0_35, %c16], %85 {strides = array<i32>} : memref<8x32xf32, #tpu.memory_space<vmem>>, vector<8x8xf32>,
    %87 = vector.extract_strided_slice %24 {offsets = [0, 0, 24], sizes = [1, 8, 8], strides = [1, 1, 1]} : vector<1x8x32xbf16> to vector<1x8x8xbf16>
    %88 = vector.extract_strided_slice %25 {offsets = [0, 0, 24], sizes = [1, 8, 8], strides = [1, 1, 1]} : vector<1x8x32xbf16> to vector<1x8x8xbf16>
    "tpu.trace_start"() <{level = 10 : i32, message = "bqd,bkd->bqk"}> : () -> ()
    %cst_36 = arith.constant dense<0.000000e+00> : vector<1x8x8xf32>
    %89 = tpu.matmul %87, %88, %cst_36 {dimension_numbers = #tpu.dot_dimension_numbers<[2], [2], [1], [1], [0, 0, 0, 1, 1, 1], [0], [0]>} : vector<1x8x8xbf16>, vector<1x8x8xbf16>, vector<1x8x8xf32> -> vector<1x8x8xf32>
    "tpu.trace_stop"() : () -> ()
    %90 = arith.addf %89, %29 : vector<1x8x8xf32>
    %cst_37 = arith.constant dense<0xFF800000> : vector<1x8xf32>
    %91 = vector.multi_reduction <maximumf>, %90, %cst_37 [2] : vector<1x8x8xf32> to vector<1x8xf32>
    %92 = vector.shape_cast %91 : vector<1x8xf32> to vector<1x8x1xf32>
    %93 = vector.broadcast %92 : vector<1x8x1xf32> to vector<1x8x8xf32>
    %94 = arith.subf %90, %93 : vector<1x8x8xf32>
    %95 = math.exp %94 : vector<1x8x8xf32>
    %cst_38 = arith.constant dense<0.000000e+00> : vector<1x8xf32>
    %96 = vector.multi_reduction <add>, %95, %cst_38 [2] : vector<1x8x8xf32> to vector<1x8xf32>
    %97 = vector.shape_cast %96 : vector<1x8xf32> to vector<1x8x1xf32>
    %98 = arith.truncf %95 : vector<1x8x8xf32> to vector<1x8x8xbf16>
    %99 = vector.extract_strided_slice %26 {offsets = [0, 0, 24], sizes = [1, 8, 8], strides = [1, 1, 1]} : vector<1x8x32xbf16> to vector<1x8x8xbf16>
    "tpu.trace_start"() <{level = 10 : i32, message = "bqk,bkd->bqd"}> : () -> ()
    %cst_39 = arith.constant dense<0.000000e+00> : vector<1x8x8xf32>
    %100 = tpu.matmul %98, %99, %cst_39 {dimension_numbers = #tpu.dot_dimension_numbers<[2], [1], [1], [2], [0, 0, 0, 1, 1, 2], [0], [0]>} : vector<1x8x8xbf16>, vector<1x8x8xbf16>, vector<1x8x8xf32> -> vector<1x8x8xf32>
    "tpu.trace_stop"() : () -> ()
    %101 = tpu.reciprocal %97 {approx = true} : vector<1x8x1xf32> -> vector<1x8x1xf32>
    %102 = vector.broadcast %101 : vector<1x8x1xf32> to vector<1x8x8xf32>
    %103 = arith.mulf %100, %102 : vector<1x8x8xf32>
    %104 = vector.shape_cast %103 : vector<1x8x8xf32> to vector<8x8xf32>
    %c0_40 = arith.constant 0 : index
    %c24 = arith.constant 24 : index
    %105 = vector.load %arg32[%c0_40, %c24] : memref<8x32xf32, #tpu.memory_space<vmem>>, vector<8x8xf32>
    tpu.vector_store %arg32[%c0_40, %c24], %104 {strides = array<i32>} : memref<8x32xf32, #tpu.memory_space<vmem>>, vector<8x8xf32>,
    %c0_41 = arith.constant 0 : index
    %c0_42 = arith.constant 0 : index
    %106 = vector.load %arg32[%c0_41, %c0_42] : memref<8x32xf32, #tpu.memory_space<vmem>>, vector<8x32xf32>
    %107 = arith.truncf %106 : vector<8x32xf32> to vector<8x32xbf16>
    %c0_43 = arith.constant 0 : index
    %c0_44 = arith.constant 0 : index
    %108 = vector.load %arg11[%c0_43, %c0_44] : memref<32x32xbf16, #tpu.memory_space<vmem>>, vector<32x32xbf16>
    %cst_45 = arith.constant dense<0.000000e+00> : vector<8x32xf32>
    %109 = tpu.matmul %107, %108, %cst_45 {dimension_numbers = #tpu.dot_dimension_numbers<[1], [0], [0], [1], [0, 0, 1, 1], [], []>} : vector<8x32xbf16>, vector<32x32xbf16>, vector<8x32xf32> -> vector<8x32xf32>
    %c0_46 = arith.constant 0 : index
    %c0_47 = arith.constant 0 : index
    %110 = vector.load %arg12[%c0_46, %c0_47] : memref<1x32xf32, #tpu.memory_space<vmem>>, vector<1x32xf32>
    %111 = vector.broadcast %110 : vector<1x32xf32> to vector<8x32xf32>
    %112 = arith.addf %109, %111 : vector<8x32xf32>
    %113 = arith.addf %112, %2 : vector<8x32xf32>
    %c0_48 = arith.constant 0 : index
    %c0_49 = arith.constant 0 : index
    %114 = vector.load %arg13[%c0_48, %c0_49] : memref<1x32xf32, #tpu.memory_space<vmem>>, vector<1x32xf32>
    %c0_50 = arith.constant 0 : index
    %c0_51 = arith.constant 0 : index
    %115 = vector.load %arg14[%c0_50, %c0_51] : memref<1x32xf32, #tpu.memory_space<vmem>>, vector<1x32xf32>
    %cst_52 = arith.constant dense<0.000000e+00> : vector<8xf32>
    %116 = vector.multi_reduction <add>, %113, %cst_52 [1] : vector<8x32xf32> to vector<8xf32>
    %117 = vector.shape_cast %116 : vector<8xf32> to vector<8x1xf32>
    %cst_53 = arith.constant 3.200000e+01 : f32
    %118 = vector.broadcast %cst_53 : f32 to vector<8x1xf32>
    %119 = arith.divf %117, %118 : vector<8x1xf32>
    %120 = vector.broadcast %119 : vector<8x1xf32> to vector<8x32xf32>
    %121 = arith.subf %113, %120 : vector<8x32xf32>
    %122 = arith.mulf %121, %121 : vector<8x32xf32>
    %cst_54 = arith.constant dense<0.000000e+00> : vector<8xf32>
    %123 = vector.multi_reduction <add>, %122, %cst_54 [1] : vector<8x32xf32> to vector<8xf32>
    %124 = vector.shape_cast %123 : vector<8xf32> to vector<8x1xf32>
    %cst_55 = arith.constant 3.200000e+01 : f32
    %125 = vector.broadcast %cst_55 : f32 to vector<8x1xf32>
    %126 = arith.divf %124, %125 : vector<8x1xf32>
    %127 = vector.broadcast %119 : vector<8x1xf32> to vector<8x32xf32>
    %128 = arith.subf %113, %127 : vector<8x32xf32>
    %cst_56 = arith.constant 9.99999974E-6 : f32
    %129 = vector.broadcast %cst_56 : f32 to vector<8x1xf32>
    %130 = arith.addf %126, %129 : vector<8x1xf32>
    %131 = math.sqrt %130 : vector<8x1xf32>
    %132 = vector.broadcast %131 : vector<8x1xf32> to vector<8x32xf32>
    %133 = arith.divf %128, %132 : vector<8x32xf32>
    %134 = vector.broadcast %114 : vector<1x32xf32> to vector<8x32xf32>
    %135 = arith.mulf %134, %133 : vector<8x32xf32>
    %136 = vector.broadcast %115 : vector<1x32xf32> to vector<8x32xf32>
    %137 = arith.addf %135, %136 : vector<8x32xf32>
    %138 = arith.truncf %137 : vector<8x32xf32> to vector<8x32xbf16>
    %c0_57 = arith.constant 0 : index
    %c0_58 = arith.constant 0 : index
    %139 = vector.load %arg15[%c0_57, %c0_58] : memref<32x32xbf16, #tpu.memory_space<vmem>>, vector<32x32xbf16>
    %cst_59 = arith.constant dense<0.000000e+00> : vector<8x32xf32>
    %140 = tpu.matmul %1, %139, %cst_59 {dimension_numbers = #tpu.dot_dimension_numbers<[1], [0], [0], [1], [0, 0, 1, 1], [], []>} : vector<8x32xbf16>, vector<32x32xbf16>, vector<8x32xf32> -> vector<8x32xf32>
    %c0_60 = arith.constant 0 : index
    %c0_61 = arith.constant 0 : index
    %141 = vector.load %arg17[%c0_60, %c0_61] : memref<1x32xf32, #tpu.memory_space<vmem>>, vector<1x32xf32>
    %142 = vector.broadcast %141 : vector<1x32xf32> to vector<8x32xf32>
    %143 = arith.addf %140, %142 : vector<8x32xf32>
    %144 = arith.truncf %143 : vector<8x32xf32> to vector<8x32xbf16>
    %c0_62 = arith.constant 0 : index
    %c0_63 = arith.constant 0 : index
    %145 = vector.load %arg16[%c0_62, %c0_63] : memref<32x32xbf16, #tpu.memory_space<vmem>>, vector<32x32xbf16>
    %cst_64 = arith.constant dense<0.000000e+00> : vector<8x32xf32>
    %146 = tpu.matmul %1, %145, %cst_64 {dimension_numbers = #tpu.dot_dimension_numbers<[1], [0], [0], [1], [0, 0, 1, 1], [], []>} : vector<8x32xbf16>, vector<32x32xbf16>, vector<8x32xf32> -> vector<8x32xf32>
    %c0_65 = arith.constant 0 : index
    %c0_66 = arith.constant 0 : index
    %147 = vector.load %arg18[%c0_65, %c0_66] : memref<1x32xf32, #tpu.memory_space<vmem>>, vector<1x32xf32>
    %148 = vector.broadcast %147 : vector<1x32xf32> to vector<8x32xf32>
    %149 = arith.addf %146, %148 : vector<8x32xf32>
    %150 = arith.truncf %149 : vector<8x32xf32> to vector<8x32xbf16>
    %c0_67 = arith.constant 0 : index
    %c0_68 = arith.constant 0 : index
    %151 = vector.load %arg19[%c0_67, %c0_68] : memref<32x32xbf16, #tpu.memory_space<vmem>>, vector<32x32xbf16>
    %cst_69 = arith.constant dense<0.000000e+00> : vector<8x32xf32>
    %152 = tpu.matmul %138, %151, %cst_69 {dimension_numbers = #tpu.dot_dimension_numbers<[1], [0], [0], [1], [0, 0, 1, 1], [], []>} : vector<8x32xbf16>, vector<32x32xbf16>, vector<8x32xf32> -> vector<8x32xf32>
    %c0_70 = arith.constant 0 : index
    %c0_71 = arith.constant 0 : index
    %153 = vector.load %arg20[%c0_70, %c0_71] : memref<1x32xf32, #tpu.memory_space<vmem>>, vector<1x32xf32>
    %154 = vector.broadcast %153 : vector<1x32xf32> to vector<8x32xf32>
    %155 = arith.addf %152, %154 : vector<8x32xf32>
    %cst_72 = arith.constant 0.353553385 : f32
    %156 = vector.broadcast %cst_72 : f32 to vector<8x32xf32>
    %157 = arith.mulf %155, %156 : vector<8x32xf32>
    %158 = arith.truncf %157 : vector<8x32xf32> to vector<8x32xbf16>
    %159 = vector.shape_cast %158 : vector<8x32xbf16> to vector<1x8x32xbf16>
    %160 = vector.shape_cast %144 : vector<8x32xbf16> to vector<1x8x32xbf16>
    %161 = vector.shape_cast %150 : vector<8x32xbf16> to vector<1x8x32xbf16>
    %162 = vector.extract_strided_slice %159 {offsets = [0, 0, 0], sizes = [1, 8, 8], strides = [1, 1, 1]} : vector<1x8x32xbf16> to vector<1x8x8xbf16>
    %163 = vector.extract_strided_slice %160 {offsets = [0, 0, 0], sizes = [1, 8, 8], strides = [1, 1, 1]} : vector<1x8x32xbf16> to vector<1x8x8xbf16>
    "tpu.trace_start"() <{level = 10 : i32, message = "bqd,bkd->bqk"}> : () -> ()
    %cst_73 = arith.constant dense<0.000000e+00> : vector<1x8x8xf32>
    %164 = tpu.matmul %162, %163, %cst_73 {dimension_numbers = #tpu.dot_dimension_numbers<[2], [2], [1], [1], [0, 0, 0, 1, 1, 1], [0], [0]>} : vector<1x8x8xbf16>, vector<1x8x8xbf16>, vector<1x8x8xf32> -> vector<1x8x8xf32>
    "tpu.trace_stop"() : () -> ()
    %cst_74 = arith.constant dense<0xFF800000> : vector<1x8xf32>
    %165 = vector.multi_reduction <maximumf>, %164, %cst_74 [2] : vector<1x8x8xf32> to vector<1x8xf32>
    %166 = vector.shape_cast %165 : vector<1x8xf32> to vector<1x8x1xf32>
    %167 = vector.broadcast %166 : vector<1x8x1xf32> to vector<1x8x8xf32>
    %168 = arith.subf %164, %167 : vector<1x8x8xf32>
    %169 = math.exp %168 : vector<1x8x8xf32>
    %cst_75 = arith.constant dense<0.000000e+00> : vector<1x8xf32>
    %170 = vector.multi_reduction <add>, %169, %cst_75 [2] : vector<1x8x8xf32> to vector<1x8xf32>
    %171 = vector.shape_cast %170 : vector<1x8xf32> to vector<1x8x1xf32>
    %172 = arith.truncf %169 : vector<1x8x8xf32> to vector<1x8x8xbf16>
    %173 = vector.extract_strided_slice %161 {offsets = [0, 0, 0], sizes = [1, 8, 8], strides = [1, 1, 1]} : vector<1x8x32xbf16> to vector<1x8x8xbf16>
    "tpu.trace_start"() <{level = 10 : i32, message = "bqk,bkd->bqd"}> : () -> ()
    %cst_76 = arith.constant dense<0.000000e+00> : vector<1x8x8xf32>
    %174 = tpu.matmul %172, %173, %cst_76 {dimension_numbers = #tpu.dot_dimension_numbers<[2], [1], [1], [2], [0, 0, 0, 1, 1, 2], [0], [0]>} : vector<1x8x8xbf16>, vector<1x8x8xbf16>, vector<1x8x8xf32> -> vector<1x8x8xf32>
    "tpu.trace_stop"() : () -> ()
    %175 = tpu.reciprocal %171 {approx = true} : vector<1x8x1xf32> -> vector<1x8x1xf32>
    %176 = vector.broadcast %175 : vector<1x8x1xf32> to vector<1x8x8xf32>
    %177 = arith.mulf %174, %176 : vector<1x8x8xf32>
    %178 = vector.shape_cast %177 : vector<1x8x8xf32> to vector<8x8xf32>
    %c0_77 = arith.constant 0 : index
    %c0_78 = arith.constant 0 : index
    %179 = vector.load %arg32[%c0_77, %c0_78] : memref<8x32xf32, #tpu.memory_space<vmem>>, vector<8x8xf32>
    tpu.vector_store %arg32[%c0_77, %c0_78], %178 {strides = array<i32>} : memref<8x32xf32, #tpu.memory_space<vmem>>, vector<8x8xf32>,
    %180 = vector.extract_strided_slice %159 {offsets = [0, 0, 8], sizes = [1, 8, 8], strides = [1, 1, 1]} : vector<1x8x32xbf16> to vector<1x8x8xbf16>
    %181 = vector.extract_strided_slice %160 {offsets = [0, 0, 8], sizes = [1, 8, 8], strides = [1, 1, 1]} : vector<1x8x32xbf16> to vector<1x8x8xbf16>
    "tpu.trace_start"() <{level = 10 : i32, message = "bqd,bkd->bqk"}> : () -> ()
    %cst_79 = arith.constant dense<0.000000e+00> : vector<1x8x8xf32>
    %182 = tpu.matmul %180, %181, %cst_79 {dimension_numbers = #tpu.dot_dimension_numbers<[2], [2], [1], [1], [0, 0, 0, 1, 1, 1], [0], [0]>} : vector<1x8x8xbf16>, vector<1x8x8xbf16>, vector<1x8x8xf32> -> vector<1x8x8xf32>
    "tpu.trace_stop"() : () -> ()
    %cst_80 = arith.constant dense<0xFF800000> : vector<1x8xf32>
    %183 = vector.multi_reduction <maximumf>, %182, %cst_80 [2] : vector<1x8x8xf32> to vector<1x8xf32>
    %184 = vector.shape_cast %183 : vector<1x8xf32> to vector<1x8x1xf32>
    %185 = vector.broadcast %184 : vector<1x8x1xf32> to vector<1x8x8xf32>
    %186 = arith.subf %182, %185 : vector<1x8x8xf32>
    %187 = math.exp %186 : vector<1x8x8xf32>
    %cst_81 = arith.constant dense<0.000000e+00> : vector<1x8xf32>
    %188 = vector.multi_reduction <add>, %187, %cst_81 [2] : vector<1x8x8xf32> to vector<1x8xf32>
    %189 = vector.shape_cast %188 : vector<1x8xf32> to vector<1x8x1xf32>
    %190 = arith.truncf %187 : vector<1x8x8xf32> to vector<1x8x8xbf16>
    %191 = vector.extract_strided_slice %161 {offsets = [0, 0, 8], sizes = [1, 8, 8], strides = [1, 1, 1]} : vector<1x8x32xbf16> to vector<1x8x8xbf16>
    "tpu.trace_start"() <{level = 10 : i32, message = "bqk,bkd->bqd"}> : () -> ()
    %cst_82 = arith.constant dense<0.000000e+00> : vector<1x8x8xf32>
    %192 = tpu.matmul %190, %191, %cst_82 {dimension_numbers = #tpu.dot_dimension_numbers<[2], [1], [1], [2], [0, 0, 0, 1, 1, 2], [0], [0]>} : vector<1x8x8xbf16>, vector<1x8x8xbf16>, vector<1x8x8xf32> -> vector<1x8x8xf32>
    "tpu.trace_stop"() : () -> ()
    %193 = tpu.reciprocal %189 {approx = true} : vector<1x8x1xf32> -> vector<1x8x1xf32>
    %194 = vector.broadcast %193 : vector<1x8x1xf32> to vector<1x8x8xf32>
    %195 = arith.mulf %192, %194 : vector<1x8x8xf32>
    %196 = vector.shape_cast %195 : vector<1x8x8xf32> to vector<8x8xf32>
    %c0_83 = arith.constant 0 : index
    %c8_84 = arith.constant 8 : index
    %197 = vector.load %arg32[%c0_83, %c8_84] : memref<8x32xf32, #tpu.memory_space<vmem>>, vector<8x8xf32>
    tpu.vector_store %arg32[%c0_83, %c8_84], %196 {strides = array<i32>} : memref<8x32xf32, #tpu.memory_space<vmem>>, vector<8x8xf32>,
    %198 = vector.extract_strided_slice %159 {offsets = [0, 0, 16], sizes = [1, 8, 8], strides = [1, 1, 1]} : vector<1x8x32xbf16> to vector<1x8x8xbf16>
    %199 = vector.extract_strided_slice %160 {offsets = [0, 0, 16], sizes = [1, 8, 8], strides = [1, 1, 1]} : vector<1x8x32xbf16> to vector<1x8x8xbf16>
    "tpu.trace_start"() <{level = 10 : i32, message = "bqd,bkd->bqk"}> : () -> ()
    %cst_85 = arith.constant dense<0.000000e+00> : vector<1x8x8xf32>
    %200 = tpu.matmul %198, %199, %cst_85 {dimension_numbers = #tpu.dot_dimension_numbers<[2], [2], [1], [1], [0, 0, 0, 1, 1, 1], [0], [0]>} : vector<1x8x8xbf16>, vector<1x8x8xbf16>, vector<1x8x8xf32> -> vector<1x8x8xf32>
    "tpu.trace_stop"() : () -> ()
    %cst_86 = arith.constant dense<0xFF800000> : vector<1x8xf32>
    %201 = vector.multi_reduction <maximumf>, %200, %cst_86 [2] : vector<1x8x8xf32> to vector<1x8xf32>
    %202 = vector.shape_cast %201 : vector<1x8xf32> to vector<1x8x1xf32>
    %203 = vector.broadcast %202 : vector<1x8x1xf32> to vector<1x8x8xf32>
    %204 = arith.subf %200, %203 : vector<1x8x8xf32>
    %205 = math.exp %204 : vector<1x8x8xf32>
    %cst_87 = arith.constant dense<0.000000e+00> : vector<1x8xf32>
    %206 = vector.multi_reduction <add>, %205, %cst_87 [2] : vector<1x8x8xf32> to vector<1x8xf32>
    %207 = vector.shape_cast %206 : vector<1x8xf32> to vector<1x8x1xf32>
    %208 = arith.truncf %205 : vector<1x8x8xf32> to vector<1x8x8xbf16>
    %209 = vector.extract_strided_slice %161 {offsets = [0, 0, 16], sizes = [1, 8, 8], strides = [1, 1, 1]} : vector<1x8x32xbf16> to vector<1x8x8xbf16>
    "tpu.trace_start"() <{level = 10 : i32, message = "bqk,bkd->bqd"}> : () -> ()
    %cst_88 = arith.constant dense<0.000000e+00> : vector<1x8x8xf32>
    %210 = tpu.matmul %208, %209, %cst_88 {dimension_numbers = #tpu.dot_dimension_numbers<[2], [1], [1], [2], [0, 0, 0, 1, 1, 2], [0], [0]>} : vector<1x8x8xbf16>, vector<1x8x8xbf16>, vector<1x8x8xf32> -> vector<1x8x8xf32>
    "tpu.trace_stop"() : () -> ()
    %211 = tpu.reciprocal %207 {approx = true} : vector<1x8x1xf32> -> vector<1x8x1xf32>
    %212 = vector.broadcast %211 : vector<1x8x1xf32> to vector<1x8x8xf32>
    %213 = arith.mulf %210, %212 : vector<1x8x8xf32>
    %214 = vector.shape_cast %213 : vector<1x8x8xf32> to vector<8x8xf32>
    %c0_89 = arith.constant 0 : index
    %c16_90 = arith.constant 16 : index
    %215 = vector.load %arg32[%c0_89, %c16_90] : memref<8x32xf32, #tpu.memory_space<vmem>>, vector<8x8xf32>
    tpu.vector_store %arg32[%c0_89, %c16_90], %214 {strides = array<i32>} : memref<8x32xf32, #tpu.memory_space<vmem>>, vector<8x8xf32>,
    %216 = vector.extract_strided_slice %159 {offsets = [0, 0, 24], sizes = [1, 8, 8], strides = [1, 1, 1]} : vector<1x8x32xbf16> to vector<1x8x8xbf16>
    %217 = vector.extract_strided_slice %160 {offsets = [0, 0, 24], sizes = [1, 8, 8], strides = [1, 1, 1]} : vector<1x8x32xbf16> to vector<1x8x8xbf16>
    "tpu.trace_start"() <{level = 10 : i32, message = "bqd,bkd->bqk"}> : () -> ()
    %cst_91 = arith.constant dense<0.000000e+00> : vector<1x8x8xf32>
    %218 = tpu.matmul %216, %217, %cst_91 {dimension_numbers = #tpu.dot_dimension_numbers<[2], [2], [1], [1], [0, 0, 0, 1, 1, 1], [0], [0]>} : vector<1x8x8xbf16>, vector<1x8x8xbf16>, vector<1x8x8xf32> -> vector<1x8x8xf32>
    "tpu.trace_stop"() : () -> ()
    %cst_92 = arith.constant dense<0xFF800000> : vector<1x8xf32>
    %219 = vector.multi_reduction <maximumf>, %218, %cst_92 [2] : vector<1x8x8xf32> to vector<1x8xf32>
    %220 = vector.shape_cast %219 : vector<1x8xf32> to vector<1x8x1xf32>
    %221 = vector.broadcast %220 : vector<1x8x1xf32> to vector<1x8x8xf32>
    %222 = arith.subf %218, %221 : vector<1x8x8xf32>
    %223 = math.exp %222 : vector<1x8x8xf32>
    %cst_93 = arith.constant dense<0.000000e+00> : vector<1x8xf32>
    %224 = vector.multi_reduction <add>, %223, %cst_93 [2] : vector<1x8x8xf32> to vector<1x8xf32>
    %225 = vector.shape_cast %224 : vector<1x8xf32> to vector<1x8x1xf32>
    %226 = arith.truncf %223 : vector<1x8x8xf32> to vector<1x8x8xbf16>
    %227 = vector.extract_strided_slice %161 {offsets = [0, 0, 24], sizes = [1, 8, 8], strides = [1, 1, 1]} : vector<1x8x32xbf16> to vector<1x8x8xbf16>
    "tpu.trace_start"() <{level = 10 : i32, message = "bqk,bkd->bqd"}> : () -> ()
    %cst_94 = arith.constant dense<0.000000e+00> : vector<1x8x8xf32>
    %228 = tpu.matmul %226, %227, %cst_94 {dimension_numbers = #tpu.dot_dimension_numbers<[2], [1], [1], [2], [0, 0, 0, 1, 1, 2], [0], [0]>} : vector<1x8x8xbf16>, vector<1x8x8xbf16>, vector<1x8x8xf32> -> vector<1x8x8xf32>
    "tpu.trace_stop"() : () -> ()
    %229 = tpu.reciprocal %225 {approx = true} : vector<1x8x1xf32> -> vector<1x8x1xf32>
    %230 = vector.broadcast %229 : vector<1x8x1xf32> to vector<1x8x8xf32>
    %231 = arith.mulf %228, %230 : vector<1x8x8xf32>
    %232 = vector.shape_cast %231 : vector<1x8x8xf32> to vector<8x8xf32>
    %c0_95 = arith.constant 0 : index
    %c24_96 = arith.constant 24 : index
    %233 = vector.load %arg32[%c0_95, %c24_96] : memref<8x32xf32, #tpu.memory_space<vmem>>, vector<8x8xf32>
    tpu.vector_store %arg32[%c0_95, %c24_96], %232 {strides = array<i32>} : memref<8x32xf32, #tpu.memory_space<vmem>>, vector<8x8xf32>,
    %c0_97 = arith.constant 0 : index
    %c0_98 = arith.constant 0 : index
    %234 = vector.load %arg32[%c0_97, %c0_98] : memref<8x32xf32, #tpu.memory_space<vmem>>, vector<8x32xf32>
    %235 = arith.truncf %234 : vector<8x32xf32> to vector<8x32xbf16>
    %c0_99 = arith.constant 0 : index
    %c0_100 = arith.constant 0 : index
    %236 = vector.load %arg21[%c0_99, %c0_100] : memref<32x32xbf16, #tpu.memory_space<vmem>>, vector<32x32xbf16>
    %cst_101 = arith.constant dense<0.000000e+00> : vector<8x32xf32>
    %237 = tpu.matmul %235, %236, %cst_101 {dimension_numbers = #tpu.dot_dimension_numbers<[1], [0], [0], [1], [0, 0, 1, 1], [], []>} : vector<8x32xbf16>, vector<32x32xbf16>, vector<8x32xf32> -> vector<8x32xf32>
    %c0_102 = arith.constant 0 : index
    %c0_103 = arith.constant 0 : index
    %238 = vector.load %arg22[%c0_102, %c0_103] : memref<1x32xf32, #tpu.memory_space<vmem>>, vector<1x32xf32>
    %239 = vector.broadcast %238 : vector<1x32xf32> to vector<8x32xf32>
    %240 = arith.addf %237, %239 : vector<8x32xf32>
    %241 = arith.addf %240, %137 : vector<8x32xf32>
    %c0_104 = arith.constant 0 : index
    %c0_105 = arith.constant 0 : index
    %242 = vector.load %arg23[%c0_104, %c0_105] : memref<1x32xf32, #tpu.memory_space<vmem>>, vector<1x32xf32>
    %c0_106 = arith.constant 0 : index
    %c0_107 = arith.constant 0 : index
    %243 = vector.load %arg24[%c0_106, %c0_107] : memref<1x32xf32, #tpu.memory_space<vmem>>, vector<1x32xf32>
    %cst_108 = arith.constant dense<0.000000e+00> : vector<8xf32>
    %244 = vector.multi_reduction <add>, %241, %cst_108 [1] : vector<8x32xf32> to vector<8xf32>
    %245 = vector.shape_cast %244 : vector<8xf32> to vector<8x1xf32>
    %cst_109 = arith.constant 3.200000e+01 : f32
    %246 = vector.broadcast %cst_109 : f32 to vector<8x1xf32>
    %247 = arith.divf %245, %246 : vector<8x1xf32>
    %248 = vector.broadcast %247 : vector<8x1xf32> to vector<8x32xf32>
    %249 = arith.subf %241, %248 : vector<8x32xf32>
    %250 = arith.mulf %249, %249 : vector<8x32xf32>
    %cst_110 = arith.constant dense<0.000000e+00> : vector<8xf32>
    %251 = vector.multi_reduction <add>, %250, %cst_110 [1] : vector<8x32xf32> to vector<8xf32>
    %252 = vector.shape_cast %251 : vector<8xf32> to vector<8x1xf32>
    %cst_111 = arith.constant 3.200000e+01 : f32
    %253 = vector.broadcast %cst_111 : f32 to vector<8x1xf32>
    %254 = arith.divf %252, %253 : vector<8x1xf32>
    %255 = vector.broadcast %247 : vector<8x1xf32> to vector<8x32xf32>
    %256 = arith.subf %241, %255 : vector<8x32xf32>
    %cst_112 = arith.constant 9.99999974E-6 : f32
    %257 = vector.broadcast %cst_112 : f32 to vector<8x1xf32>
    %258 = arith.addf %254, %257 : vector<8x1xf32>
    %259 = math.sqrt %258 : vector<8x1xf32>
    %260 = vector.broadcast %259 : vector<8x1xf32> to vector<8x32xf32>
    %261 = arith.divf %256, %260 : vector<8x32xf32>
    %262 = vector.broadcast %242 : vector<1x32xf32> to vector<8x32xf32>
    %263 = arith.mulf %262, %261 : vector<8x32xf32>
    %264 = vector.broadcast %243 : vector<1x32xf32> to vector<8x32xf32>
    %265 = arith.addf %263, %264 : vector<8x32xf32>
    %266 = arith.truncf %265 : vector<8x32xf32> to vector<8x32xbf16>
    %c0_113 = arith.constant 0 : index
    %c0_114 = arith.constant 0 : index
    %267 = vector.load %arg25[%c0_113, %c0_114] : memref<32x64xbf16, #tpu.memory_space<vmem>>, vector<32x64xbf16>
    %cst_115 = arith.constant dense<0.000000e+00> : vector<8x64xf32>
    %268 = tpu.matmul %266, %267, %cst_115 {dimension_numbers = #tpu.dot_dimension_numbers<[1], [0], [0], [1], [0, 0, 1, 1], [], []>} : vector<8x32xbf16>, vector<32x64xbf16>, vector<8x64xf32> -> vector<8x64xf32>
    %c0_116 = arith.constant 0 : index
    %c0_117 = arith.constant 0 : index
    %269 = vector.load %arg26[%c0_116, %c0_117] : memref<1x64xf32, #tpu.memory_space<vmem>>, vector<1x64xf32>
    %270 = vector.broadcast %269 : vector<1x64xf32> to vector<8x64xf32>
    %271 = arith.addf %268, %270 : vector<8x64xf32>
    %cst_118 = arith.constant 0.000000e+00 : f32
    %272 = vector.broadcast %cst_118 : f32 to vector<8x64xf32>
    %273 = arith.maximumf %271, %272 : vector<8x64xf32>
    %274 = arith.truncf %273 : vector<8x64xf32> to vector<8x64xbf16>
    %c0_119 = arith.constant 0 : index
    %c0_120 = arith.constant 0 : index
    %275 = vector.load %arg27[%c0_119, %c0_120] : memref<64x32xbf16, #tpu.memory_space<vmem>>, vector<64x32xbf16>
    %cst_121 = arith.constant dense<0.000000e+00> : vector<8x32xf32>
    %276 = tpu.matmul %274, %275, %cst_121 {dimension_numbers = #tpu.dot_dimension_numbers<[1], [0], [0], [1], [0, 0, 1, 1], [], []>} : vector<8x64xbf16>, vector<64x32xbf16>, vector<8x32xf32> -> vector<8x32xf32>
    %c0_122 = arith.constant 0 : index
    %c0_123 = arith.constant 0 : index
    %277 = vector.load %arg28[%c0_122, %c0_123] : memref<1x32xf32, #tpu.memory_space<vmem>>, vector<1x32xf32>
    %278 = vector.broadcast %277 : vector<1x32xf32> to vector<8x32xf32>
    %279 = arith.addf %276, %278 : vector<8x32xf32>
    %280 = arith.addf %279, %265 : vector<8x32xf32>
    %c0_124 = arith.constant 0 : index
    %c0_125 = arith.constant 0 : index
    %281 = vector.load %arg29[%c0_124, %c0_125] : memref<1x32xf32, #tpu.memory_space<vmem>>, vector<1x32xf32>
    %c0_126 = arith.constant 0 : index
    %c0_127 = arith.constant 0 : index
    %282 = vector.load %arg30[%c0_126, %c0_127] : memref<1x32xf32, #tpu.memory_space<vmem>>, vector<1x32xf32>
    %cst_128 = arith.constant dense<0.000000e+00> : vector<8xf32>
    %283 = vector.multi_reduction <add>, %280, %cst_128 [1] : vector<8x32xf32> to vector<8xf32>
    %284 = vector.shape_cast %283 : vector<8xf32> to vector<8x1xf32>
    %cst_129 = arith.constant 3.200000e+01 : f32
    %285 = vector.broadcast %cst_129 : f32 to vector<8x1xf32>
    %286 = arith.divf %284, %285 : vector<8x1xf32>
    %287 = vector.broadcast %286 : vector<8x1xf32> to vector<8x32xf32>
    %288 = arith.subf %280, %287 : vector<8x32xf32>
    %289 = arith.mulf %288, %288 : vector<8x32xf32>
    %cst_130 = arith.constant dense<0.000000e+00> : vector<8xf32>
    %290 = vector.multi_reduction <add>, %289, %cst_130 [1] : vector<8x32xf32> to vector<8xf32>
    %291 = vector.shape_cast %290 : vector<8xf32> to vector<8x1xf32>
    %cst_131 = arith.constant 3.200000e+01 : f32
    %292 = vector.broadcast %cst_131 : f32 to vector<8x1xf32>
    %293 = arith.divf %291, %292 : vector<8x1xf32>
    %294 = vector.broadcast %286 : vector<8x1xf32> to vector<8x32xf32>
    %295 = arith.subf %280, %294 : vector<8x32xf32>
    %cst_132 = arith.constant 9.99999974E-6 : f32
    %296 = vector.broadcast %cst_132 : f32 to vector<8x1xf32>
    %297 = arith.addf %293, %296 : vector<8x1xf32>
    %298 = math.sqrt %297 : vector<8x1xf32>
    %299 = vector.broadcast %298 : vector<8x1xf32> to vector<8x32xf32>
    %300 = arith.divf %295, %299 : vector<8x32xf32>
    %301 = vector.broadcast %281 : vector<1x32xf32> to vector<8x32xf32>
    %302 = arith.mulf %301, %300 : vector<8x32xf32>
    %303 = vector.broadcast %282 : vector<1x32xf32> to vector<8x32xf32>
    %304 = arith.addf %302, %303 : vector<8x32xf32>
    %c0_133 = arith.constant 0 : index
    %c0_134 = arith.constant 0 : index
    %305 = vector.load %arg31[%c0_133, %c0_134] : memref<8x32xf32, #tpu.memory_space<vmem>>, vector<8x32xf32>
    tpu.vector_store %arg31[%c0_133, %c0_134], %304 {strides = array<i32>} : memref<8x32xf32, #tpu.memory_space<vmem>>, vector<8x32xf32>,
    return
  }
  func.func @transform_0(%arg0: i32) -> (i32, i32) {
    %c0_i32 = arith.constant 0 : i32
    %c0_i32_0 = arith.constant 0 : i32
    return %arg0, %c0_i32 : i32, i32
  }
  func.func @transform_1(%arg0: i32) -> (i32, i32) {
    %c0_i32 = arith.constant 0 : i32
    %c0_i32_0 = arith.constant 0 : i32
    return %arg0, %c0_i32 : i32, i32
  }
  func.func @transform_2(%arg0: i32) -> (i32, i32) {
    %c0_i32 = arith.constant 0 : i32
    %c0_i32_0 = arith.constant 0 : i32
    %c0_i32_1 = arith.constant 0 : i32
    return %c0_i32, %c0_i32_0 : i32, i32
  }
  func.func @transform_3(%arg0: i32) -> (i32, i32) {
    %c0_i32 = arith.constant 0 : i32
    %c0_i32_0 = arith.constant 0 : i32
    %c0_i32_1 = arith.constant 0 : i32
    return %c0_i32, %c0_i32_0 : i32, i32
  }
  func.func @transform_4(%arg0: i32) -> (i32, i32) {
    %c0_i32 = arith.constant 0 : i32
    %c0_i32_0 = arith.constant 0 : i32
    %c0_i32_1 = arith.constant 0 : i32
    return %c0_i32, %c0_i32_0 : i32, i32
  }
  func.func @transform_5(%arg0: i32) -> (i32, i32) {
    %c0_i32 = arith.constant 0 : i32
    %c0_i32_0 = arith.constant 0 : i32
    %c0_i32_1 = arith.constant 0 : i32
    return %c0_i32, %c0_i32_0 : i32, i32
  }
  func.func @transform_6(%arg0: i32) -> (i32, i32) {
    %c0_i32 = arith.constant 0 : i32
    %c0_i32_0 = arith.constant 0 : i32
    %c0_i32_1 = arith.constant 0 : i32
    return %c0_i32, %c0_i32_0 : i32, i32
  }
  func.func @transform_7(%arg0: i32) -> (i32, i32) {
    %c0_i32 = arith.constant 0 : i32
    %c0_i32_0 = arith.constant 0 : i32
    %c0_i32_1 = arith.constant 0 : i32
    return %c0_i32, %c0_i32_0 : i32, i32
  }
  func.func @transform_8(%arg0: i32) -> (i32, i32) {
    %c0_i32 = arith.constant 0 : i32
    %c0_i32_0 = arith.constant 0 : i32
    %c0_i32_1 = arith.constant 0 : i32
    return %c0_i32, %c0_i32_0 : i32, i32
  }
  func.func @transform_9(%arg0: i32) -> (i32, i32) {
    %c0_i32 = arith.constant 0 : i32
    %c0_i32_0 = arith.constant 0 : i32
    %c0_i32_1 = arith.constant 0 : i32
    return %c0_i32, %c0_i32_0 : i32, i32
  }
  func.func @transform_10(%arg0: i32) -> (i32, i32) {
    %c0_i32 = arith.constant 0 : i32
    %c0_i32_0 = arith.constant 0 : i32
    %c0_i32_1 = arith.constant 0 : i32
    return %c0_i32, %c0_i32_0 : i32, i32
  }
  func.func @transform_11(%arg0: i32) -> (i32, i32) {
    %c0_i32 = arith.constant 0 : i32
    %c0_i32_0 = arith.constant 0 : i32
    %c0_i32_1 = arith.constant 0 : i32
    return %c0_i32, %c0_i32_0 : i32, i32
  }
  func.func @transform_12(%arg0: i32) -> (i32, i32) {
    %c0_i32 = arith.constant 0 : i32
    %c0_i32_0 = arith.constant 0 : i32
    %c0_i32_1 = arith.constant 0 : i32
    return %c0_i32, %c0_i32_0 : i32, i32
  }
  func.func @transform_13(%arg0: i32) -> (i32, i32) {
    %c0_i32 = arith.constant 0 : i32
    %c0_i32_0 = arith.constant 0 : i32
    %c0_i32_1 = arith.constant 0 : i32
    return %c0_i32, %c0_i32_0 : i32, i32
  }
  func.func @transform_14(%arg0: i32) -> (i32, i32) {
    %c0_i32 = arith.constant 0 : i32
    %c0_i32_0 = arith.constant 0 : i32
    %c0_i32_1 = arith.constant 0 : i32
    return %c0_i32, %c0_i32_0 : i32, i32
  }
  func.func @transform_15(%arg0: i32) -> (i32, i32) {
    %c0_i32 = arith.constant 0 : i32
    %c0_i32_0 = arith.constant 0 : i32
    %c0_i32_1 = arith.constant 0 : i32
    return %c0_i32, %c0_i32_0 : i32, i32
  }
  func.func @transform_16(%arg0: i32) -> (i32, i32) {
    %c0_i32 = arith.constant 0 : i32
    %c0_i32_0 = arith.constant 0 : i32
    %c0_i32_1 = arith.constant 0 : i32
    return %c0_i32, %c0_i32_0 : i32, i32
  }
  func.func @transform_17(%arg0: i32) -> (i32, i32) {
    %c0_i32 = arith.constant 0 : i32
    %c0_i32_0 = arith.constant 0 : i32
    %c0_i32_1 = arith.constant 0 : i32
    return %c0_i32, %c0_i32_0 : i32, i32
  }
  func.func @transform_18(%arg0: i32) -> (i32, i32) {
    %c0_i32 = arith.constant 0 : i32
    %c0_i32_0 = arith.constant 0 : i32
    %c0_i32_1 = arith.constant 0 : i32
    return %c0_i32, %c0_i32_0 : i32, i32
  }
  func.func @transform_19(%arg0: i32) -> (i32, i32) {
    %c0_i32 = arith.constant 0 : i32
    %c0_i32_0 = arith.constant 0 : i32
    %c0_i32_1 = arith.constant 0 : i32
    return %c0_i32, %c0_i32_0 : i32, i32
  }
  func.func @transform_20(%arg0: i32) -> (i32, i32) {
    %c0_i32 = arith.constant 0 : i32
    %c0_i32_0 = arith.constant 0 : i32
    %c0_i32_1 = arith.constant 0 : i32
    return %c0_i32, %c0_i32_0 : i32, i32
  }
  func.func @transform_21(%arg0: i32) -> (i32, i32) {
    %c0_i32 = arith.constant 0 : i32
    %c0_i32_0 = arith.constant 0 : i32
    %c0_i32_1 = arith.constant 0 : i32
    return %c0_i32, %c0_i32_0 : i32, i32
  }
  func.func @transform_22(%arg0: i32) -> (i32, i32) {
    %c0_i32 = arith.constant 0 : i32
    %c0_i32_0 = arith.constant 0 : i32
    %c0_i32_1 = arith.constant 0 : i32
    return %c0_i32, %c0_i32_0 : i32, i32
  }
  func.func @transform_23(%arg0: i32) -> (i32, i32) {
    %c0_i32 = arith.constant 0 : i32
    %c0_i32_0 = arith.constant 0 : i32
    %c0_i32_1 = arith.constant 0 : i32
    return %c0_i32, %c0_i32_0 : i32, i32
  }
  func.func @transform_24(%arg0: i32) -> (i32, i32) {
    %c0_i32 = arith.constant 0 : i32
    %c0_i32_0 = arith.constant 0 : i32
    %c0_i32_1 = arith.constant 0 : i32
    return %c0_i32, %c0_i32_0 : i32, i32
  }
  func.func @transform_25(%arg0: i32) -> (i32, i32) {
    %c0_i32 = arith.constant 0 : i32
    %c0_i32_0 = arith.constant 0 : i32
    %c0_i32_1 = arith.constant 0 : i32
    return %c0_i32, %c0_i32_0 : i32, i32
  }
  func.func @transform_26(%arg0: i32) -> (i32, i32) {
    %c0_i32 = arith.constant 0 : i32
    %c0_i32_0 = arith.constant 0 : i32
    %c0_i32_1 = arith.constant 0 : i32
    return %c0_i32, %c0_i32_0 : i32, i32
  }
  func.func @transform_27(%arg0: i32) -> (i32, i32) {
    %c0_i32 = arith.constant 0 : i32
    %c0_i32_0 = arith.constant 0 : i32
    %c0_i32_1 = arith.constant 0 : i32
    return %c0_i32, %c0_i32_0 : i32, i32
  }
  func.func @transform_28(%arg0: i32) -> (i32, i32) {
    %c0_i32 = arith.constant 0 : i32
    %c0_i32_0 = arith.constant 0 : i32
    %c0_i32_1 = arith.constant 0 : i32
    return %c0_i32, %c0_i32_0 : i32, i32
  }
  func.func @transform_29(%arg0: i32) -> (i32, i32) {
    %c0_i32 = arith.constant 0 : i32
    %c0_i32_0 = arith.constant 0 : i32
    %c0_i32_1 = arith.constant 0 : i32
    return %c0_i32, %c0_i32_0 : i32, i32
  }
  func.func @transform_30(%arg0: i32) -> (i32, i32) {
    %c0_i32 = arith.constant 0 : i32
    %c0_i32_0 = arith.constant 0 : i32
    return %arg0, %c0_i32 : i32, i32
  }
}

</mosaic_0001>

<llo_original>
// kernel: tpu_custom_call.1
$region0: #{tpu_custom_call.1}
  #allocation0 [shape = 'u32[]', space=smem, size = 0x4, offset = 0x4, fixed_abs, tag = 'smem constant byte address 0x4 - core index']
  #allocation1 [shape = 'u32[144,128]{1,0:T(1,128)}', space=vmem, size = 0x12000, scoped, tag = 'internal scratch']
  #allocation2 [shape = 'f32[8,32]{1,0:T(8,128)}', space=vmem, size = 0x1000, scoped, tag = 'scratch operand']
  #allocation3 [shape = 'bf16[1,1]{1,0:T(2,128)S(1)}', space=vmem, size = 0x200, scoped, tag = 'scoped memory for tpu_custom_call.1']
  %s0 = inlined_call_operand.smem [shape: u32[31], index: -1, kind: input, shape index: {}]
  %s1 = sld [smem:[%s0]]
  %s2 = scalar_lea.smem %s0, 1
  %s3 = sld [smem:[%s2]]
  %s4 = scalar_lea.smem %s0, 2
  %s5 = sld [smem:[%s4]]
  %s6 = scalar_lea.smem %s0, 3
  %s7 = sld [smem:[%s6]]
  %s8 = scalar_lea.smem %s0, 4
  %s9 = sld [smem:[%s8]]
  %s10 = scalar_lea.smem %s0, 5
  %s11 = sld [smem:[%s10]]
  %s12 = scalar_lea.smem %s0, 6
  %s13 = sld [smem:[%s12]]
  %s14 = scalar_lea.smem %s0, 7
  %s15 = sld [smem:[%s14]]
  %s16 = scalar_lea.smem %s0, 8
  %s17 = sld [smem:[%s16]]
  %s18 = scalar_lea.smem %s0, 9
  %s19 = sld [smem:[%s18]]
  %s20 = scalar_lea.smem %s0, 10
  %s21 = sld [smem:[%s20]]
  %s22 = scalar_lea.smem %s0, 11
  %s23 = sld [smem:[%s22]]
  %s24 = scalar_lea.smem %s0, 12
  %s25 = sld [smem:[%s24]]
  %s26 = scalar_lea.smem %s0, 13
  %s27 = sld [smem:[%s26]]
  %s28 = scalar_lea.smem %s0, 14
  %s29 = sld [smem:[%s28]]
  %s30 = scalar_lea.smem %s0, 15
  %s31 = sld [smem:[%s30]]
  %s32 = scalar_lea.smem %s0, 16
  %s33 = sld [smem:[%s32]]
  %s34 = scalar_lea.smem %s0, 17
  %s35 = sld [smem:[%s34]]
  %s36 = scalar_lea.smem %s0, 18
  %s37 = sld [smem:[%s36]]
  %s38 = scalar_lea.smem %s0, 19
  %s39 = sld [smem:[%s38]]
  %s40 = scalar_lea.smem %s0, 20
  %s41 = sld [smem:[%s40]]
  %s42 = scalar_lea.smem %s0, 21
  %s43 = sld [smem:[%s42]]
  %s44 = scalar_lea.smem %s0, 22
  %s45 = sld [smem:[%s44]]
  %s46 = scalar_lea.smem %s0, 23
  %s47 = sld [smem:[%s46]]
  %s48 = scalar_lea.smem %s0, 24
  %s49 = sld [smem:[%s48]]
  %s50 = scalar_lea.smem %s0, 25
  %s51 = sld [smem:[%s50]]
  %s52 = scalar_lea.smem %s0, 26
  %s53 = sld [smem:[%s52]]
  %s54 = scalar_lea.smem %s0, 27
  %s55 = sld [smem:[%s54]]
  %s56 = scalar_lea.smem %s0, 28
  %s57 = sld [smem:[%s56]]
  %s58 = scalar_lea.smem %s0, 29
  %s59 = sld [smem:[%s58]]
  %s60 = scalar_lea.smem %s0, 30
  %s61 = sld [smem:[%s60]]
  %s62 = sld [smem:[#allocation0]]
  $region213: #{tpu_custom_call.1} parent=0
    _
  %s64 = ssub.s32 1, %s62
  %s65 = scalar_select 0, %s64, %s62
  %v66 = vstv %s7
  %67 = vst [vmem:[#allocation3] sm:$0x1] %v66
  $region1: #{tpu_custom_call.1} parent=0
    #allocation4 [shape = 'u8[2048]{0}', space=vmem, size = 0x800, scoped, tag = 'input window, operand 2, single buffered']
    #allocation5 [shape = 's32[2]{0}', space=sflag, size = 0x8, scoped, tag = 'scoped memory for tpu_custom_call.1']
    #allocation6 [shape = 's32[2]{0}', space=sflag, size = 0x8, scoped, tag = 'scoped memory for tpu_custom_call.1']
    #allocation7 [shape = 'u8[8192]{0}', space=vmem, size = 0x2000, scoped, tag = 'input window, operand 5, single buffered']
    #allocation8 [shape = 's32[1]{0}', space=sflag, size = 0x4, scoped, tag = 'scoped memory for tpu_custom_call.1']
    #allocation9 [shape = 'u8[8192]{0}', space=vmem, size = 0x2000, scoped, tag = 'input window, operand 6, single buffered']
    #allocation10 [shape = 'u8[512]{0}', space=vmem, size = 0x400, scoped, tag = 'input window, operand 8, single buffered']
    #allocation11 [shape = 's32[1]{0}', space=sflag, size = 0x4, scoped, tag = 'scoped memory for tpu_custom_call.1']
    #allocation12 [shape = 'u8[512]{0}', space=vmem, size = 0x400, scoped, tag = 'input window, operand 9, single buffered']
    #allocation13 [shape = 'u8[8192]{0}', space=vmem, size = 0x2000, scoped, tag = 'input window, operand 10, single buffered']
    #allocation14 [shape = 's32[1]{0}', space=sflag, size = 0x4, scoped, tag = 'scoped memory for tpu_custom_call.1']
    #allocation15 [shape = 'u8[512]{0}', space=vmem, size = 0x400, scoped, tag = 'input window, operand 11, single buffered']
    #allocation16 [shape = 'u8[512]{0}', space=vmem, size = 0x400, scoped, tag = 'input window, operand 12, single buffered']
    #allocation17 [shape = 's32[1]{0}', space=sflag, size = 0x4, scoped, tag = 'scoped memory for tpu_custom_call.1']
    #allocation18 [shape = 'u8[512]{0}', space=vmem, size = 0x400, scoped, tag = 'input window, operand 13, single buffered']
    #allocation19 [shape = 'u8[8192]{0}', space=vmem, size = 0x2000, scoped, tag = 'input window, operand 14, single buffered']
    #allocation20 [shape = 's32[1]{0}', space=sflag, size = 0x4, scoped, tag = 'scoped memory for tpu_custom_call.1']
    #allocation21 [shape = 'u8[8192]{0}', space=vmem, size = 0x2000, scoped, tag = 'input window, operand 15, single buffered']
    #allocation22 [shape = 'u8[512]{0}', space=vmem, size = 0x400, scoped, tag = 'input window, operand 16, single buffered']
    #allocation23 [shape = 's32[1]{0}', space=sflag, size = 0x4, scoped, tag = 'scoped memory for tpu_custom_call.1']
    #allocation24 [shape = 'u8[512]{0}', space=vmem, size = 0x400, scoped, tag = 'input window, operand 17, single buffered']
    #allocation25 [shape = 'u8[8192]{0}', space=vmem, size = 0x2000, scoped, tag = 'input window, operand 20, single buffered']
    #allocation26 [shape = 's32[1]{0}', space=sflag, size = 0x4, scoped, tag = 'scoped memory for tpu_custom_call.1']
    #allocation27 [shape = 'u8[8192]{0}', space=vmem, size = 0x2000, scoped, tag = 'input window, operand 24, single buffered']
    #allocation28 [shape = 'u8[8192]{0}', space=vmem, size = 0x2000, scoped, tag = 'output window, operand 0']
    %68 = vsyncpa [#allocation5], 0
    %69 = vsyncpa [#allocation8], 0
    %70 = vsyncpa [#allocation11], 0
    %71 = vsyncpa [#allocation14], 0
    %72 = vsyncpa [#allocation17], 0
    %73 = vsyncpa [#allocation20], 0
    %74 = vsyncpa [#allocation23], 0
    %75 = vsyncpa [#allocation26], 0
    %76 = vsyncpa [#allocation6], 0
    %s77 = scalar_lea.sflag [#allocation6], 1
    %78 = vsyncpa %s77, 0
    loop: start=0, step=1, limit=4
    $region2: #{tpu_custom_call.1} parent=1 // loop_pre_header
      _
    $region3: #{tpu_custom_call.1} parent=1 // loop_header
      %s80 = sphi 0, %s84
      %p81 = scmp.ge.s32.totalorder %s80, 4
      %s90 = sphi 0, %s92
      %s93 = sphi 0, %s90
      %s94 = sphi 0, %s93
      %s110 = sphi 0, %s94
      %s116 = sphi 0, %s118
      %s119 = sphi 0, %s116
      %s120 = sphi 0, %s119
      %s136 = sphi 0, %s120
      %s140 = sphi 0, %s140
      %s142 = sphi 0, %s140
      %s143 = sphi 0, %s142
      %s157 = sphi 0, %s143
      %s161 = sphi 0, %s161
      %s163 = sphi 0, %s161
      %s164 = sphi 0, %s163
      %s178 = sphi 0, %s164
      %s182 = sphi 0, %s182
      %s184 = sphi 0, %s182
      %s185 = sphi 0, %s184
      %s199 = sphi 0, %s185
      %s203 = sphi 0, %s203
      %s205 = sphi 0, %s203
      %s206 = sphi 0, %s205
      %s220 = sphi 0, %s206
      %s224 = sphi 0, %s224
      %s226 = sphi 0, %s224
      %s227 = sphi 0, %s226
      %s241 = sphi 0, %s227
      %s245 = sphi 0, %s245
      %s247 = sphi 0, %s245
      %s248 = sphi 0, %s247
      %s262 = sphi 0, %s248
      %s266 = sphi 0, %s266
      %s268 = sphi 0, %s266
      %s269 = sphi 0, %s268
      %s283 = sphi 0, %s269
      %s287 = sphi 0, %s287
      %s289 = sphi 0, %s287
      %s290 = sphi 0, %s289
      %s304 = sphi 0, %s290
      %s308 = sphi 0, %s308
      %s310 = sphi 0, %s308
      %s311 = sphi 0, %s310
      %s325 = sphi 0, %s311
      %s329 = sphi 0, %s329
      %s331 = sphi 0, %s329
      %s332 = sphi 0, %s331
      %s346 = sphi 0, %s332
      %s350 = sphi 0, %s350
      %s352 = sphi 0, %s350
      %s353 = sphi 0, %s352
      %s367 = sphi 0, %s353
      %s371 = sphi 0, %s371
      %s373 = sphi 0, %s371
      %s374 = sphi 0, %s373
      %s388 = sphi 0, %s374
      %s392 = sphi 0, %s392
      %s394 = sphi 0, %s392
      %s395 = sphi 0, %s394
      %s409 = sphi 0, %s395
      %s413 = sphi 0, %s413
      %s415 = sphi 0, %s413
      %s416 = sphi 0, %s415
      %s430 = sphi 0, %s416
      %s434 = sphi 0, %s434
      %s436 = sphi 0, %s434
      %s437 = sphi 0, %s436
      %s451 = sphi 0, %s437
      %s455 = sphi 0, %s455
      %s457 = sphi 0, %s455
      %s458 = sphi 0, %s457
      %s472 = sphi 0, %s458
      %s476 = sphi 0, %s476
      %s478 = sphi 0, %s476
      %s479 = sphi 0, %s478
      %s493 = sphi 0, %s479
      %s497 = sphi 0, %s497
      %s499 = sphi 0, %s497
      %s500 = sphi 0, %s499
      %s514 = sphi 0, %s500
      %s518 = sphi 0, %s518
      %s520 = sphi 0, %s518
      %s521 = sphi 0, %s520
      %s535 = sphi 0, %s521
      %s539 = sphi 0, %s539
      %s541 = sphi 0, %s539
      %s542 = sphi 0, %s541
      %s556 = sphi 0, %s542
      %s560 = sphi 0, %s560
      %s562 = sphi 0, %s560
      %s563 = sphi 0, %s562
      %s577 = sphi 0, %s563
      %s581 = sphi 0, %s581
      %s583 = sphi 0, %s581
      %s584 = sphi 0, %s583
      %s598 = sphi 0, %s584
      %s602 = sphi 0, %s602
      %s604 = sphi 0, %s602
      %s605 = sphi 0, %s604
      %s619 = sphi 0, %s605
      %s623 = sphi 0, %s623
      %s625 = sphi 0, %s623
      %s626 = sphi 0, %s625
      %s640 = sphi 0, %s626
      %s644 = sphi 0, %s644
      %s646 = sphi 0, %s644
      %s647 = sphi 0, %s646
      %s661 = sphi 0, %s647
      %s665 = sphi 0, %s665
      %s667 = sphi 0, %s665
      %s668 = sphi 0, %s667
      %s682 = sphi 0, %s668
      %s686 = sphi 0, %s686
      %s688 = sphi 0, %s686
      %s689 = sphi 0, %s688
      %s703 = sphi 0, %s689
      %s707 = sphi 0, %s707
      %s709 = sphi 0, %s707
      %s710 = sphi 0, %s709
      %s724 = sphi 0, %s710
      %s730 = sphi 0, %s732
      %s733 = sphi 0, %s730
      %s734 = sphi 0, %s733
      %s750 = sphi 0, %s734
    $region4: #{tpu_custom_call.1} parent=1 // loop_header_branch
      %83 = sbr.rel (%p81) target = $region8
    $region5: #{tpu_custom_call.1} parent=1 // loop_body
      %s85 = ssub.s32 %s80, 1
      %s86 = ssub.s32 %s80, 2
      %s87 = sadd.s32 %s80, 1
      %s88 = ssub.s32 %s80, %s87
      %p89 = scmp.eq.s32.totalorder %s88, 0
      %s91 = sadd.s32 %s90, 1
      %s92 = scalar_select %p89, %s90, %s91
      %p95 = pneg %p89
      %p96 = scmp.eq.s32.totalorder %s80, 1
      %p97 = por %p95, %p96
      %p98 = scmp.ne.s32.totalorder %s90, %s93
      %p99 = scmp.eq.s32.totalorder %s80, 0
      %p100 = por %p98, %p99
      %p101 = scmp.ne.s32.totalorder %s90, %s93
      %p102 = scmp.eq.s32.totalorder %s85, 1
      %p103 = por %p101, %p102
      %p104 = scmp.ne.s32.totalorder %s93, %s94
      %p105 = scmp.eq.s32.totalorder %s85, 0
      %p106 = por %p104, %p105
      %p107 = scmp.ne.s32.totalorder %s93, %s94
      %p108 = scmp.eq.s32.totalorder %s86, 1
      %p109 = por %p107, %p108
      %p111 = scmp.ne.s32.totalorder %s94, %s110
      %p112 = scmp.eq.s32.totalorder %s86, 0
      %p113 = por %p111, %p112
      %s114 = ssub.s32 %s80, %s87
      %p115 = scmp.eq.s32.totalorder %s114, 0
      %s117 = sadd.s32 %s116, 1
      %s118 = scalar_select %p115, %s116, %s117
      %p121 = pneg %p115
      %p122 = scmp.eq.s32.totalorder %s80, 1
      %p123 = por %p121, %p122
      %p124 = scmp.ne.s32.totalorder %s116, %s119
      %p125 = scmp.eq.s32.totalorder %s80, 0
      %p126 = por %p124, %p125
      %p127 = scmp.ne.s32.totalorder %s116, %s119
      %p128 = scmp.eq.s32.totalorder %s85, 1
      %p129 = por %p127, %p128
      %p130 = scmp.ne.s32.totalorder %s119, %s120
      %p131 = scmp.eq.s32.totalorder %s85, 0
      %p132 = por %p130, %p131
      %p133 = scmp.ne.s32.totalorder %s119, %s120
      %p134 = scmp.eq.s32.totalorder %s86, 1
      %p135 = por %p133, %p134
      %p137 = scmp.ne.s32.totalorder %s120, %s136
      %p138 = scmp.eq.s32.totalorder %s86, 0
      %p139 = por %p137, %p138
      %s141 = sadd.s32 %s140, 1
      %p144 = scmp.eq.s32.totalorder %s80, 1
      %p145 = scmp.ne.s32.totalorder %s140, %s142
      %p146 = scmp.eq.s32.totalorder %s80, 0
      %p147 = por %p145, %p146
      %p148 = scmp.ne.s32.totalorder %s140, %s142
      %p149 = scmp.eq.s32.totalorder %s85, 1
      %p150 = por %p148, %p149
      %p151 = scmp.ne.s32.totalorder %s142, %s143
      %p152 = scmp.eq.s32.totalorder %s85, 0
      %p153 = por %p151, %p152
      %p154 = scmp.ne.s32.totalorder %s142, %s143
      %p155 = scmp.eq.s32.totalorder %s86, 1
      %p156 = por %p154, %p155
      %p158 = scmp.ne.s32.totalorder %s143, %s157
      %p159 = scmp.eq.s32.totalorder %s86, 0
      %p160 = por %p158, %p159
      %s162 = sadd.s32 %s161, 1
      %p165 = scmp.eq.s32.totalorder %s80, 1
      %p166 = scmp.ne.s32.totalorder %s161, %s163
      %p167 = scmp.eq.s32.totalorder %s80, 0
      %p168 = por %p166, %p167
      %p169 = scmp.ne.s32.totalorder %s161, %s163
      %p170 = scmp.eq.s32.totalorder %s85, 1
      %p171 = por %p169, %p170
      %p172 = scmp.ne.s32.totalorder %s163, %s164
      %p173 = scmp.eq.s32.totalorder %s85, 0
      %p174 = por %p172, %p173
      %p175 = scmp.ne.s32.totalorder %s163, %s164
      %p176 = scmp.eq.s32.totalorder %s86, 1
      %p177 = por %p175, %p176
      %p179 = scmp.ne.s32.totalorder %s164, %s178
      %p180 = scmp.eq.s32.totalorder %s86, 0
      %p181 = por %p179, %p180
      %s183 = sadd.s32 %s182, 1
      %p186 = scmp.eq.s32.totalorder %s80, 1
      %p187 = scmp.ne.s32.totalorder %s182, %s184
      %p188 = scmp.eq.s32.totalorder %s80, 0
      %p189 = por %p187, %p188
      %p190 = scmp.ne.s32.totalorder %s182, %s184
      %p191 = scmp.eq.s32.totalorder %s85, 1
      %p192 = por %p190, %p191
      %p193 = scmp.ne.s32.totalorder %s184, %s185
      %p194 = scmp.eq.s32.totalorder %s85, 0
      %p195 = por %p193, %p194
      %p196 = scmp.ne.s32.totalorder %s184, %s185
      %p197 = scmp.eq.s32.totalorder %s86, 1
      %p198 = por %p196, %p197
      %p200 = scmp.ne.s32.totalorder %s185, %s199
      %p201 = scmp.eq.s32.totalorder %s86, 0
      %p202 = por %p200, %p201
      %s204 = sadd.s32 %s203, 1
      %p207 = scmp.eq.s32.totalorder %s80, 1
      %p208 = scmp.ne.s32.totalorder %s203, %s205
      %p209 = scmp.eq.s32.totalorder %s80, 0
      %p210 = por %p208, %p209
      %p211 = scmp.ne.s32.totalorder %s203, %s205
      %p212 = scmp.eq.s32.totalorder %s85, 1
      %p213 = por %p211, %p212
      %p214 = scmp.ne.s32.totalorder %s205, %s206
      %p215 = scmp.eq.s32.totalorder %s85, 0
      %p216 = por %p214, %p215
      %p217 = scmp.ne.s32.totalorder %s205, %s206
      %p218 = scmp.eq.s32.totalorder %s86, 1
      %p219 = por %p217, %p218
      %p221 = scmp.ne.s32.totalorder %s206, %s220
      %p222 = scmp.eq.s32.totalorder %s86, 0
      %p223 = por %p221, %p222
      %s225 = sadd.s32 %s224, 1
      %p228 = scmp.eq.s32.totalorder %s80, 1
      %p229 = scmp.ne.s32.totalorder %s224, %s226
      %p230 = scmp.eq.s32.totalorder %s80, 0
      %p231 = por %p229, %p230
      %p232 = scmp.ne.s32.totalorder %s224, %s226
      %p233 = scmp.eq.s32.totalorder %s85, 1
      %p234 = por %p232, %p233
      %p235 = scmp.ne.s32.totalorder %s226, %s227
      %p236 = scmp.eq.s32.totalorder %s85, 0
      %p237 = por %p235, %p236
      %p238 = scmp.ne.s32.totalorder %s226, %s227
      %p239 = scmp.eq.s32.totalorder %s86, 1
      %p240 = por %p238, %p239
      %p242 = scmp.ne.s32.totalorder %s227, %s241
      %p243 = scmp.eq.s32.totalorder %s86, 0
      %p244 = por %p242, %p243
      %s246 = sadd.s32 %s245, 1
      %p249 = scmp.eq.s32.totalorder %s80, 1
      %p250 = scmp.ne.s32.totalorder %s245, %s247
      %p251 = scmp.eq.s32.totalorder %s80, 0
      %p252 = por %p250, %p251
      %p253 = scmp.ne.s32.totalorder %s245, %s247
      %p254 = scmp.eq.s32.totalorder %s85, 1
      %p255 = por %p253, %p254
      %p256 = scmp.ne.s32.totalorder %s247, %s248
      %p257 = scmp.eq.s32.totalorder %s85, 0
      %p258 = por %p256, %p257
      %p259 = scmp.ne.s32.totalorder %s247, %s248
      %p260 = scmp.eq.s32.totalorder %s86, 1
      %p261 = por %p259, %p260
      %p263 = scmp.ne.s32.totalorder %s248, %s262
      %p264 = scmp.eq.s32.totalorder %s86, 0
      %p265 = por %p263, %p264
      %s267 = sadd.s32 %s266, 1
      %p270 = scmp.eq.s32.totalorder %s80, 1
      %p271 = scmp.ne.s32.totalorder %s266, %s268
      %p272 = scmp.eq.s32.totalorder %s80, 0
      %p273 = por %p271, %p272
      %p274 = scmp.ne.s32.totalorder %s266, %s268
      %p275 = scmp.eq.s32.totalorder %s85, 1
      %p276 = por %p274, %p275
      %p277 = scmp.ne.s32.totalorder %s268, %s269
      %p278 = scmp.eq.s32.totalorder %s85, 0
      %p279 = por %p277, %p278
      %p280 = scmp.ne.s32.totalorder %s268, %s269
      %p281 = scmp.eq.s32.totalorder %s86, 1
      %p282 = por %p280, %p281
      %p284 = scmp.ne.s32.totalorder %s269, %s283
      %p285 = scmp.eq.s32.totalorder %s86, 0
      %p286 = por %p284, %p285
      %s288 = sadd.s32 %s287, 1
      %p291 = scmp.eq.s32.totalorder %s80, 1
      %p292 = scmp.ne.s32.totalorder %s287, %s289
      %p293 = scmp.eq.s32.totalorder %s80, 0
      %p294 = por %p292, %p293
      %p295 = scmp.ne.s32.totalorder %s287, %s289
      %p296 = scmp.eq.s32.totalorder %s85, 1
      %p297 = por %p295, %p296
      %p298 = scmp.ne.s32.totalorder %s289, %s290
      %p299 = scmp.eq.s32.totalorder %s85, 0
      %p300 = por %p298, %p299
      %p301 = scmp.ne.s32.totalorder %s289, %s290
      %p302 = scmp.eq.s32.totalorder %s86, 1
      %p303 = por %p301, %p302
      %p305 = scmp.ne.s32.totalorder %s290, %s304
      %p306 = scmp.eq.s32.totalorder %s86, 0
      %p307 = por %p305, %p306
      %s309 = sadd.s32 %s308, 1
      %p312 = scmp.eq.s32.totalorder %s80, 1
      %p313 = scmp.ne.s32.totalorder %s308, %s310
      %p314 = scmp.eq.s32.totalorder %s80, 0
      %p315 = por %p313, %p314
      %p316 = scmp.ne.s32.totalorder %s308, %s310
      %p317 = scmp.eq.s32.totalorder %s85, 1
      %p318 = por %p316, %p317
      %p319 = scmp.ne.s32.totalorder %s310, %s311
      %p320 = scmp.eq.s32.totalorder %s85, 0
      %p321 = por %p319, %p320
      %p322 = scmp.ne.s32.totalorder %s310, %s311
      %p323 = scmp.eq.s32.totalorder %s86, 1
      %p324 = por %p322, %p323
      %p326 = scmp.ne.s32.totalorder %s311, %s325
      %p327 = scmp.eq.s32.totalorder %s86, 0
      %p328 = por %p326, %p327
      %s330 = sadd.s32 %s329, 1
      %p333 = scmp.eq.s32.totalorder %s80, 1
      %p334 = scmp.ne.s32.totalorder %s329, %s331
      %p335 = scmp.eq.s32.totalorder %s80, 0
      %p336 = por %p334, %p335
      %p337 = scmp.ne.s32.totalorder %s329, %s331
      %p338 = scmp.eq.s32.totalorder %s85, 1
      %p339 = por %p337, %p338
      %p340 = scmp.ne.s32.totalorder %s331, %s332
      %p341 = scmp.eq.s32.totalorder %s85, 0
      %p342 = por %p340, %p341
      %p343 = scmp.ne.s32.totalorder %s331, %s332
      %p344 = scmp.eq.s32.totalorder %s86, 1
      %p345 = por %p343, %p344
      %p347 = scmp.ne.s32.totalorder %s332, %s346
      %p348 = scmp.eq.s32.totalorder %s86, 0
      %p349 = por %p347, %p348
      %s351 = sadd.s32 %s350, 1
      %p354 = scmp.eq.s32.totalorder %s80, 1
      %p355 = scmp.ne.s32.totalorder %s350, %s352
      %p356 = scmp.eq.s32.totalorder %s80, 0
      %p357 = por %p355, %p356
      %p358 = scmp.ne.s32.totalorder %s350, %s352
      %p359 = scmp.eq.s32.totalorder %s85, 1
      %p360 = por %p358, %p359
      %p361 = scmp.ne.s32.totalorder %s352, %s353
      %p362 = scmp.eq.s32.totalorder %s85, 0
      %p363 = por %p361, %p362
      %p364 = scmp.ne.s32.totalorder %s352, %s353
      %p365 = scmp.eq.s32.totalorder %s86, 1
      %p366 = por %p364, %p365
      %p368 = scmp.ne.s32.totalorder %s353, %s367
      %p369 = scmp.eq.s32.totalorder %s86, 0
      %p370 = por %p368, %p369
      %s372 = sadd.s32 %s371, 1
      %p375 = scmp.eq.s32.totalorder %s80, 1
      %p376 = scmp.ne.s32.totalorder %s371, %s373
      %p377 = scmp.eq.s32.totalorder %s80, 0
      %p378 = por %p376, %p377
      %p379 = scmp.ne.s32.totalorder %s371, %s373
      %p380 = scmp.eq.s32.totalorder %s85, 1
      %p381 = por %p379, %p380
      %p382 = scmp.ne.s32.totalorder %s373, %s374
      %p383 = scmp.eq.s32.totalorder %s85, 0
      %p384 = por %p382, %p383
      %p385 = scmp.ne.s32.totalorder %s373, %s374
      %p386 = scmp.eq.s32.totalorder %s86, 1
      %p387 = por %p385, %p386
      %p389 = scmp.ne.s32.totalorder %s374, %s388
      %p390 = scmp.eq.s32.totalorder %s86, 0
      %p391 = por %p389, %p390
      %s393 = sadd.s32 %s392, 1
      %p396 = scmp.eq.s32.totalorder %s80, 1
      %p397 = scmp.ne.s32.totalorder %s392, %s394
      %p398 = scmp.eq.s32.totalorder %s80, 0
      %p399 = por %p397, %p398
      %p400 = scmp.ne.s32.totalorder %s392, %s394
      %p401 = scmp.eq.s32.totalorder %s85, 1
      %p402 = por %p400, %p401
      %p403 = scmp.ne.s32.totalorder %s394, %s395
      %p404 = scmp.eq.s32.totalorder %s85, 0
      %p405 = por %p403, %p404
      %p406 = scmp.ne.s32.totalorder %s394, %s395
      %p407 = scmp.eq.s32.totalorder %s86, 1
      %p408 = por %p406, %p407
      %p410 = scmp.ne.s32.totalorder %s395, %s409
      %p411 = scmp.eq.s32.totalorder %s86, 0
      %p412 = por %p410, %p411
      %s414 = sadd.s32 %s413, 1
      %p417 = scmp.eq.s32.totalorder %s80, 1
      %p418 = scmp.ne.s32.totalorder %s413, %s415
      %p419 = scmp.eq.s32.totalorder %s80, 0
      %p420 = por %p418, %p419
      %p421 = scmp.ne.s32.totalorder %s413, %s415
      %p422 = scmp.eq.s32.totalorder %s85, 1
      %p423 = por %p421, %p422
      %p424 = scmp.ne.s32.totalorder %s415, %s416
      %p425 = scmp.eq.s32.totalorder %s85, 0
      %p426 = por %p424, %p425
      %p427 = scmp.ne.s32.totalorder %s415, %s416
      %p428 = scmp.eq.s32.totalorder %s86, 1
      %p429 = por %p427, %p428
      %p431 = scmp.ne.s32.totalorder %s416, %s430
      %p432 = scmp.eq.s32.totalorder %s86, 0
      %p433 = por %p431, %p432
      %s435 = sadd.s32 %s434, 1
      %p438 = scmp.eq.s32.totalorder %s80, 1
      %p439 = scmp.ne.s32.totalorder %s434, %s436
      %p440 = scmp.eq.s32.totalorder %s80, 0
      %p441 = por %p439, %p440
      %p442 = scmp.ne.s32.totalorder %s434, %s436
      %p443 = scmp.eq.s32.totalorder %s85, 1
      %p444 = por %p442, %p443
      %p445 = scmp.ne.s32.totalorder %s436, %s437
      %p446 = scmp.eq.s32.totalorder %s85, 0
      %p447 = por %p445, %p446
      %p448 = scmp.ne.s32.totalorder %s436, %s437
      %p449 = scmp.eq.s32.totalorder %s86, 1
      %p450 = por %p448, %p449
      %p452 = scmp.ne.s32.totalorder %s437, %s451
      %p453 = scmp.eq.s32.totalorder %s86, 0
      %p454 = por %p452, %p453
      %s456 = sadd.s32 %s455, 1
      %p459 = scmp.eq.s32.totalorder %s80, 1
      %p460 = scmp.ne.s32.totalorder %s455, %s457
      %p461 = scmp.eq.s32.totalorder %s80, 0
      %p462 = por %p460, %p461
      %p463 = scmp.ne.s32.totalorder %s455, %s457
      %p464 = scmp.eq.s32.totalorder %s85, 1
      %p465 = por %p463, %p464
      %p466 = scmp.ne.s32.totalorder %s457, %s458
      %p467 = scmp.eq.s32.totalorder %s85, 0
      %p468 = por %p466, %p467
      %p469 = scmp.ne.s32.totalorder %s457, %s458
      %p470 = scmp.eq.s32.totalorder %s86, 1
      %p471 = por %p469, %p470
      %p473 = scmp.ne.s32.totalorder %s458, %s472
      %p474 = scmp.eq.s32.totalorder %s86, 0
      %p475 = por %p473, %p474
      %s477 = sadd.s32 %s476, 1
      %p480 = scmp.eq.s32.totalorder %s80, 1
      %p481 = scmp.ne.s32.totalorder %s476, %s478
      %p482 = scmp.eq.s32.totalorder %s80, 0
      %p483 = por %p481, %p482
      %p484 = scmp.ne.s32.totalorder %s476, %s478
      %p485 = scmp.eq.s32.totalorder %s85, 1
      %p486 = por %p484, %p485
      %p487 = scmp.ne.s32.totalorder %s478, %s479
      %p488 = scmp.eq.s32.totalorder %s85, 0
      %p489 = por %p487, %p488
      %p490 = scmp.ne.s32.totalorder %s478, %s479
      %p491 = scmp.eq.s32.totalorder %s86, 1
      %p492 = por %p490, %p491
      %p494 = scmp.ne.s32.totalorder %s479, %s493
      %p495 = scmp.eq.s32.totalorder %s86, 0
      %p496 = por %p494, %p495
      %s498 = sadd.s32 %s497, 1
      %p501 = scmp.eq.s32.totalorder %s80, 1
      %p502 = scmp.ne.s32.totalorder %s497, %s499
      %p503 = scmp.eq.s32.totalorder %s80, 0
      %p504 = por %p502, %p503
      %p505 = scmp.ne.s32.totalorder %s497, %s499
      %p506 = scmp.eq.s32.totalorder %s85, 1
      %p507 = por %p505, %p506
      %p508 = scmp.ne.s32.totalorder %s499, %s500
      %p509 = scmp.eq.s32.totalorder %s85, 0
      %p510 = por %p508, %p509
      %p511 = scmp.ne.s32.totalorder %s499, %s500
      %p512 = scmp.eq.s32.totalorder %s86, 1
      %p513 = por %p511, %p512
      %p515 = scmp.ne.s32.totalorder %s500, %s514
      %p516 = scmp.eq.s32.totalorder %s86, 0
      %p517 = por %p515, %p516
      %s519 = sadd.s32 %s518, 1
      %p522 = scmp.eq.s32.totalorder %s80, 1
      %p523 = scmp.ne.s32.totalorder %s518, %s520
      %p524 = scmp.eq.s32.totalorder %s80, 0
      %p525 = por %p523, %p524
      %p526 = scmp.ne.s32.totalorder %s518, %s520
      %p527 = scmp.eq.s32.totalorder %s85, 1
      %p528 = por %p526, %p527
      %p529 = scmp.ne.s32.totalorder %s520, %s521
      %p530 = scmp.eq.s32.totalorder %s85, 0
      %p531 = por %p529, %p530
      %p532 = scmp.ne.s32.totalorder %s520, %s521
      %p533 = scmp.eq.s32.totalorder %s86, 1
      %p534 = por %p532, %p533
      %p536 = scmp.ne.s32.totalorder %s521, %s535
      %p537 = scmp.eq.s32.totalorder %s86, 0
      %p538 = por %p536, %p537
      %s540 = sadd.s32 %s539, 1
      %p543 = scmp.eq.s32.totalorder %s80, 1
      %p544 = scmp.ne.s32.totalorder %s539, %s541
      %p545 = scmp.eq.s32.totalorder %s80, 0
      %p546 = por %p544, %p545
      %p547 = scmp.ne.s32.totalorder %s539, %s541
      %p548 = scmp.eq.s32.totalorder %s85, 1
      %p549 = por %p547, %p548
      %p550 = scmp.ne.s32.totalorder %s541, %s542
      %p551 = scmp.eq.s32.totalorder %s85, 0
      %p552 = por %p550, %p551
      %p553 = scmp.ne.s32.totalorder %s541, %s542
      %p554 = scmp.eq.s32.totalorder %s86, 1
      %p555 = por %p553, %p554
      %p557 = scmp.ne.s32.totalorder %s542, %s556
      %p558 = scmp.eq.s32.totalorder %s86, 0
      %p559 = por %p557, %p558
      %s561 = sadd.s32 %s560, 1
      %p564 = scmp.eq.s32.totalorder %s80, 1
      %p565 = scmp.ne.s32.totalorder %s560, %s562
      %p566 = scmp.eq.s32.totalorder %s80, 0
      %p567 = por %p565, %p566
      %p568 = scmp.ne.s32.totalorder %s560, %s562
      %p569 = scmp.eq.s32.totalorder %s85, 1
      %p570 = por %p568, %p569
      %p571 = scmp.ne.s32.totalorder %s562, %s563
      %p572 = scmp.eq.s32.totalorder %s85, 0
      %p573 = por %p571, %p572
      %p574 = scmp.ne.s32.totalorder %s562, %s563
      %p575 = scmp.eq.s32.totalorder %s86, 1
      %p576 = por %p574, %p575
      %p578 = scmp.ne.s32.totalorder %s563, %s577
      %p579 = scmp.eq.s32.totalorder %s86, 0
      %p580 = por %p578, %p579
      %s582 = sadd.s32 %s581, 1
      %p585 = scmp.eq.s32.totalorder %s80, 1
      %p586 = scmp.ne.s32.totalorder %s581, %s583
      %p587 = scmp.eq.s32.totalorder %s80, 0
      %p588 = por %p586, %p587
      %p589 = scmp.ne.s32.totalorder %s581, %s583
      %p590 = scmp.eq.s32.totalorder %s85, 1
      %p591 = por %p589, %p590
      %p592 = scmp.ne.s32.totalorder %s583, %s584
      %p593 = scmp.eq.s32.totalorder %s85, 0
      %p594 = por %p592, %p593
      %p595 = scmp.ne.s32.totalorder %s583, %s584
      %p596 = scmp.eq.s32.totalorder %s86, 1
      %p597 = por %p595, %p596
      %p599 = scmp.ne.s32.totalorder %s584, %s598
      %p600 = scmp.eq.s32.totalorder %s86, 0
      %p601 = por %p599, %p600
      %s603 = sadd.s32 %s602, 1
      %p606 = scmp.eq.s32.totalorder %s80, 1
      %p607 = scmp.ne.s32.totalorder %s602, %s604
      %p608 = scmp.eq.s32.totalorder %s80, 0
      %p609 = por %p607, %p608
      %p610 = scmp.ne.s32.totalorder %s602, %s604
      %p611 = scmp.eq.s32.totalorder %s85, 1
      %p612 = por %p610, %p611
      %p613 = scmp.ne.s32.totalorder %s604, %s605
      %p614 = scmp.eq.s32.totalorder %s85, 0
      %p615 = por %p613, %p614
      %p616 = scmp.ne.s32.totalorder %s604, %s605
      %p617 = scmp.eq.s32.totalorder %s86, 1
      %p618 = por %p616, %p617
      %p620 = scmp.ne.s32.totalorder %s605, %s619
      %p621 = scmp.eq.s32.totalorder %s86, 0
      %p622 = por %p620, %p621
      %s624 = sadd.s32 %s623, 1
      %p627 = scmp.eq.s32.totalorder %s80, 1
      %p628 = scmp.ne.s32.totalorder %s623, %s625
      %p629 = scmp.eq.s32.totalorder %s80, 0
      %p630 = por %p628, %p629
      %p631 = scmp.ne.s32.totalorder %s623, %s625
      %p632 = scmp.eq.s32.totalorder %s85, 1
      %p633 = por %p631, %p632
      %p634 = scmp.ne.s32.totalorder %s625, %s626
      %p635 = scmp.eq.s32.totalorder %s85, 0
      %p636 = por %p634, %p635
      %p637 = scmp.ne.s32.totalorder %s625, %s626
      %p638 = scmp.eq.s32.totalorder %s86, 1
      %p639 = por %p637, %p638
      %p641 = scmp.ne.s32.totalorder %s626, %s640
      %p642 = scmp.eq.s32.totalorder %s86, 0
      %p643 = por %p641, %p642
      %s645 = sadd.s32 %s644, 1
      %p648 = scmp.eq.s32.totalorder %s80, 1
      %p649 = scmp.ne.s32.totalorder %s644, %s646
      %p650 = scmp.eq.s32.totalorder %s80, 0
      %p651 = por %p649, %p650
      %p652 = scmp.ne.s32.totalorder %s644, %s646
      %p653 = scmp.eq.s32.totalorder %s85, 1
      %p654 = por %p652, %p653
      %p655 = scmp.ne.s32.totalorder %s646, %s647
      %p656 = scmp.eq.s32.totalorder %s85, 0
      %p657 = por %p655, %p656
      %p658 = scmp.ne.s32.totalorder %s646, %s647
      %p659 = scmp.eq.s32.totalorder %s86, 1
      %p660 = por %p658, %p659
      %p662 = scmp.ne.s32.totalorder %s647, %s661
      %p663 = scmp.eq.s32.totalorder %s86, 0
      %p664 = por %p662, %p663
      %s666 = sadd.s32 %s665, 1
      %p669 = scmp.eq.s32.totalorder %s80, 1
      %p670 = scmp.ne.s32.totalorder %s665, %s667
      %p671 = scmp.eq.s32.totalorder %s80, 0
      %p672 = por %p670, %p671
      %p673 = scmp.ne.s32.totalorder %s665, %s667
      %p674 = scmp.eq.s32.totalorder %s85, 1
      %p675 = por %p673, %p674
      %p676 = scmp.ne.s32.totalorder %s667, %s668
      %p677 = scmp.eq.s32.totalorder %s85, 0
      %p678 = por %p676, %p677
      %p679 = scmp.ne.s32.totalorder %s667, %s668
      %p680 = scmp.eq.s32.totalorder %s86, 1
      %p681 = por %p679, %p680
      %p683 = scmp.ne.s32.totalorder %s668, %s682
      %p684 = scmp.eq.s32.totalorder %s86, 0
      %p685 = por %p683, %p684
      %s687 = sadd.s32 %s686, 1
      %p690 = scmp.eq.s32.totalorder %s80, 1
      %p691 = scmp.ne.s32.totalorder %s686, %s688
      %p692 = scmp.eq.s32.totalorder %s80, 0
      %p693 = por %p691, %p692
      %p694 = scmp.ne.s32.totalorder %s686, %s688
      %p695 = scmp.eq.s32.totalorder %s85, 1
      %p696 = por %p694, %p695
      %p697 = scmp.ne.s32.totalorder %s688, %s689
      %p698 = scmp.eq.s32.totalorder %s85, 0
      %p699 = por %p697, %p698
      %p700 = scmp.ne.s32.totalorder %s688, %s689
      %p701 = scmp.eq.s32.totalorder %s86, 1
      %p702 = por %p700, %p701
      %p704 = scmp.ne.s32.totalorder %s689, %s703
      %p705 = scmp.eq.s32.totalorder %s86, 0
      %p706 = por %p704, %p705
      %s708 = sadd.s32 %s707, 1
      %p711 = scmp.eq.s32.totalorder %s80, 1
      %p712 = scmp.ne.s32.totalorder %s707, %s709
      %p713 = scmp.eq.s32.totalorder %s80, 0
      %p714 = por %p712, %p713
      %p715 = scmp.ne.s32.totalorder %s707, %s709
      %p716 = scmp.eq.s32.totalorder %s85, 1
      %p717 = por %p715, %p716
      %p718 = scmp.ne.s32.totalorder %s709, %s710
      %p719 = scmp.eq.s32.totalorder %s85, 0
      %p720 = por %p718, %p719
      %p721 = scmp.ne.s32.totalorder %s709, %s710
      %p722 = scmp.eq.s32.totalorder %s86, 1
      %p723 = por %p721, %p722
      %p725 = scmp.ne.s32.totalorder %s710, %s724
      %p726 = scmp.eq.s32.totalorder %s86, 0
      %p727 = por %p725, %p726
      %s728 = ssub.s32 %s80, %s87
      %p729 = scmp.eq.s32.totalorder %s728, 0
      %s731 = sadd.s32 %s730, 1
      %s732 = scalar_select %p729, %s730, %s731
      %p735 = pneg %p729
      %p736 = scmp.eq.s32.totalorder %s80, 1
      %p737 = por %p735, %p736
      %p738 = scmp.ne.s32.totalorder %s730, %s733
      %p739 = scmp.eq.s32.totalorder %s80, 0
      %p740 = por %p738, %p739
      %p741 = scmp.ne.s32.totalorder %s730, %s733
      %p742 = scmp.eq.s32.totalorder %s85, 1
      %p743 = por %p741, %p742
      %p744 = scmp.ne.s32.totalorder %s733, %s734
      %p745 = scmp.eq.s32.totalorder %s85, 0
      %p746 = por %p744, %p745
      %p747 = scmp.ne.s32.totalorder %s733, %s734
      %p748 = scmp.eq.s32.totalorder %s86, 1
      %p749 = por %p747, %p748
      %p751 = scmp.ne.s32.totalorder %s734, %s750
      %p752 = scmp.eq.s32.totalorder %s86, 0
      %p753 = por %p751, %p752
      %p754 = scmp.le.s32.totalorder 1, %s80
      %p755 = scmp.lt.s32.totalorder %s80, 3
      %p756 = pnand %p754, %p755
      %p757 = pneg %p756
      // Predicated region
      $region9: #{tpu_custom_call.1} parent=5 // pred_check
        _
      $region10: #{tpu_custom_call.1} parent=5 // pred_check_branch
        %759 = sbr.rel (%p756) target = $region12
      $region11: #{tpu_custom_call.1} parent=5 // pred_region
        %s760 = ssub.s32 %s80, 1
        // Predicated region
        $region13: #{tpu_custom_call.1} parent=11 // pred_check
          %p761 = pneg %p153
        $region14: #{tpu_custom_call.1} parent=11 // pred_check_branch
          %763 = sbr.rel (%p761) target = $region16
        $region15: #{tpu_custom_call.1} parent=11 // pred_region
          %s765 = ssub.s32 64, 64
          %766 = vsyncadd [#allocation5], %s765
          %s768 = sshll.u32 [#allocation4], 4
          %s769 = int_to_ptr.vmem [resolvable:$true] %s768
          %771 = dma.hbm_to_vmem [thread:$0]  %s5, 64, %s769, [#allocation5]
        $region16: #{tpu_custom_call.1} parent=11 // pred_fallthru
          _
        // Predicated region
        $region17: #{tpu_custom_call.1} parent=11 // pred_check
          %p772 = pneg %p174
        $region18: #{tpu_custom_call.1} parent=11 // pred_check_branch
          %774 = sbr.rel (%p772) target = $region20
        $region19: #{tpu_custom_call.1} parent=11 // pred_region
          _
        $region20: #{tpu_custom_call.1} parent=11 // pred_fallthru
          _
        // Predicated region
        $region21: #{tpu_custom_call.1} parent=11 // pred_check
          %p775 = pneg %p195
        $region22: #{tpu_custom_call.1} parent=11 // pred_check_branch
          %777 = sbr.rel (%p775) target = $region24
        $region23: #{tpu_custom_call.1} parent=11 // pred_region
          _
        $region24: #{tpu_custom_call.1} parent=11 // pred_fallthru
          _
        // Predicated region
        $region25: #{tpu_custom_call.1} parent=11 // pred_check
          %p778 = pneg %p216
        $region26: #{tpu_custom_call.1} parent=11 // pred_check_branch
          %780 = sbr.rel (%p778) target = $region28
        $region27: #{tpu_custom_call.1} parent=11 // pred_region
          %s782 = ssub.s32 256, 256
          %783 = vsyncadd [#allocation8], %s782
          %s784 = sshll.u32 [#allocation7], 4
          %s785 = int_to_ptr.vmem [resolvable:$true] %s784
          %790 = dma.hbm_to_vmem [thread:$0]  %s11, 256, %s785, [#allocation8], 64, 64, 4
        $region28: #{tpu_custom_call.1} parent=11 // pred_fallthru
          _
        // Predicated region
        $region29: #{tpu_custom_call.1} parent=11 // pred_check
          %p791 = pneg %p237
        $region30: #{tpu_custom_call.1} parent=11 // pred_check_branch
          %793 = sbr.rel (%p791) target = $region32
        $region31: #{tpu_custom_call.1} parent=11 // pred_region
          %s795 = ssub.s32 256, 256
          %796 = vsyncadd [#allocation8], %s795
          %s797 = sshll.u32 [#allocation9], 4
          %s798 = int_to_ptr.vmem [resolvable:$true] %s797
          %803 = dma.hbm_to_vmem [thread:$0]  %s13, 256, %s798, [#allocation8], 64, 64, 4
        $region32: #{tpu_custom_call.1} parent=11 // pred_fallthru
          _
        // Predicated region
        $region33: #{tpu_custom_call.1} parent=11 // pred_check
          %p804 = pneg %p258
        $region34: #{tpu_custom_call.1} parent=11 // pred_check_branch
          %806 = sbr.rel (%p804) target = $region36
        $region35: #{tpu_custom_call.1} parent=11 // pred_region
          _
        $region36: #{tpu_custom_call.1} parent=11 // pred_fallthru
          _
        // Predicated region
        $region37: #{tpu_custom_call.1} parent=11 // pred_check
          %p807 = pneg %p279
        $region38: #{tpu_custom_call.1} parent=11 // pred_check_branch
          %809 = sbr.rel (%p807) target = $region40
        $region39: #{tpu_custom_call.1} parent=11 // pred_region
          %s811 = ssub.s32 16, 16
          %812 = vsyncadd [#allocation11], %s811
          %s814 = sshll.u32 [#allocation10], 4
          %s815 = int_to_ptr.vmem [resolvable:$true] %s814
          %817 = dma.hbm_to_vmem [thread:$0]  %s17, 16, %s815, [#allocation11]
        $region40: #{tpu_custom_call.1} parent=11 // pred_fallthru
          _
        // Predicated region
        $region41: #{tpu_custom_call.1} parent=11 // pred_check
          %p818 = pneg %p300
        $region42: #{tpu_custom_call.1} parent=11 // pred_check_branch
          %820 = sbr.rel (%p818) target = $region44
        $region43: #{tpu_custom_call.1} parent=11 // pred_region
          %s822 = ssub.s32 16, 16
          %823 = vsyncadd [#allocation11], %s822
          %s825 = sshll.u32 [#allocation12], 4
          %s826 = int_to_ptr.vmem [resolvable:$true] %s825
          %828 = dma.hbm_to_vmem [thread:$0]  %s19, 16, %s826, [#allocation11]
        $region44: #{tpu_custom_call.1} parent=11 // pred_fallthru
          _
        // Predicated region
        $region45: #{tpu_custom_call.1} parent=11 // pred_check
          %p829 = pneg %p321
        $region46: #{tpu_custom_call.1} parent=11 // pred_check_branch
          %831 = sbr.rel (%p829) target = $region48
        $region47: #{tpu_custom_call.1} parent=11 // pred_region
          %s833 = ssub.s32 256, 256
          %834 = vsyncadd [#allocation14], %s833
          %s835 = sshll.u32 [#allocation13], 4
          %s836 = int_to_ptr.vmem [resolvable:$true] %s835
          %841 = dma.hbm_to_vmem [thread:$0]  %s21, 256, %s836, [#allocation14], 64, 64, 4
        $region48: #{tpu_custom_call.1} parent=11 // pred_fallthru
          _
        // Predicated region
        $region49: #{tpu_custom_call.1} parent=11 // pred_check
          %p842 = pneg %p342
        $region50: #{tpu_custom_call.1} parent=11 // pred_check_branch
          %844 = sbr.rel (%p842) target = $region52
        $region51: #{tpu_custom_call.1} parent=11 // pred_region
          %s846 = ssub.s32 16, 16
          %847 = vsyncadd [#allocation14], %s846
          %s849 = sshll.u32 [#allocation15], 4
          %s850 = int_to_ptr.vmem [resolvable:$true] %s849
          %852 = dma.hbm_to_vmem [thread:$0]  %s23, 16, %s850, [#allocation14]
        $region52: #{tpu_custom_call.1} parent=11 // pred_fallthru
          _
        // Predicated region
        $region53: #{tpu_custom_call.1} parent=11 // pred_check
          %p853 = pneg %p363
        $region54: #{tpu_custom_call.1} parent=11 // pred_check_branch
          %855 = sbr.rel (%p853) target = $region56
        $region55: #{tpu_custom_call.1} parent=11 // pred_region
          %s857 = ssub.s32 16, 16
          %858 = vsyncadd [#allocation17], %s857
          %s860 = sshll.u32 [#allocation16], 4
          %s861 = int_to_ptr.vmem [resolvable:$true] %s860
          %863 = dma.hbm_to_vmem [thread:$0]  %s25, 16, %s861, [#allocation17]
        $region56: #{tpu_custom_call.1} parent=11 // pred_fallthru
          _
        // Predicated region
        $region57: #{tpu_custom_call.1} parent=11 // pred_check
          %p864 = pneg %p384
        $region58: #{tpu_custom_call.1} parent=11 // pred_check_branch
          %866 = sbr.rel (%p864) target = $region60
        $region59: #{tpu_custom_call.1} parent=11 // pred_region
          %s868 = ssub.s32 16, 16
          %869 = vsyncadd [#allocation17], %s868
          %s871 = sshll.u32 [#allocation18], 4
          %s872 = int_to_ptr.vmem [resolvable:$true] %s871
          %874 = dma.hbm_to_vmem [thread:$0]  %s27, 16, %s872, [#allocation17]
        $region60: #{tpu_custom_call.1} parent=11 // pred_fallthru
          _
        // Predicated region
        $region61: #{tpu_custom_call.1} parent=11 // pred_check
          %p875 = pneg %p405
        $region62: #{tpu_custom_call.1} parent=11 // pred_check_branch
          %877 = sbr.rel (%p875) target = $region64
        $region63: #{tpu_custom_call.1} parent=11 // pred_region
          %s879 = ssub.s32 256, 256
          %880 = vsyncadd [#allocation20], %s879
          %s881 = sshll.u32 [#allocation19], 4
          %s882 = int_to_ptr.vmem [resolvable:$true] %s881
          %887 = dma.hbm_to_vmem [thread:$0]  %s29, 256, %s882, [#allocation20], 64, 64, 4
        $region64: #{tpu_custom_call.1} parent=11 // pred_fallthru
          _
        // Predicated region
        $region65: #{tpu_custom_call.1} parent=11 // pred_check
          %p888 = pneg %p426
        $region66: #{tpu_custom_call.1} parent=11 // pred_check_branch
          %890 = sbr.rel (%p888) target = $region68
        $region67: #{tpu_custom_call.1} parent=11 // pred_region
          %s892 = ssub.s32 256, 256
          %893 = vsyncadd [#allocation20], %s892
          %s894 = sshll.u32 [#allocation21], 4
          %s895 = int_to_ptr.vmem [resolvable:$true] %s894
          %900 = dma.hbm_to_vmem [thread:$0]  %s31, 256, %s895, [#allocation20], 64, 64, 4
        $region68: #{tpu_custom_call.1} parent=11 // pred_fallthru
          _
        // Predicated region
        $region69: #{tpu_custom_call.1} parent=11 // pred_check
          %p901 = pneg %p447
        $region70: #{tpu_custom_call.1} parent=11 // pred_check_branch
          %903 = sbr.rel (%p901) target = $region72
        $region71: #{tpu_custom_call.1} parent=11 // pred_region
          %s905 = ssub.s32 16, 16
          %906 = vsyncadd [#allocation23], %s905
          %s908 = sshll.u32 [#allocation22], 4
          %s909 = int_to_ptr.vmem [resolvable:$true] %s908
          %911 = dma.hbm_to_vmem [thread:$0]  %s33, 16, %s909, [#allocation23]
        $region72: #{tpu_custom_call.1} parent=11 // pred_fallthru
          _
        // Predicated region
        $region73: #{tpu_custom_call.1} parent=11 // pred_check
          %p912 = pneg %p468
        $region74: #{tpu_custom_call.1} parent=11 // pred_check_branch
          %914 = sbr.rel (%p912) target = $region76
        $region75: #{tpu_custom_call.1} parent=11 // pred_region
          %s916 = ssub.s32 16, 16
          %917 = vsyncadd [#allocation23], %s916
          %s919 = sshll.u32 [#allocation24], 4
          %s920 = int_to_ptr.vmem [resolvable:$true] %s919
          %922 = dma.hbm_to_vmem [thread:$0]  %s35, 16, %s920, [#allocation23]
        $region76: #{tpu_custom_call.1} parent=11 // pred_fallthru
          _
        // Predicated region
        $region77: #{tpu_custom_call.1} parent=11 // pred_check
          %p923 = pneg %p489
        $region78: #{tpu_custom_call.1} parent=11 // pred_check_branch
          %925 = sbr.rel (%p923) target = $region80
        $region79: #{tpu_custom_call.1} parent=11 // pred_region
          _
        $region80: #{tpu_custom_call.1} parent=11 // pred_fallthru
          _
        // Predicated region
        $region81: #{tpu_custom_call.1} parent=11 // pred_check
          %p926 = pneg %p510
        $region82: #{tpu_custom_call.1} parent=11 // pred_check_branch
          %928 = sbr.rel (%p926) target = $region84
        $region83: #{tpu_custom_call.1} parent=11 // pred_region
          _
        $region84: #{tpu_custom_call.1} parent=11 // pred_fallthru
          _
        // Predicated region
        $region85: #{tpu_custom_call.1} parent=11 // pred_check
          %p929 = pneg %p531
        $region86: #{tpu_custom_call.1} parent=11 // pred_check_branch
          %931 = sbr.rel (%p929) target = $region88
        $region87: #{tpu_custom_call.1} parent=11 // pred_region
          %s933 = ssub.s32 256, 256
          %934 = vsyncadd [#allocation26], %s933
          %s935 = sshll.u32 [#allocation25], 4
          %s936 = int_to_ptr.vmem [resolvable:$true] %s935
          %941 = dma.hbm_to_vmem [thread:$0]  %s41, 256, %s936, [#allocation26], 64, 64, 4
        $region88: #{tpu_custom_call.1} parent=11 // pred_fallthru
          _
        // Predicated region
        $region89: #{tpu_custom_call.1} parent=11 // pred_check
          %p942 = pneg %p552
        $region90: #{tpu_custom_call.1} parent=11 // pred_check_branch
          %944 = sbr.rel (%p942) target = $region92
        $region91: #{tpu_custom_call.1} parent=11 // pred_region
          _
        $region92: #{tpu_custom_call.1} parent=11 // pred_fallthru
          _
        // Predicated region
        $region93: #{tpu_custom_call.1} parent=11 // pred_check
          %p945 = pneg %p573
        $region94: #{tpu_custom_call.1} parent=11 // pred_check_branch
          %947 = sbr.rel (%p945) target = $region96
        $region95: #{tpu_custom_call.1} parent=11 // pred_region
          _
        $region96: #{tpu_custom_call.1} parent=11 // pred_fallthru
          _
        // Predicated region
        $region97: #{tpu_custom_call.1} parent=11 // pred_check
          %p948 = pneg %p594
        $region98: #{tpu_custom_call.1} parent=11 // pred_check_branch
          %950 = sbr.rel (%p948) target = $region100
        $region99: #{tpu_custom_call.1} parent=11 // pred_region
          _
        $region100: #{tpu_custom_call.1} parent=11 // pred_fallthru
          _
        // Predicated region
        $region101: #{tpu_custom_call.1} parent=11 // pred_check
          %p951 = pneg %p615
        $region102: #{tpu_custom_call.1} parent=11 // pred_check_branch
          %953 = sbr.rel (%p951) target = $region104
        $region103: #{tpu_custom_call.1} parent=11 // pred_region
          %s955 = ssub.s32 256, 256
          %956 = vsyncadd [#allocation26], %s955
          %s957 = sshll.u32 [#allocation27], 4
          %s958 = int_to_ptr.vmem [resolvable:$true] %s957
          %963 = dma.hbm_to_vmem [thread:$0]  %s49, 256, %s958, [#allocation26], 64, 64, 4
        $region104: #{tpu_custom_call.1} parent=11 // pred_fallthru
          _
        // Predicated region
        $region105: #{tpu_custom_call.1} parent=11 // pred_check
          %p964 = pneg %p636
        $region106: #{tpu_custom_call.1} parent=11 // pred_check_branch
          %966 = sbr.rel (%p964) target = $region108
        $region107: #{tpu_custom_call.1} parent=11 // pred_region
          _
        $region108: #{tpu_custom_call.1} parent=11 // pred_fallthru
          _
        // Predicated region
        $region109: #{tpu_custom_call.1} parent=11 // pred_check
          %p967 = pneg %p657
        $region110: #{tpu_custom_call.1} parent=11 // pred_check_branch
          %969 = sbr.rel (%p967) target = $region112
        $region111: #{tpu_custom_call.1} parent=11 // pred_region
          _
        $region112: #{tpu_custom_call.1} parent=11 // pred_fallthru
          _
        // Predicated region
        $region113: #{tpu_custom_call.1} parent=11 // pred_check
          %p970 = pneg %p678
        $region114: #{tpu_custom_call.1} parent=11 // pred_check_branch
          %972 = sbr.rel (%p970) target = $region116
        $region115: #{tpu_custom_call.1} parent=11 // pred_region
          _
        $region116: #{tpu_custom_call.1} parent=11 // pred_fallthru
          _
        // Predicated region
        $region117: #{tpu_custom_call.1} parent=11 // pred_check
          %p973 = pneg %p699
        $region118: #{tpu_custom_call.1} parent=11 // pred_check_branch
          %975 = sbr.rel (%p973) target = $region120
        $region119: #{tpu_custom_call.1} parent=11 // pred_region
          _
        $region120: #{tpu_custom_call.1} parent=11 // pred_fallthru
          _
        // Predicated region
        $region121: #{tpu_custom_call.1} parent=11 // pred_check
          %p976 = pneg %p720
        $region122: #{tpu_custom_call.1} parent=11 // pred_check_branch
          %978 = sbr.rel (%p976) target = $region124
        $region123: #{tpu_custom_call.1} parent=11 // pred_region
          _
        $region124: #{tpu_custom_call.1} parent=11 // pred_fallthru
          _
      $region12: #{tpu_custom_call.1} parent=5 // pred_fallthru
        _
      %p979 = scmp.lt.s32.totalorder %s80, 2
      // Predicated region
      $region125: #{tpu_custom_call.1} parent=5 // pred_check
        %p980 = pneg %p979
      $region126: #{tpu_custom_call.1} parent=5 // pred_check_branch
        %982 = sbr.rel (%p980) target = $region128
      $region127: #{tpu_custom_call.1} parent=5 // pred_region
        // Predicated region
        $region129: #{tpu_custom_call.1} parent=127 // pred_check
          %p983 = pneg %p100
        $region130: #{tpu_custom_call.1} parent=127 // pred_check_branch
          %985 = sbr.rel (%p983) target = $region132
        $region131: #{tpu_custom_call.1} parent=127 // pred_region
          %p986 = scmp.lt.s32.totalorder %s80, 1
          %s987 = scalar_select %p986, %s80, 1
          %s988 = smul.addr %s987, 8
          %s989 = scalar_lea.vmem %s1, %s988
        $region132: #{tpu_custom_call.1} parent=127 // pred_fallthru
          _
        // Predicated region
        $region133: #{tpu_custom_call.1} parent=127 // pred_check
          %p990 = pneg %p126
        $region134: #{tpu_custom_call.1} parent=127 // pred_check_branch
          %992 = sbr.rel (%p990) target = $region136
        $region135: #{tpu_custom_call.1} parent=127 // pred_region
          %p993 = scmp.lt.s32.totalorder %s80, 1
          %s994 = scalar_select %p993, %s80, 1
          %s995 = smul.addr %s994, 8
          %s996 = scalar_lea.vmem %s3, %s995
        $region136: #{tpu_custom_call.1} parent=127 // pred_fallthru
          _
      $region128: #{tpu_custom_call.1} parent=5 // pred_fallthru
        _
      %p997 = scmp.le.s32.totalorder 1, %s80
      %p998 = scmp.lt.s32.totalorder %s80, 3
      %p999 = pnand %p997, %p998
      %p1000 = pneg %p999
      // Predicated region
      $region137: #{tpu_custom_call.1} parent=5 // pred_check
        _
      $region138: #{tpu_custom_call.1} parent=5 // pred_check_branch
        %1002 = sbr.rel (%p999) target = $region140
      $region139: #{tpu_custom_call.1} parent=5 // pred_region
        %s1003 = ssub.s32 %s80, 1
        // Predicated region
        $region141: #{tpu_custom_call.1} parent=139 // pred_check
          %p1004 = pneg %p153
        $region142: #{tpu_custom_call.1} parent=139 // pred_check_branch
          %1006 = sbr.rel (%p1004) target = $region144
        $region143: #{tpu_custom_call.1} parent=139 // pred_region
          %1007 = dma.done [#allocation5], 64
        $region144: #{tpu_custom_call.1} parent=139 // pred_fallthru
          _
        // Predicated region
        $region145: #{tpu_custom_call.1} parent=139 // pred_check
          %p1008 = pneg %p216
        $region146: #{tpu_custom_call.1} parent=139 // pred_check_branch
          %1010 = sbr.rel (%p1008) target = $region148
        $region147: #{tpu_custom_call.1} parent=139 // pred_region
          %1011 = dma.done [#allocation8], 256
        $region148: #{tpu_custom_call.1} parent=139 // pred_fallthru
          _
        // Predicated region
        $region149: #{tpu_custom_call.1} parent=139 // pred_check
          %p1012 = pneg %p237
        $region150: #{tpu_custom_call.1} parent=139 // pred_check_branch
          %1014 = sbr.rel (%p1012) target = $region152
        $region151: #{tpu_custom_call.1} parent=139 // pred_region
          %1015 = dma.done [#allocation8], 256
        $region152: #{tpu_custom_call.1} parent=139 // pred_fallthru
          _
        // Predicated region
        $region153: #{tpu_custom_call.1} parent=139 // pred_check
          %p1016 = pneg %p279
        $region154: #{tpu_custom_call.1} parent=139 // pred_check_branch
          %1018 = sbr.rel (%p1016) target = $region156
        $region155: #{tpu_custom_call.1} parent=139 // pred_region
          %1019 = dma.done [#allocation11], 16
        $region156: #{tpu_custom_call.1} parent=139 // pred_fallthru
          _
        // Predicated region
        $region157: #{tpu_custom_call.1} parent=139 // pred_check
          %p1020 = pneg %p300
        $region158: #{tpu_custom_call.1} parent=139 // pred_check_branch
          %1022 = sbr.rel (%p1020) target = $region160
        $region159: #{tpu_custom_call.1} parent=139 // pred_region
          %1023 = dma.done [#allocation11], 16
        $region160: #{tpu_custom_call.1} parent=139 // pred_fallthru
          _
        // Predicated region
        $region161: #{tpu_custom_call.1} parent=139 // pred_check
          %p1024 = pneg %p321
        $region162: #{tpu_custom_call.1} parent=139 // pred_check_branch
          %1026 = sbr.rel (%p1024) target = $region164
        $region163: #{tpu_custom_call.1} parent=139 // pred_region
          %1027 = dma.done [#allocation14], 256
        $region164: #{tpu_custom_call.1} parent=139 // pred_fallthru
          _
        // Predicated region
        $region165: #{tpu_custom_call.1} parent=139 // pred_check
          %p1028 = pneg %p342
        $region166: #{tpu_custom_call.1} parent=139 // pred_check_branch
          %1030 = sbr.rel (%p1028) target = $region168
        $region167: #{tpu_custom_call.1} parent=139 // pred_region
          %1031 = dma.done [#allocation14], 16
        $region168: #{tpu_custom_call.1} parent=139 // pred_fallthru
          _
        // Predicated region
        $region169: #{tpu_custom_call.1} parent=139 // pred_check
          %p1032 = pneg %p363
        $region170: #{tpu_custom_call.1} parent=139 // pred_check_branch
          %1034 = sbr.rel (%p1032) target = $region172
        $region171: #{tpu_custom_call.1} parent=139 // pred_region
          %1035 = dma.done [#allocation17], 16
        $region172: #{tpu_custom_call.1} parent=139 // pred_fallthru
          _
        // Predicated region
        $region173: #{tpu_custom_call.1} parent=139 // pred_check
          %p1036 = pneg %p384
        $region174: #{tpu_custom_call.1} parent=139 // pred_check_branch
          %1038 = sbr.rel (%p1036) target = $region176
        $region175: #{tpu_custom_call.1} parent=139 // pred_region
          %1039 = dma.done [#allocation17], 16
        $region176: #{tpu_custom_call.1} parent=139 // pred_fallthru
          _
        // Predicated region
        $region177: #{tpu_custom_call.1} parent=139 // pred_check
          %p1040 = pneg %p405
        $region178: #{tpu_custom_call.1} parent=139 // pred_check_branch
          %1042 = sbr.rel (%p1040) target = $region180
        $region179: #{tpu_custom_call.1} parent=139 // pred_region
          %1043 = dma.done [#allocation20], 256
        $region180: #{tpu_custom_call.1} parent=139 // pred_fallthru
          _
        // Predicated region
        $region181: #{tpu_custom_call.1} parent=139 // pred_check
          %p1044 = pneg %p426
        $region182: #{tpu_custom_call.1} parent=139 // pred_check_branch
          %1046 = sbr.rel (%p1044) target = $region184
        $region183: #{tpu_custom_call.1} parent=139 // pred_region
          %1047 = dma.done [#allocation20], 256
        $region184: #{tpu_custom_call.1} parent=139 // pred_fallthru
          _
        // Predicated region
        $region185: #{tpu_custom_call.1} parent=139 // pred_check
          %p1048 = pneg %p447
        $region186: #{tpu_custom_call.1} parent=139 // pred_check_branch
          %1050 = sbr.rel (%p1048) target = $region188
        $region187: #{tpu_custom_call.1} parent=139 // pred_region
          %1051 = dma.done [#allocation23], 16
        $region188: #{tpu_custom_call.1} parent=139 // pred_fallthru
          _
        // Predicated region
        $region189: #{tpu_custom_call.1} parent=139 // pred_check
          %p1052 = pneg %p468
        $region190: #{tpu_custom_call.1} parent=139 // pred_check_branch
          %1054 = sbr.rel (%p1052) target = $region192
        $region191: #{tpu_custom_call.1} parent=139 // pred_region
          %1055 = dma.done [#allocation23], 16
        $region192: #{tpu_custom_call.1} parent=139 // pred_fallthru
          _
        // Predicated region
        $region193: #{tpu_custom_call.1} parent=139 // pred_check
          %p1056 = pneg %p531
        $region194: #{tpu_custom_call.1} parent=139 // pred_check_branch
          %1058 = sbr.rel (%p1056) target = $region196
        $region195: #{tpu_custom_call.1} parent=139 // pred_region
          %1059 = dma.done [#allocation26], 256
        $region196: #{tpu_custom_call.1} parent=139 // pred_fallthru
          _
        // Predicated region
        $region197: #{tpu_custom_call.1} parent=139 // pred_check
          %p1060 = pneg %p615
        $region198: #{tpu_custom_call.1} parent=139 // pred_check_branch
          %1062 = sbr.rel (%p1060) target = $region200
        $region199: #{tpu_custom_call.1} parent=139 // pred_region
          %1063 = dma.done [#allocation26], 256
        $region200: #{tpu_custom_call.1} parent=139 // pred_fallthru
          _
        %p1064 = scmp.lt.s32.totalorder %s85, 1
        %s1065 = scalar_select %p1064, %s85, 1
        %s1066 = smul.addr %s1065, 8
        %s1067 = scalar_lea.vmem %s1, %s1066
        %p1068 = pneg %p106
        %p1069 = pneg %p103
        %p1070 = scmp.lt.s32.totalorder %s85, 1
        %s1071 = scalar_select %p1070, %s85, 1
        %s1072 = smul.addr %s1071, 8
        %s1073 = scalar_lea.vmem %s3, %s1072
        %p1074 = pneg %p132
        %p1075 = pneg %p129
        %p1076 = pneg %p153
        %p1077 = pneg %p150
        %p1078 = pneg %p174
        %p1079 = pneg %p171
        %p1080 = pneg %p195
        %p1081 = pneg %p192
        %p1082 = pneg %p216
        %p1083 = pneg %p213
        %p1084 = pneg %p237
        %p1085 = pneg %p234
        %p1086 = pneg %p258
        %p1087 = pneg %p255
        %p1088 = pneg %p279
        %p1089 = pneg %p276
        %p1090 = pneg %p300
        %p1091 = pneg %p297
        %p1092 = pneg %p321
        %p1093 = pneg %p318
        %p1094 = pneg %p342
        %p1095 = pneg %p339
        %p1096 = pneg %p363
        %p1097 = pneg %p360
        %p1098 = pneg %p384
        %p1099 = pneg %p381
        %p1100 = pneg %p405
        %p1101 = pneg %p402
        %p1102 = pneg %p426
        %p1103 = pneg %p423
        %p1104 = pneg %p447
        %p1105 = pneg %p444
        %p1106 = pneg %p468
        %p1107 = pneg %p465
        %p1108 = pneg %p489
        %p1109 = pneg %p486
        %p1110 = pneg %p510
        %p1111 = pneg %p507
        %p1112 = pneg %p531
        %p1113 = pneg %p528
        %p1114 = pneg %p552
        %p1115 = pneg %p549
        %p1116 = pneg %p573
        %p1117 = pneg %p570
        %p1118 = pneg %p594
        %p1119 = pneg %p591
        %p1120 = pneg %p615
        %p1121 = pneg %p612
        %p1122 = pneg %p636
        %p1123 = pneg %p633
        %p1124 = pneg %p657
        %p1125 = pneg %p654
        %p1126 = pneg %p678
        %p1127 = pneg %p675
        %p1128 = pneg %p699
        %p1129 = pneg %p696
        %p1130 = pneg %p720
        %p1131 = pneg %p717
        %p1132 = pneg %p746
        %p1133 = pneg %p743
        %s1134 = sand.u32 %s733, 1
        %s1135 = scalar_lea.sflag [#allocation6], %s1134
        %s1136 = sand.u32 %s733, 1
        %s1137 = smul.addr %s1136, 8
        %s1138 = scalar_lea.vmem [#allocation28], %s1137
        %p1139 = scmp.lt.s32.totalorder %s85, 1
        %s1140 = scalar_select %p1139, %s85, 1
        %s1141 = smul.addr %s1140, 8
        %s1142 = scalar_lea.vmem %s1, %s1141
        %p1143 = scmp.lt.s32.totalorder %s85, 1
        %s1144 = scalar_select %p1143, %s85, 1
        %s1145 = smul.addr %s1144, 8
        %s1146 = scalar_lea.vmem %s3, %s1145
        %v1148 = vld [vmem:[%s1142] sm:$0xff]
        %v1149 = vpack.c.bf16 %v1148, %v1148
        %v1150 = vld [vmem:[%s1146] sm:$0xff]
        %v1151 = vpack.c.bf16 %v1150, %v1150
        %v1152 = vld [vmem:[%s9] sm:$0xf]
        %v1153 = vld [vmem:[%s9 + $0x4] sm:$0xf]
        %v1154 = vld [vmem:[%s9 + $0x8] sm:$0xf]
        %v1155 = vld [vmem:[%s9 + $0xc] sm:$0xf]
        %v1156 = vld [vmem:[%s15] sm:$0x1]
        %v1158 = vlaneseq
        %v1159 = vshrl.u32 %v1158, 7
        %v1160 = vsub.s32 0, %v1159
        %v1161 = vrot.slane %v1156, %v1160
        %v1167 = vunpack.c.l.b16 %v1152
        %v1168 = vunpack.c.l.b16 %v1153
        %v1169 = vunpack.c.l.b16 %v1154
        %v1170 = vunpack.c.l.b16 %v1155
        %v1171 = vpack.c.b16 %v1168, %v1167
        %v1172 = vpack.c.b16 %v1170, %v1169
        %vm1175 = vcmask 261120
        %v1177 = vsel %vm1175, %v1151, 0
        %1179 = vmatprep.subr.bf16.mxu0 0
        %1180 = vmatpush1.bf16.msra.mxu0 0
        %1181 = vmatprep.subr.bf16.mxu0 0
        %1182 = vmatpush1.bf16.msra.mxu0 0
        %1183 = vmatprep.subr.bf16.mxu0 0
        %1184 = vmatpush1.bf16.msra.mxu0 0
        %1185 = vmatprep.subr.bf16.mxu0 0
        %1186 = vmatpush1.bf16.msra.mxu0 0
        %1187 = vmatprep.subr.bf16.mxu0 0
        %1188 = vmatpush1.bf16.msra.mxu0 0
        %1189 = vmatprep.subr.bf16.mxu0 0
        %1190 = vmatpush1.bf16.msra.mxu0 0
        %1191 = vmatprep.subr.bf16.mxu0 0
        %1192 = vmatpush1.bf16.msra.mxu0 %v1172
        %1193 = vmatprep.subr.bf16.mxu0 0
        %1194 = vmatpush1.bf16.msra.mxu0 %v1171
        %1195 = vmatprep.subr.bf16.mxu0 0
        %1196 = vmatpush2.bf16.msra.mxu0 0
        %1197 = vmatprep.subr.bf16.mxu0 0
        %1198 = vmatpush2.bf16.msra.mxu0 0
        %1199 = vmatprep.subr.bf16.mxu0 0
        %1200 = vmatpush2.bf16.msra.mxu0 0
        %1201 = vmatprep.subr.bf16.mxu0 0
        %1202 = vmatpush2.bf16.msra.mxu0 0
        %1203 = vmatprep.subr.bf16.mxu0 0
        %1204 = vmatpush2.bf16.msra.mxu0 0
        %1205 = vmatprep.subr.bf16.mxu0 0
        %1206 = vmatpush2.bf16.msra.mxu0 0
        %1207 = vmatprep.subr.bf16.mxu0 0
        %1208 = vmatpush2.bf16.msra.mxu0 0
        %1209 = vmatprep.subr.bf16.mxu0 0
        %1210 = vmatpush2.bf16.msra.mxu0 0
        %1211 = vmatprep.mubr.bf16.mxu0 0
        %1212 = vmatmul.mubr.bf16.gmra.mxu0 %v1177
        %v1213 = vpop.f32.mrf.mxu0
        %v1214 = vadd.f32 %v1161, %v1213
        %v1215 = vpop.f32.mrf.mxu0
        %v1216 = vpop.f32.mrf.mxu0
        %v1217 = vpop.f32.mrf.mxu0
        %1218 = vdwg.mxu0
        %v1219 = vmul.f32 %v1214, 0.35355338
        %v1220 = vpack.c.bf16 %v1219, %v1219
        %v1221 = vld [vmem:[#allocation7] sm:$0xf]
        %v1222 = vld [vmem:[#allocation7 + $0x4] sm:$0xf]
        %v1223 = vld [vmem:[#allocation7 + $0x8] sm:$0xf]
        %v1224 = vld [vmem:[#allocation7 + $0xc] sm:$0xf]
        %v1225 = vld [vmem:[#allocation10] sm:$0x1]
        %v1227 = vlaneseq
        %v1228 = vshrl.u32 %v1227, 7
        %v1229 = vsub.s32 0, %v1228
        %v1230 = vrot.slane %v1225, %v1229
        %v1236 = vunpack.c.l.b16 %v1221
        %v1237 = vunpack.c.l.b16 %v1222
        %v1238 = vunpack.c.l.b16 %v1223
        %v1239 = vunpack.c.l.b16 %v1224
        %v1240 = vpack.c.b16 %v1237, %v1236
        %v1241 = vpack.c.b16 %v1239, %v1238
        %1244 = vmatprep.subr.bf16.mxu0 0
        %1245 = vmatpush1.bf16.msra.mxu0 0
        %1246 = vmatprep.subr.bf16.mxu0 0
        %1247 = vmatpush1.bf16.msra.mxu0 0
        %1248 = vmatprep.subr.bf16.mxu0 0
        %1249 = vmatpush1.bf16.msra.mxu0 0
        %1250 = vmatprep.subr.bf16.mxu0 0
        %1251 = vmatpush1.bf16.msra.mxu0 0
        %1252 = vmatprep.subr.bf16.mxu0 0
        %1253 = vmatpush1.bf16.msra.mxu0 0
        %1254 = vmatprep.subr.bf16.mxu0 0
        %1255 = vmatpush1.bf16.msra.mxu0 0
        %1256 = vmatprep.subr.bf16.mxu0 0
        %1257 = vmatpush1.bf16.msra.mxu0 %v1241
        %1258 = vmatprep.subr.bf16.mxu0 0
        %1259 = vmatpush1.bf16.msra.mxu0 %v1240
        %1260 = vmatprep.subr.bf16.mxu0 0
        %1261 = vmatpush2.bf16.msra.mxu0 0
        %1262 = vmatprep.subr.bf16.mxu0 0
        %1263 = vmatpush2.bf16.msra.mxu0 0
        %1264 = vmatprep.subr.bf16.mxu0 0
        %1265 = vmatpush2.bf16.msra.mxu0 0
        %1266 = vmatprep.subr.bf16.mxu0 0
        %1267 = vmatpush2.bf16.msra.mxu0 0
        %1268 = vmatprep.subr.bf16.mxu0 0
        %1269 = vmatpush2.bf16.msra.mxu0 0
        %1270 = vmatprep.subr.bf16.mxu0 0
        %1271 = vmatpush2.bf16.msra.mxu0 0
        %1272 = vmatprep.subr.bf16.mxu0 0
        %1273 = vmatpush2.bf16.msra.mxu0 0
        %1274 = vmatprep.subr.bf16.mxu0 0
        %1275 = vmatpush2.bf16.msra.mxu0 0
        %1276 = vmatprep.mubr.bf16.mxu0 0
        %1277 = vmatmul.mubr.bf16.gmra.mxu0 %v1177
        %v1278 = vpop.f32.mrf.mxu0
        %v1279 = vadd.f32 %v1230, %v1278
        %v1280 = vpop.f32.mrf.mxu0
        %v1281 = vpop.f32.mrf.mxu0
        %v1282 = vpop.f32.mrf.mxu0
        %1283 = vdwg.mxu0
        %v1284 = vpack.c.bf16 %v1279, %v1279
        %v1285 = vld [vmem:[#allocation9] sm:$0xf]
        %v1286 = vld [vmem:[#allocation9 + $0x4] sm:$0xf]
        %v1287 = vld [vmem:[#allocation9 + $0x8] sm:$0xf]
        %v1288 = vld [vmem:[#allocation9 + $0xc] sm:$0xf]
        %v1289 = vld [vmem:[#allocation12] sm:$0x1]
        %v1291 = vlaneseq
        %v1292 = vshrl.u32 %v1291, 7
        %v1293 = vsub.s32 0, %v1292
        %v1294 = vrot.slane %v1289, %v1293
        %v1300 = vunpack.c.l.b16 %v1285
        %v1301 = vunpack.c.l.b16 %v1286
        %v1302 = vunpack.c.l.b16 %v1287
        %v1303 = vunpack.c.l.b16 %v1288
        %v1304 = vpack.c.b16 %v1301, %v1300
        %v1305 = vpack.c.b16 %v1303, %v1302
        %1308 = vmatprep.subr.bf16.mxu0 0
        %1309 = vmatpush1.bf16.msra.mxu0 0
        %1310 = vmatprep.subr.bf16.mxu0 0
        %1311 = vmatpush1.bf16.msra.mxu0 0
        %1312 = vmatprep.subr.bf16.mxu0 0
        %1313 = vmatpush1.bf16.msra.mxu0 0
        %1314 = vmatprep.subr.bf16.mxu0 0
        %1315 = vmatpush1.bf16.msra.mxu0 0
        %1316 = vmatprep.subr.bf16.mxu0 0
        %1317 = vmatpush1.bf16.msra.mxu0 0
        %1318 = vmatprep.subr.bf16.mxu0 0
        %1319 = vmatpush1.bf16.msra.mxu0 0
        %1320 = vmatprep.subr.bf16.mxu0 0
        %1321 = vmatpush1.bf16.msra.mxu0 %v1305
        %1322 = vmatprep.subr.bf16.mxu0 0
        %1323 = vmatpush1.bf16.msra.mxu0 %v1304
        %1324 = vmatprep.subr.bf16.mxu0 0
        %1325 = vmatpush2.bf16.msra.mxu0 0
        %1326 = vmatprep.subr.bf16.mxu0 0
        %1327 = vmatpush2.bf16.msra.mxu0 0
        %1328 = vmatprep.subr.bf16.mxu0 0
        %1329 = vmatpush2.bf16.msra.mxu0 0
        %1330 = vmatprep.subr.bf16.mxu0 0
        %1331 = vmatpush2.bf16.msra.mxu0 0
        %1332 = vmatprep.subr.bf16.mxu0 0
        %1333 = vmatpush2.bf16.msra.mxu0 0
        %1334 = vmatprep.subr.bf16.mxu0 0
        %1335 = vmatpush2.bf16.msra.mxu0 0
        %1336 = vmatprep.subr.bf16.mxu0 0
        %1337 = vmatpush2.bf16.msra.mxu0 0
        %1338 = vmatprep.subr.bf16.mxu0 0
        %1339 = vmatpush2.bf16.msra.mxu0 0
        %1340 = vmatprep.mubr.bf16.mxu0 0
        %1341 = vmatmul.mubr.bf16.gmra.mxu0 %v1177
        %v1342 = vpop.f32.mrf.mxu0
        %v1343 = vadd.f32 %v1294, %v1342
        %v1344 = vpop.f32.mrf.mxu0
        %v1345 = vpop.f32.mrf.mxu0
        %v1346 = vpop.f32.mrf.mxu0
        %1347 = vdwg.mxu0
        %v1348 = vpack.c.bf16 %v1343, %v1343
        %v1349 = vld [vmem:[#allocation4] sm:$0xf]
        %v1350 = vunpack.c.l.bf16 %v1349
        %vm1351 = vcmask 64512
        %v1353 = vsel %vm1351, %v1220, 0
        %v1356 = vsel %vm1351, %v1284, 0
        %1358 = vmatprep.subr.bf16.mxu0 0
        %1359 = vmatpush1.bf16.xpose.msra.mxu0 0
        %1360 = vmatprep.subr.bf16.mxu0 0
        %1361 = vmatpush1.bf16.xpose.msra.mxu0 0
        %1362 = vmatprep.subr.bf16.mxu0 0
        %1363 = vmatpush1.bf16.xpose.msra.mxu0 0
        %1364 = vmatprep.subr.bf16.mxu0 0
        %1365 = vmatpush1.bf16.xpose.msra.mxu0 0
        %1366 = vmatprep.subr.bf16.mxu0 0
        %1367 = vmatpush1.bf16.xpose.msra.mxu0 0
        %1368 = vmatprep.subr.bf16.mxu0 0
        %1369 = vmatpush1.bf16.xpose.msra.mxu0 0
        %1370 = vmatprep.subr.bf16.mxu0 0
        %1371 = vmatpush1.bf16.xpose.msra.mxu0 0
        %1372 = vmatprep.subr.bf16.mxu0 0
        %1373 = vmatpush1.bf16.xpose.msra.mxu0 %v1356
        %1374 = vmatprep.subr.bf16.mxu0 0
        %1375 = vmatpush2.bf16.xpose.msra.mxu0 0
        %1376 = vmatprep.subr.bf16.mxu0 0
        %1377 = vmatpush2.bf16.xpose.msra.mxu0 0
        %1378 = vmatprep.subr.bf16.mxu0 0
        %1379 = vmatpush2.bf16.xpose.msra.mxu0 0
        %1380 = vmatprep.subr.bf16.mxu0 0
        %1381 = vmatpush2.bf16.xpose.msra.mxu0 0
        %1382 = vmatprep.subr.bf16.mxu0 0
        %1383 = vmatpush2.bf16.xpose.msra.mxu0 0
        %1384 = vmatprep.subr.bf16.mxu0 0
        %1385 = vmatpush2.bf16.xpose.msra.mxu0 0
        %1386 = vmatprep.subr.bf16.mxu0 0
        %1387 = vmatpush2.bf16.xpose.msra.mxu0 0
        %1388 = vmatprep.subr.bf16.mxu0 0
        %1389 = vmatpush2.bf16.xpose.msra.mxu0 0
        %1390 = vmatprep.mubr.bf16.mxu0 0
        %1391 = vmatmul.mubr.bf16.gmra.mxu0 %v1353
        %v1392 = vpop.f32.mrf.mxu0
        %v1393 = vadd.f32 %v1350, %v1392
        %v1394 = vpop.f32.mrf.mxu0
        %v1395 = vpop.f32.mrf.mxu0
        %v1396 = vpop.f32.mrf.mxu0
        %1397 = vdwg.mxu0
        %v1398 = vsel %vm1351, %v1393, -inf
        %1399 = vmax.xlane.f32.xlu0 %v1398
        %v1400 = vpop.xlane.xlu0 %1399
        %v1401 = vsub.f32 %v1393, %v1400
        %v1402 = vmul.f32 %v1401, 1.442695
        %v1403 = vpow.pop %v1402
        %v1404 = vsel %vm1351, %v1403, 0.0
        %1405 = vadd.xlane.f32.xlu0 %v1404
        %v1406 = vpop.xlane.xlu0 %1405
        %v1407 = vpack.c.bf16 %v1403, %v1403
        %v1409 = vsel %vm1351, %v1407, 0
        %vm1411 = vcmask 1043456
        %v1413 = vsel %vm1411, %v1348, 0
        %1415 = vmatprep.subr.bf16.mxu0 0
        %1416 = vmatpush1.bf16.msra.mxu0 0
        %1417 = vmatprep.subr.bf16.mxu0 0
        %1418 = vmatpush1.bf16.msra.mxu0 0
        %1419 = vmatprep.subr.bf16.mxu0 0
        %1420 = vmatpush1.bf16.msra.mxu0 0
        %1421 = vmatprep.subr.bf16.mxu0 0
        %1422 = vmatpush1.bf16.msra.mxu0 0
        %1423 = vmatprep.subr.bf16.mxu0 0
        %1424 = vmatpush1.bf16.msra.mxu0 0
        %1425 = vmatprep.subr.bf16.mxu0 0
        %1426 = vmatpush1.bf16.msra.mxu0 0
        %1427 = vmatprep.subr.bf16.mxu0 0
        %1428 = vmatpush1.bf16.msra.mxu0 0
        %1429 = vmatprep.subr.bf16.mxu0 0
        %1430 = vmatpush1.bf16.msra.mxu0 %v1413
        %1431 = vmatprep.subr.bf16.mxu0 0
        %1432 = vmatpush2.bf16.msra.mxu0 0
        %1433 = vmatprep.subr.bf16.mxu0 0
        %1434 = vmatpush2.bf16.msra.mxu0 0
        %1435 = vmatprep.subr.bf16.mxu0 0
        %1436 = vmatpush2.bf16.msra.mxu0 0
        %1437 = vmatprep.subr.bf16.mxu0 0
        %1438 = vmatpush2.bf16.msra.mxu0 0
        %1439 = vmatprep.subr.bf16.mxu0 0
        %1440 = vmatpush2.bf16.msra.mxu0 0
        %1441 = vmatprep.subr.bf16.mxu0 0
        %1442 = vmatpush2.bf16.msra.mxu0 0
        %1443 = vmatprep.subr.bf16.mxu0 0
        %1444 = vmatpush2.bf16.msra.mxu0 0
        %1445 = vmatprep.subr.bf16.mxu0 0
        %1446 = vmatpush2.bf16.msra.mxu0 0
        %1447 = vmatprep.mubr.bf16.mxu0 0
        %1448 = vmatmul.mubr.bf16.gmra.mxu0 %v1409
        %v1449 = vpop.f32.mrf.mxu0
        %v1450 = vadd.f32 0.0, %v1449
        %v1451 = vpop.f32.mrf.mxu0
        %v1452 = vpop.f32.mrf.mxu0
        %v1453 = vpop.f32.mrf.mxu0
        %1454 = vdwg.mxu0
        %v1455 = vrcp.pop %v1406
        %v1456 = vmul.f32 %v1450, %v1455
        %1457 = vst.msk [vmem:[#allocation2] sm:$0xff] %vm1351, %v1456
        %1459 = vrot.lane.b32.xlu0 %v1220, 120
        %v1460 = vpop.permute.xlu0 %1459
        %1462 = vrot.lane.b32.xlu0 %v1284, 120
        %v1463 = vpop.permute.xlu0 %1462
        %v1465 = vsel %vm1351, %v1460, 0
        %v1468 = vsel %vm1351, %v1463, 0
        %1470 = vmatprep.subr.bf16.mxu0 0
        %1471 = vmatpush1.bf16.xpose.msra.mxu0 0
        %1472 = vmatprep.subr.bf16.mxu0 0
        %1473 = vmatpush1.bf16.xpose.msra.mxu0 0
        %1474 = vmatprep.subr.bf16.mxu0 0
        %1475 = vmatpush1.bf16.xpose.msra.mxu0 0
        %1476 = vmatprep.subr.bf16.mxu0 0
        %1477 = vmatpush1.bf16.xpose.msra.mxu0 0
        %1478 = vmatprep.subr.bf16.mxu0 0
        %1479 = vmatpush1.bf16.xpose.msra.mxu0 0
        %1480 = vmatprep.subr.bf16.mxu0 0
        %1481 = vmatpush1.bf16.xpose.msra.mxu0 0
        %1482 = vmatprep.subr.bf16.mxu0 0
        %1483 = vmatpush1.bf16.xpose.msra.mxu0 0
        %1484 = vmatprep.subr.bf16.mxu0 0
        %1485 = vmatpush1.bf16.xpose.msra.mxu0 %v1468
        %1486 = vmatprep.subr.bf16.mxu0 0
        %1487 = vmatpush2.bf16.xpose.msra.mxu0 0
        %1488 = vmatprep.subr.bf16.mxu0 0
        %1489 = vmatpush2.bf16.xpose.msra.mxu0 0
        %1490 = vmatprep.subr.bf16.mxu0 0
        %1491 = vmatpush2.bf16.xpose.msra.mxu0 0
        %1492 = vmatprep.subr.bf16.mxu0 0
        %1493 = vmatpush2.bf16.xpose.msra.mxu0 0
        %1494 = vmatprep.subr.bf16.mxu0 0
        %1495 = vmatpush2.bf16.xpose.msra.mxu0 0
        %1496 = vmatprep.subr.bf16.mxu0 0
        %1497 = vmatpush2.bf16.xpose.msra.mxu0 0
        %1498 = vmatprep.subr.bf16.mxu0 0
        %1499 = vmatpush2.bf16.xpose.msra.mxu0 0
        %1500 = vmatprep.subr.bf16.mxu0 0
        %1501 = vmatpush2.bf16.xpose.msra.mxu0 0
        %1502 = vmatprep.mubr.bf16.mxu0 0
        %1503 = vmatmul.mubr.bf16.gmra.mxu0 %v1465
        %v1504 = vpop.f32.mrf.mxu0
        %v1505 = vadd.f32 %v1350, %v1504
        %v1506 = vpop.f32.mrf.mxu0
        %v1507 = vpop.f32.mrf.mxu0
        %v1508 = vpop.f32.mrf.mxu0
        %1509 = vdwg.mxu0
        %v1510 = vsel %vm1351, %v1505, -inf
        %1511 = vmax.xlane.f32.xlu0 %v1510
        %v1512 = vpop.xlane.xlu0 %1511
        %v1513 = vsub.f32 %v1505, %v1512
        %v1514 = vmul.f32 %v1513, 1.442695
        %v1515 = vpow.pop %v1514
        %v1516 = vsel %vm1351, %v1515, 0.0
        %1517 = vadd.xlane.f32.xlu0 %v1516
        %v1518 = vpop.xlane.xlu0 %1517
        %v1519 = vpack.c.bf16 %v1515, %v1515
        %1521 = vrot.lane.b32.xlu0 %v1348, 120
        %v1522 = vpop.permute.xlu0 %1521
        %v1524 = vsel %vm1351, %v1519, 0
        %v1527 = vsel %vm1411, %v1522, 0
        %1529 = vmatprep.subr.bf16.mxu0 0
        %1530 = vmatpush1.bf16.msra.mxu0 0
        %1531 = vmatprep.subr.bf16.mxu0 0
        %1532 = vmatpush1.bf16.msra.mxu0 0
        %1533 = vmatprep.subr.bf16.mxu0 0
        %1534 = vmatpush1.bf16.msra.mxu0 0
        %1535 = vmatprep.subr.bf16.mxu0 0
        %1536 = vmatpush1.bf16.msra.mxu0 0
        %1537 = vmatprep.subr.bf16.mxu0 0
        %1538 = vmatpush1.bf16.msra.mxu0 0
        %1539 = vmatprep.subr.bf16.mxu0 0
        %1540 = vmatpush1.bf16.msra.mxu0 0
        %1541 = vmatprep.subr.bf16.mxu0 0
        %1542 = vmatpush1.bf16.msra.mxu0 0
        %1543 = vmatprep.subr.bf16.mxu0 0
        %1544 = vmatpush1.bf16.msra.mxu0 %v1527
        %1545 = vmatprep.subr.bf16.mxu0 0
        %1546 = vmatpush2.bf16.msra.mxu0 0
        %1547 = vmatprep.subr.bf16.mxu0 0
        %1548 = vmatpush2.bf16.msra.mxu0 0
        %1549 = vmatprep.subr.bf16.mxu0 0
        %1550 = vmatpush2.bf16.msra.mxu0 0
        %1551 = vmatprep.subr.bf16.mxu0 0
        %1552 = vmatpush2.bf16.msra.mxu0 0
        %1553 = vmatprep.subr.bf16.mxu0 0
        %1554 = vmatpush2.bf16.msra.mxu0 0
        %1555 = vmatprep.subr.bf16.mxu0 0
        %1556 = vmatpush2.bf16.msra.mxu0 0
        %1557 = vmatprep.subr.bf16.mxu0 0
        %1558 = vmatpush2.bf16.msra.mxu0 0
        %1559 = vmatprep.subr.bf16.mxu0 0
        %1560 = vmatpush2.bf16.msra.mxu0 0
        %1561 = vmatprep.mubr.bf16.mxu0 0
        %1562 = vmatmul.mubr.bf16.gmra.mxu0 %v1524
        %v1563 = vpop.f32.mrf.mxu0
        %v1564 = vadd.f32 0.0, %v1563
        %v1565 = vpop.f32.mrf.mxu0
        %v1566 = vpop.f32.mrf.mxu0
        %v1567 = vpop.f32.mrf.mxu0
        %1568 = vdwg.mxu0
        %v1569 = vrcp.pop %v1518
        %v1570 = vmul.f32 %v1564, %v1569
        %1572 = vrot.lane.b32.xlu0 %v1570, 8
        %v1573 = vpop.permute.xlu0 %1572
        %vm1575 = vcmask 130112
        %1576 = vst.msk [vmem:[#allocation2] sm:$0xff] %vm1575, %v1573
        %1577 = vrot.lane.b32.xlu0 %v1220, 112
        %v1578 = vpop.permute.xlu0 %1577
        %1579 = vrot.lane.b32.xlu0 %v1284, 112
        %v1580 = vpop.permute.xlu0 %1579
        %v1582 = vsel %vm1351, %v1578, 0
        %v1585 = vsel %vm1351, %v1580, 0
        %1587 = vmatprep.subr.bf16.mxu0 0
        %1588 = vmatpush1.bf16.xpose.msra.mxu0 0
        %1589 = vmatprep.subr.bf16.mxu0 0
        %1590 = vmatpush1.bf16.xpose.msra.mxu0 0
        %1591 = vmatprep.subr.bf16.mxu0 0
        %1592 = vmatpush1.bf16.xpose.msra.mxu0 0
        %1593 = vmatprep.subr.bf16.mxu0 0
        %1594 = vmatpush1.bf16.xpose.msra.mxu0 0
        %1595 = vmatprep.subr.bf16.mxu0 0
        %1596 = vmatpush1.bf16.xpose.msra.mxu0 0
        %1597 = vmatprep.subr.bf16.mxu0 0
        %1598 = vmatpush1.bf16.xpose.msra.mxu0 0
        %1599 = vmatprep.subr.bf16.mxu0 0
        %1600 = vmatpush1.bf16.xpose.msra.mxu0 0
        %1601 = vmatprep.subr.bf16.mxu0 0
        %1602 = vmatpush1.bf16.xpose.msra.mxu0 %v1585
        %1603 = vmatprep.subr.bf16.mxu0 0
        %1604 = vmatpush2.bf16.xpose.msra.mxu0 0
        %1605 = vmatprep.subr.bf16.mxu0 0
        %1606 = vmatpush2.bf16.xpose.msra.mxu0 0
        %1607 = vmatprep.subr.bf16.mxu0 0
        %1608 = vmatpush2.bf16.xpose.msra.mxu0 0
        %1609 = vmatprep.subr.bf16.mxu0 0
        %1610 = vmatpush2.bf16.xpose.msra.mxu0 0
        %1611 = vmatprep.subr.bf16.mxu0 0
        %1612 = vmatpush2.bf16.xpose.msra.mxu0 0
        %1613 = vmatprep.subr.bf16.mxu0 0
        %1614 = vmatpush2.bf16.xpose.msra.mxu0 0
        %1615 = vmatprep.subr.bf16.mxu0 0
        %1616 = vmatpush2.bf16.xpose.msra.mxu0 0
        %1617 = vmatprep.subr.bf16.mxu0 0
        %1618 = vmatpush2.bf16.xpose.msra.mxu0 0
        %1619 = vmatprep.mubr.bf16.mxu0 0
        %1620 = vmatmul.mubr.bf16.gmra.mxu0 %v1582
        %v1621 = vpop.f32.mrf.mxu0
        %v1622 = vadd.f32 %v1350, %v1621
        %v1623 = vpop.f32.mrf.mxu0
        %v1624 = vpop.f32.mrf.mxu0
        %v1625 = vpop.f32.mrf.mxu0
        %1626 = vdwg.mxu0
        %v1627 = vsel %vm1351, %v1622, -inf
        %1628 = vmax.xlane.f32.xlu0 %v1627
        %v1629 = vpop.xlane.xlu0 %1628
        %v1630 = vsub.f32 %v1622, %v1629
        %v1631 = vmul.f32 %v1630, 1.442695
        %v1632 = vpow.pop %v1631
        %v1633 = vsel %vm1351, %v1632, 0.0
        %1634 = vadd.xlane.f32.xlu0 %v1633
        %v1635 = vpop.xlane.xlu0 %1634
        %v1636 = vpack.c.bf16 %v1632, %v1632
        %1637 = vrot.lane.b32.xlu0 %v1348, 112
        %v1638 = vpop.permute.xlu0 %1637
        %v1640 = vsel %vm1351, %v1636, 0
        %v1643 = vsel %vm1411, %v1638, 0
        %1645 = vmatprep.subr.bf16.mxu0 0
        %1646 = vmatpush1.bf16.msra.mxu0 0
        %1647 = vmatprep.subr.bf16.mxu0 0
        %1648 = vmatpush1.bf16.msra.mxu0 0
        %1649 = vmatprep.subr.bf16.mxu0 0
        %1650 = vmatpush1.bf16.msra.mxu0 0
        %1651 = vmatprep.subr.bf16.mxu0 0
        %1652 = vmatpush1.bf16.msra.mxu0 0
        %1653 = vmatprep.subr.bf16.mxu0 0
        %1654 = vmatpush1.bf16.msra.mxu0 0
        %1655 = vmatprep.subr.bf16.mxu0 0
        %1656 = vmatpush1.bf16.msra.mxu0 0
        %1657 = vmatprep.subr.bf16.mxu0 0
        %1658 = vmatpush1.bf16.msra.mxu0 0
        %1659 = vmatprep.subr.bf16.mxu0 0
        %1660 = vmatpush1.bf16.msra.mxu0 %v1643
        %1661 = vmatprep.subr.bf16.mxu0 0
        %1662 = vmatpush2.bf16.msra.mxu0 0
        %1663 = vmatprep.subr.bf16.mxu0 0
        %1664 = vmatpush2.bf16.msra.mxu0 0
        %1665 = vmatprep.subr.bf16.mxu0 0
        %1666 = vmatpush2.bf16.msra.mxu0 0
        %1667 = vmatprep.subr.bf16.mxu0 0
        %1668 = vmatpush2.bf16.msra.mxu0 0
        %1669 = vmatprep.subr.bf16.mxu0 0
        %1670 = vmatpush2.bf16.msra.mxu0 0
        %1671 = vmatprep.subr.bf16.mxu0 0
        %1672 = vmatpush2.bf16.msra.mxu0 0
        %1673 = vmatprep.subr.bf16.mxu0 0
        %1674 = vmatpush2.bf16.msra.mxu0 0
        %1675 = vmatprep.subr.bf16.mxu0 0
        %1676 = vmatpush2.bf16.msra.mxu0 0
        %1677 = vmatprep.mubr.bf16.mxu0 0
        %1678 = vmatmul.mubr.bf16.gmra.mxu0 %v1640
        %v1679 = vpop.f32.mrf.mxu0
        %v1680 = vadd.f32 0.0, %v1679
        %v1681 = vpop.f32.mrf.mxu0
        %v1682 = vpop.f32.mrf.mxu0
        %v1683 = vpop.f32.mrf.mxu0
        %1684 = vdwg.mxu0
        %v1685 = vrcp.pop %v1635
        %v1686 = vmul.f32 %v1680, %v1685
        %1688 = vrot.lane.b32.xlu0 %v1686, 16
        %v1689 = vpop.permute.xlu0 %1688
        %vm1691 = vcmask 195712
        %1692 = vst.msk [vmem:[#allocation2] sm:$0xff] %vm1691, %v1689
        %1693 = vrot.lane.b32.xlu0 %v1220, 104
        %v1694 = vpop.permute.xlu0 %1693
        %1695 = vrot.lane.b32.xlu0 %v1284, 104
        %v1696 = vpop.permute.xlu0 %1695
        %v1698 = vsel %vm1351, %v1694, 0
        %v1701 = vsel %vm1351, %v1696, 0
        %1703 = vmatprep.subr.bf16.mxu0 0
        %1704 = vmatpush1.bf16.xpose.msra.mxu0 0
        %1705 = vmatprep.subr.bf16.mxu0 0
        %1706 = vmatpush1.bf16.xpose.msra.mxu0 0
        %1707 = vmatprep.subr.bf16.mxu0 0
        %1708 = vmatpush1.bf16.xpose.msra.mxu0 0
        %1709 = vmatprep.subr.bf16.mxu0 0
        %1710 = vmatpush1.bf16.xpose.msra.mxu0 0
        %1711 = vmatprep.subr.bf16.mxu0 0
        %1712 = vmatpush1.bf16.xpose.msra.mxu0 0
        %1713 = vmatprep.subr.bf16.mxu0 0
        %1714 = vmatpush1.bf16.xpose.msra.mxu0 0
        %1715 = vmatprep.subr.bf16.mxu0 0
        %1716 = vmatpush1.bf16.xpose.msra.mxu0 0
        %1717 = vmatprep.subr.bf16.mxu0 0
        %1718 = vmatpush1.bf16.xpose.msra.mxu0 %v1701
        %1719 = vmatprep.subr.bf16.mxu0 0
        %1720 = vmatpush2.bf16.xpose.msra.mxu0 0
        %1721 = vmatprep.subr.bf16.mxu0 0
        %1722 = vmatpush2.bf16.xpose.msra.mxu0 0
        %1723 = vmatprep.subr.bf16.mxu0 0
        %1724 = vmatpush2.bf16.xpose.msra.mxu0 0
        %1725 = vmatprep.subr.bf16.mxu0 0
        %1726 = vmatpush2.bf16.xpose.msra.mxu0 0
        %1727 = vmatprep.subr.bf16.mxu0 0
        %1728 = vmatpush2.bf16.xpose.msra.mxu0 0
        %1729 = vmatprep.subr.bf16.mxu0 0
        %1730 = vmatpush2.bf16.xpose.msra.mxu0 0
        %1731 = vmatprep.subr.bf16.mxu0 0
        %1732 = vmatpush2.bf16.xpose.msra.mxu0 0
        %1733 = vmatprep.subr.bf16.mxu0 0
        %1734 = vmatpush2.bf16.xpose.msra.mxu0 0
        %1735 = vmatprep.mubr.bf16.mxu0 0
        %1736 = vmatmul.mubr.bf16.gmra.mxu0 %v1698
        %v1737 = vpop.f32.mrf.mxu0
        %v1738 = vadd.f32 %v1350, %v1737
        %v1739 = vpop.f32.mrf.mxu0
        %v1740 = vpop.f32.mrf.mxu0
        %v1741 = vpop.f32.mrf.mxu0
        %1742 = vdwg.mxu0
        %v1743 = vsel %vm1351, %v1738, -inf
        %1744 = vmax.xlane.f32.xlu0 %v1743
        %v1745 = vpop.xlane.xlu0 %1744
        %v1746 = vsub.f32 %v1738, %v1745
        %v1747 = vmul.f32 %v1746, 1.442695
        %v1748 = vpow.pop %v1747
        %v1749 = vsel %vm1351, %v1748, 0.0
        %1750 = vadd.xlane.f32.xlu0 %v1749
        %v1751 = vpop.xlane.xlu0 %1750
        %v1752 = vpack.c.bf16 %v1748, %v1748
        %1753 = vrot.lane.b32.xlu0 %v1348, 104
        %v1754 = vpop.permute.xlu0 %1753
        %v1756 = vsel %vm1351, %v1752, 0
        %v1759 = vsel %vm1411, %v1754, 0
        %1761 = vmatprep.subr.bf16.mxu0 0
        %1762 = vmatpush1.bf16.msra.mxu0 0
        %1763 = vmatprep.subr.bf16.mxu0 0
        %1764 = vmatpush1.bf16.msra.mxu0 0
        %1765 = vmatprep.subr.bf16.mxu0 0
        %1766 = vmatpush1.bf16.msra.mxu0 0
        %1767 = vmatprep.subr.bf16.mxu0 0
        %1768 = vmatpush1.bf16.msra.mxu0 0
        %1769 = vmatprep.subr.bf16.mxu0 0
        %1770 = vmatpush1.bf16.msra.mxu0 0
        %1771 = vmatprep.subr.bf16.mxu0 0
        %1772 = vmatpush1.bf16.msra.mxu0 0
        %1773 = vmatprep.subr.bf16.mxu0 0
        %1774 = vmatpush1.bf16.msra.mxu0 0
        %1775 = vmatprep.subr.bf16.mxu0 0
        %1776 = vmatpush1.bf16.msra.mxu0 %v1759
        %1777 = vmatprep.subr.bf16.mxu0 0
        %1778 = vmatpush2.bf16.msra.mxu0 0
        %1779 = vmatprep.subr.bf16.mxu0 0
        %1780 = vmatpush2.bf16.msra.mxu0 0
        %1781 = vmatprep.subr.bf16.mxu0 0
        %1782 = vmatpush2.bf16.msra.mxu0 0
        %1783 = vmatprep.subr.bf16.mxu0 0
        %1784 = vmatpush2.bf16.msra.mxu0 0
        %1785 = vmatprep.subr.bf16.mxu0 0
        %1786 = vmatpush2.bf16.msra.mxu0 0
        %1787 = vmatprep.subr.bf16.mxu0 0
        %1788 = vmatpush2.bf16.msra.mxu0 0
        %1789 = vmatprep.subr.bf16.mxu0 0
        %1790 = vmatpush2.bf16.msra.mxu0 0
        %1791 = vmatprep.subr.bf16.mxu0 0
        %1792 = vmatpush2.bf16.msra.mxu0 0
        %1793 = vmatprep.mubr.bf16.mxu0 0
        %1794 = vmatmul.mubr.bf16.gmra.mxu0 %v1756
        %v1795 = vpop.f32.mrf.mxu0
        %v1796 = vadd.f32 0.0, %v1795
        %v1797 = vpop.f32.mrf.mxu0
        %v1798 = vpop.f32.mrf.mxu0
        %v1799 = vpop.f32.mrf.mxu0
        %1800 = vdwg.mxu0
        %v1801 = vrcp.pop %v1751
        %v1802 = vmul.f32 %v1796, %v1801
        %1804 = vrot.lane.b32.xlu0 %v1802, 24
        %v1805 = vpop.permute.xlu0 %1804
        %vm1807 = vcmask 261312
        %1808 = vst.msk [vmem:[#allocation2] sm:$0xff] %vm1807, %v1805
        %v1809 = vld [vmem:[#allocation2] sm:$0xff]
        %v1810 = vpack.c.bf16 %v1809, %v1809
        %v1811 = vld [vmem:[#allocation13] sm:$0xf]
        %v1812 = vld [vmem:[#allocation13 + $0x4] sm:$0xf]
        %v1813 = vld [vmem:[#allocation13 + $0x8] sm:$0xf]
        %v1814 = vld [vmem:[#allocation13 + $0xc] sm:$0xf]
        %v1815 = vld [vmem:[#allocation15] sm:$0x1]
        %v1817 = vlaneseq
        %v1818 = vshrl.u32 %v1817, 7
        %v1819 = vsub.s32 0, %v1818
        %v1820 = vrot.slane %v1815, %v1819
        %v1826 = vunpack.c.l.b16 %v1811
        %v1827 = vunpack.c.l.b16 %v1812
        %v1828 = vunpack.c.l.b16 %v1813
        %v1829 = vunpack.c.l.b16 %v1814
        %v1830 = vpack.c.b16 %v1827, %v1826
        %v1831 = vpack.c.b16 %v1829, %v1828
        %v1835 = vsel %vm1175, %v1810, 0
        %1837 = vmatprep.subr.bf16.mxu0 0
        %1838 = vmatpush1.bf16.msra.mxu0 0
        %1839 = vmatprep.subr.bf16.mxu0 0
        %1840 = vmatpush1.bf16.msra.mxu0 0
        %1841 = vmatprep.subr.bf16.mxu0 0
        %1842 = vmatpush1.bf16.msra.mxu0 0
        %1843 = vmatprep.subr.bf16.mxu0 0
        %1844 = vmatpush1.bf16.msra.mxu0 0
        %1845 = vmatprep.subr.bf16.mxu0 0
        %1846 = vmatpush1.bf16.msra.mxu0 0
        %1847 = vmatprep.subr.bf16.mxu0 0
        %1848 = vmatpush1.bf16.msra.mxu0 0
        %1849 = vmatprep.subr.bf16.mxu0 0
        %1850 = vmatpush1.bf16.msra.mxu0 %v1831
        %1851 = vmatprep.subr.bf16.mxu0 0
        %1852 = vmatpush1.bf16.msra.mxu0 %v1830
        %1853 = vmatprep.subr.bf16.mxu0 0
        %1854 = vmatpush2.bf16.msra.mxu0 0
        %1855 = vmatprep.subr.bf16.mxu0 0
        %1856 = vmatpush2.bf16.msra.mxu0 0
        %1857 = vmatprep.subr.bf16.mxu0 0
        %1858 = vmatpush2.bf16.msra.mxu0 0
        %1859 = vmatprep.subr.bf16.mxu0 0
        %1860 = vmatpush2.bf16.msra.mxu0 0
        %1861 = vmatprep.subr.bf16.mxu0 0
        %1862 = vmatpush2.bf16.msra.mxu0 0
        %1863 = vmatprep.subr.bf16.mxu0 0
        %1864 = vmatpush2.bf16.msra.mxu0 0
        %1865 = vmatprep.subr.bf16.mxu0 0
        %1866 = vmatpush2.bf16.msra.mxu0 0
        %1867 = vmatprep.subr.bf16.mxu0 0
        %1868 = vmatpush2.bf16.msra.mxu0 0
        %1869 = vmatprep.mubr.bf16.mxu0 0
        %1870 = vmatmul.mubr.bf16.gmra.mxu0 %v1835
        %v1871 = vpop.f32.mrf.mxu0
        %v1872 = vadd.f32 %v1820, %v1871
        %v1873 = vpop.f32.mrf.mxu0
        %v1874 = vpop.f32.mrf.mxu0
        %v1875 = vpop.f32.mrf.mxu0
        %1876 = vdwg.mxu0
        %v1877 = vadd.f32 %v1872, %v1150
        %v1878 = vld [vmem:[#allocation16] sm:$0x1]
        %v1879 = vld [vmem:[#allocation18] sm:$0x1]
        %v1880 = vsel %vm1175, %v1877, 0.0
        %1881 = vadd.xlane.f32.xlu0 %v1880
        %v1882 = vpop.xlane.xlu0 %1881
        %v1883 = vrcp.pop 32.0
        %v1884 = vmul.f32 %v1882, %v1883
        %v1885 = vsub.f32 %v1877, %v1884
        %v1886 = vmul.f32 %v1885, %v1885
        %v1887 = vsel %vm1175, %v1886, 0.0
        %1888 = vadd.xlane.f32.xlu0 %v1887
        %v1889 = vpop.xlane.xlu0 %1888
        %v1890 = vmul.f32 %v1889, %v1883
        %v1891 = vadd.f32 %v1890, 1e-05
        %v1892 = vrsqrt.pop %v1891
        %v1893 = vmul.f32 %v1891, %v1892
        %vm1894 = vcmp.eq.f32.partialorder %v1891, inf
        %v1895 = vsel %vm1894, %v1891, %v1893
        %vm1896 = vcmp.eq.f32.partialorder %v1891, 0.0
        %v1897 = vand.u32 %v1891, 2147483648
        %v1898 = vsel %vm1896, %v1897, %v1895
        %v1899 = vrcp.pop %v1898
        %v1900 = vmul.f32 %v1885, %v1899
        %v1902 = vlaneseq
        %v1903 = vshrl.u32 %v1902, 7
        %v1904 = vsub.s32 0, %v1903
        %v1905 = vrot.slane %v1878, %v1904
        %v1907 = vmul.f32 %v1905, %v1900
        %v1909 = vlaneseq
        %v1910 = vshrl.u32 %v1909, 7
        %v1911 = vsub.s32 0, %v1910
        %v1912 = vrot.slane %v1879, %v1911
        %v1914 = vadd.f32 %v1907, %v1912
        %v1915 = vpack.c.bf16 %v1914, %v1914
        %v1916 = vld [vmem:[#allocation19] sm:$0xf]
        %v1917 = vld [vmem:[#allocation19 + $0x4] sm:$0xf]
        %v1918 = vld [vmem:[#allocation19 + $0x8] sm:$0xf]
        %v1919 = vld [vmem:[#allocation19 + $0xc] sm:$0xf]
        %v1920 = vld [vmem:[#allocation22] sm:$0x1]
        %v1922 = vlaneseq
        %v1923 = vshrl.u32 %v1922, 7
        %v1924 = vsub.s32 0, %v1923
        %v1925 = vrot.slane %v1920, %v1924
        %v1931 = vunpack.c.l.b16 %v1916
        %v1932 = vunpack.c.l.b16 %v1917
        %v1933 = vunpack.c.l.b16 %v1918
        %v1934 = vunpack.c.l.b16 %v1919
        %v1935 = vpack.c.b16 %v1932, %v1931
        %v1936 = vpack.c.b16 %v1934, %v1933
        %v1940 = vsel %vm1175, %v1149, 0
        %1942 = vmatprep.subr.bf16.mxu0 0
        %1943 = vmatpush1.bf16.msra.mxu0 0
        %1944 = vmatprep.subr.bf16.mxu0 0
        %1945 = vmatpush1.bf16.msra.mxu0 0
        %1946 = vmatprep.subr.bf16.mxu0 0
        %1947 = vmatpush1.bf16.msra.mxu0 0
        %1948 = vmatprep.subr.bf16.mxu0 0
        %1949 = vmatpush1.bf16.msra.mxu0 0
        %1950 = vmatprep.subr.bf16.mxu0 0
        %1951 = vmatpush1.bf16.msra.mxu0 0
        %1952 = vmatprep.subr.bf16.mxu0 0
        %1953 = vmatpush1.bf16.msra.mxu0 0
        %1954 = vmatprep.subr.bf16.mxu0 0
        %1955 = vmatpush1.bf16.msra.mxu0 %v1936
        %1956 = vmatprep.subr.bf16.mxu0 0
        %1957 = vmatpush1.bf16.msra.mxu0 %v1935
        %1958 = vmatprep.subr.bf16.mxu0 0
        %1959 = vmatpush2.bf16.msra.mxu0 0
        %1960 = vmatprep.subr.bf16.mxu0 0
        %1961 = vmatpush2.bf16.msra.mxu0 0
        %1962 = vmatprep.subr.bf16.mxu0 0
        %1963 = vmatpush2.bf16.msra.mxu0 0
        %1964 = vmatprep.subr.bf16.mxu0 0
        %1965 = vmatpush2.bf16.msra.mxu0 0
        %1966 = vmatprep.subr.bf16.mxu0 0
        %1967 = vmatpush2.bf16.msra.mxu0 0
        %1968 = vmatprep.subr.bf16.mxu0 0
        %1969 = vmatpush2.bf16.msra.mxu0 0
        %1970 = vmatprep.subr.bf16.mxu0 0
        %1971 = vmatpush2.bf16.msra.mxu0 0
        %1972 = vmatprep.subr.bf16.mxu0 0
        %1973 = vmatpush2.bf16.msra.mxu0 0
        %1974 = vmatprep.mubr.bf16.mxu0 0
        %1975 = vmatmul.mubr.bf16.gmra.mxu0 %v1940
        %v1976 = vpop.f32.mrf.mxu0
        %v1977 = vadd.f32 %v1925, %v1976
        %v1978 = vpop.f32.mrf.mxu0
        %v1979 = vpop.f32.mrf.mxu0
        %v1980 = vpop.f32.mrf.mxu0
        %1981 = vdwg.mxu0
        %v1982 = vpack.c.bf16 %v1977, %v1977
        %v1983 = vld [vmem:[#allocation21] sm:$0xf]
        %v1984 = vld [vmem:[#allocation21 + $0x4] sm:$0xf]
        %v1985 = vld [vmem:[#allocation21 + $0x8] sm:$0xf]
        %v1986 = vld [vmem:[#allocation21 + $0xc] sm:$0xf]
        %v1987 = vld [vmem:[#allocation24] sm:$0x1]
        %v1989 = vlaneseq
        %v1990 = vshrl.u32 %v1989, 7
        %v1991 = vsub.s32 0, %v1990
        %v1992 = vrot.slane %v1987, %v1991
        %v1998 = vunpack.c.l.b16 %v1983
        %v1999 = vunpack.c.l.b16 %v1984
        %v2000 = vunpack.c.l.b16 %v1985
        %v2001 = vunpack.c.l.b16 %v1986
        %v2002 = vpack.c.b16 %v1999, %v1998
        %v2003 = vpack.c.b16 %v2001, %v2000
        %2006 = vmatprep.subr.bf16.mxu0 0
        %2007 = vmatpush1.bf16.msra.mxu0 0
        %2008 = vmatprep.subr.bf16.mxu0 0
        %2009 = vmatpush1.bf16.msra.mxu0 0
        %2010 = vmatprep.subr.bf16.mxu0 0
        %2011 = vmatpush1.bf16.msra.mxu0 0
        %2012 = vmatprep.subr.bf16.mxu0 0
        %2013 = vmatpush1.bf16.msra.mxu0 0
        %2014 = vmatprep.subr.bf16.mxu0 0
        %2015 = vmatpush1.bf16.msra.mxu0 0
        %2016 = vmatprep.subr.bf16.mxu0 0
        %2017 = vmatpush1.bf16.msra.mxu0 0
        %2018 = vmatprep.subr.bf16.mxu0 0
        %2019 = vmatpush1.bf16.msra.mxu0 %v2003
        %2020 = vmatprep.subr.bf16.mxu0 0
        %2021 = vmatpush1.bf16.msra.mxu0 %v2002
        %2022 = vmatprep.subr.bf16.mxu0 0
        %2023 = vmatpush2.bf16.msra.mxu0 0
        %2024 = vmatprep.subr.bf16.mxu0 0
        %2025 = vmatpush2.bf16.msra.mxu0 0
        %2026 = vmatprep.subr.bf16.mxu0 0
        %2027 = vmatpush2.bf16.msra.mxu0 0
        %2028 = vmatprep.subr.bf16.mxu0 0
        %2029 = vmatpush2.bf16.msra.mxu0 0
        %2030 = vmatprep.subr.bf16.mxu0 0
        %2031 = vmatpush2.bf16.msra.mxu0 0
        %2032 = vmatprep.subr.bf16.mxu0 0
        %2033 = vmatpush2.bf16.msra.mxu0 0
        %2034 = vmatprep.subr.bf16.mxu0 0
        %2035 = vmatpush2.bf16.msra.mxu0 0
        %2036 = vmatprep.subr.bf16.mxu0 0
        %2037 = vmatpush2.bf16.msra.mxu0 0
        %2038 = vmatprep.mubr.bf16.mxu0 0
        %2039 = vmatmul.mubr.bf16.gmra.mxu0 %v1940
        %v2040 = vpop.f32.mrf.mxu0
        %v2041 = vadd.f32 %v1992, %v2040
        %v2042 = vpop.f32.mrf.mxu0
        %v2043 = vpop.f32.mrf.mxu0
        %v2044 = vpop.f32.mrf.mxu0
        %2045 = vdwg.mxu0
        %v2046 = vpack.c.bf16 %v2041, %v2041
        %v2047 = vld [vmem:[%s37] sm:$0xf]
        %v2048 = vld [vmem:[%s37 + $0x4] sm:$0xf]
        %v2049 = vld [vmem:[%s37 + $0x8] sm:$0xf]
        %v2050 = vld [vmem:[%s37 + $0xc] sm:$0xf]
        %v2051 = vld [vmem:[%s39] sm:$0x1]
        %v2053 = vlaneseq
        %v2054 = vshrl.u32 %v2053, 7
        %v2055 = vsub.s32 0, %v2054
        %v2056 = vrot.slane %v2051, %v2055
        %v2062 = vunpack.c.l.b16 %v2047
        %v2063 = vunpack.c.l.b16 %v2048
        %v2064 = vunpack.c.l.b16 %v2049
        %v2065 = vunpack.c.l.b16 %v2050
        %v2066 = vpack.c.b16 %v2063, %v2062
        %v2067 = vpack.c.b16 %v2065, %v2064
        %v2071 = vsel %vm1175, %v1915, 0
        %2073 = vmatprep.subr.bf16.mxu0 0
        %2074 = vmatpush1.bf16.msra.mxu0 0
        %2075 = vmatprep.subr.bf16.mxu0 0
        %2076 = vmatpush1.bf16.msra.mxu0 0
        %2077 = vmatprep.subr.bf16.mxu0 0
        %2078 = vmatpush1.bf16.msra.mxu0 0
        %2079 = vmatprep.subr.bf16.mxu0 0
        %2080 = vmatpush1.bf16.msra.mxu0 0
        %2081 = vmatprep.subr.bf16.mxu0 0
        %2082 = vmatpush1.bf16.msra.mxu0 0
        %2083 = vmatprep.subr.bf16.mxu0 0
        %2084 = vmatpush1.bf16.msra.mxu0 0
        %2085 = vmatprep.subr.bf16.mxu0 0
        %2086 = vmatpush1.bf16.msra.mxu0 %v2067
        %2087 = vmatprep.subr.bf16.mxu0 0
        %2088 = vmatpush1.bf16.msra.mxu0 %v2066
        %2089 = vmatprep.subr.bf16.mxu0 0
        %2090 = vmatpush2.bf16.msra.mxu0 0
        %2091 = vmatprep.subr.bf16.mxu0 0
        %2092 = vmatpush2.bf16.msra.mxu0 0
        %2093 = vmatprep.subr.bf16.mxu0 0
        %2094 = vmatpush2.bf16.msra.mxu0 0
        %2095 = vmatprep.subr.bf16.mxu0 0
        %2096 = vmatpush2.bf16.msra.mxu0 0
        %2097 = vmatprep.subr.bf16.mxu0 0
        %2098 = vmatpush2.bf16.msra.mxu0 0
        %2099 = vmatprep.subr.bf16.mxu0 0
        %2100 = vmatpush2.bf16.msra.mxu0 0
        %2101 = vmatprep.subr.bf16.mxu0 0
        %2102 = vmatpush2.bf16.msra.mxu0 0
        %2103 = vmatprep.subr.bf16.mxu0 0
        %2104 = vmatpush2.bf16.msra.mxu0 0
        %2105 = vmatprep.mubr.bf16.mxu0 0
        %2106 = vmatmul.mubr.bf16.gmra.mxu0 %v2071
        %v2107 = vpop.f32.mrf.mxu0
        %v2108 = vadd.f32 %v2056, %v2107
        %v2109 = vpop.f32.mrf.mxu0
        %v2110 = vpop.f32.mrf.mxu0
        %v2111 = vpop.f32.mrf.mxu0
        %2112 = vdwg.mxu0
        %v2113 = vmul.f32 %v2108, 0.35355338
        %v2114 = vpack.c.bf16 %v2113, %v2113
        %v2116 = vsel %vm1351, %v2114, 0
        %v2119 = vsel %vm1351, %v1982, 0
        %2121 = vmatprep.subr.bf16.mxu0 0
        %2122 = vmatpush1.bf16.xpose.msra.mxu0 0
        %2123 = vmatprep.subr.bf16.mxu0 0
        %2124 = vmatpush1.bf16.xpose.msra.mxu0 0
        %2125 = vmatprep.subr.bf16.mxu0 0
        %2126 = vmatpush1.bf16.xpose.msra.mxu0 0
        %2127 = vmatprep.subr.bf16.mxu0 0
        %2128 = vmatpush1.bf16.xpose.msra.mxu0 0
        %2129 = vmatprep.subr.bf16.mxu0 0
        %2130 = vmatpush1.bf16.xpose.msra.mxu0 0
        %2131 = vmatprep.subr.bf16.mxu0 0
        %2132 = vmatpush1.bf16.xpose.msra.mxu0 0
        %2133 = vmatprep.subr.bf16.mxu0 0
        %2134 = vmatpush1.bf16.xpose.msra.mxu0 0
        %2135 = vmatprep.subr.bf16.mxu0 0
        %2136 = vmatpush1.bf16.xpose.msra.mxu0 %v2119
        %2137 = vmatprep.subr.bf16.mxu0 0
        %2138 = vmatpush2.bf16.xpose.msra.mxu0 0
        %2139 = vmatprep.subr.bf16.mxu0 0
        %2140 = vmatpush2.bf16.xpose.msra.mxu0 0
        %2141 = vmatprep.subr.bf16.mxu0 0
        %2142 = vmatpush2.bf16.xpose.msra.mxu0 0
        %2143 = vmatprep.subr.bf16.mxu0 0
        %2144 = vmatpush2.bf16.xpose.msra.mxu0 0
        %2145 = vmatprep.subr.bf16.mxu0 0
        %2146 = vmatpush2.bf16.xpose.msra.mxu0 0
        %2147 = vmatprep.subr.bf16.mxu0 0
        %2148 = vmatpush2.bf16.xpose.msra.mxu0 0
        %2149 = vmatprep.subr.bf16.mxu0 0
        %2150 = vmatpush2.bf16.xpose.msra.mxu0 0
        %2151 = vmatprep.subr.bf16.mxu0 0
        %2152 = vmatpush2.bf16.xpose.msra.mxu0 0
        %2153 = vmatprep.mubr.bf16.mxu0 0
        %2154 = vmatmul.mubr.bf16.gmra.mxu0 %v2116
        %v2155 = vpop.f32.mrf.mxu0
        %v2156 = vadd.f32 0.0, %v2155
        %v2157 = vpop.f32.mrf.mxu0
        %v2158 = vpop.f32.mrf.mxu0
        %v2159 = vpop.f32.mrf.mxu0
        %2160 = vdwg.mxu0
        %v2161 = vsel %vm1351, %v2156, -inf
        %2162 = vmax.xlane.f32.xlu0 %v2161
        %v2163 = vpop.xlane.xlu0 %2162
        %v2164 = vsub.f32 %v2156, %v2163
        %v2165 = vmul.f32 %v2164, 1.442695
        %v2166 = vpow.pop %v2165
        %v2167 = vsel %vm1351, %v2166, 0.0
        %2168 = vadd.xlane.f32.xlu0 %v2167
        %v2169 = vpop.xlane.xlu0 %2168
        %v2170 = vpack.c.bf16 %v2166, %v2166
        %v2172 = vsel %vm1351, %v2170, 0
        %v2175 = vsel %vm1411, %v2046, 0
        %2177 = vmatprep.subr.bf16.mxu0 0
        %2178 = vmatpush1.bf16.msra.mxu0 0
        %2179 = vmatprep.subr.bf16.mxu0 0
        %2180 = vmatpush1.bf16.msra.mxu0 0
        %2181 = vmatprep.subr.bf16.mxu0 0
        %2182 = vmatpush1.bf16.msra.mxu0 0
        %2183 = vmatprep.subr.bf16.mxu0 0
        %2184 = vmatpush1.bf16.msra.mxu0 0
        %2185 = vmatprep.subr.bf16.mxu0 0
        %2186 = vmatpush1.bf16.msra.mxu0 0
        %2187 = vmatprep.subr.bf16.mxu0 0
        %2188 = vmatpush1.bf16.msra.mxu0 0
        %2189 = vmatprep.subr.bf16.mxu0 0
        %2190 = vmatpush1.bf16.msra.mxu0 0
        %2191 = vmatprep.subr.bf16.mxu0 0
        %2192 = vmatpush1.bf16.msra.mxu0 %v2175
        %2193 = vmatprep.subr.bf16.mxu0 0
        %2194 = vmatpush2.bf16.msra.mxu0 0
        %2195 = vmatprep.subr.bf16.mxu0 0
        %2196 = vmatpush2.bf16.msra.mxu0 0
        %2197 = vmatprep.subr.bf16.mxu0 0
        %2198 = vmatpush2.bf16.msra.mxu0 0
        %2199 = vmatprep.subr.bf16.mxu0 0
        %2200 = vmatpush2.bf16.msra.mxu0 0
        %2201 = vmatprep.subr.bf16.mxu0 0
        %2202 = vmatpush2.bf16.msra.mxu0 0
        %2203 = vmatprep.subr.bf16.mxu0 0
        %2204 = vmatpush2.bf16.msra.mxu0 0
        %2205 = vmatprep.subr.bf16.mxu0 0
        %2206 = vmatpush2.bf16.msra.mxu0 0
        %2207 = vmatprep.subr.bf16.mxu0 0
        %2208 = vmatpush2.bf16.msra.mxu0 0
        %2209 = vmatprep.mubr.bf16.mxu0 0
        %2210 = vmatmul.mubr.bf16.gmra.mxu0 %v2172
        %v2211 = vpop.f32.mrf.mxu0
        %v2212 = vadd.f32 0.0, %v2211
        %v2213 = vpop.f32.mrf.mxu0
        %v2214 = vpop.f32.mrf.mxu0
        %v2215 = vpop.f32.mrf.mxu0
        %2216 = vdwg.mxu0
        %v2217 = vrcp.pop %v2169
        %v2218 = vmul.f32 %v2212, %v2217
        %2219 = vst.msk [vmem:[#allocation2] sm:$0xff] %vm1351, %v2218
        %2221 = vrot.lane.b32.xlu0 %v2114, 120
        %v2222 = vpop.permute.xlu0 %2221
        %2224 = vrot.lane.b32.xlu0 %v1982, 120
        %v2225 = vpop.permute.xlu0 %2224
        %v2227 = vsel %vm1351, %v2222, 0
        %v2230 = vsel %vm1351, %v2225, 0
        %2232 = vmatprep.subr.bf16.mxu0 0
        %2233 = vmatpush1.bf16.xpose.msra.mxu0 0
        %2234 = vmatprep.subr.bf16.mxu0 0
        %2235 = vmatpush1.bf16.xpose.msra.mxu0 0
        %2236 = vmatprep.subr.bf16.mxu0 0
        %2237 = vmatpush1.bf16.xpose.msra.mxu0 0
        %2238 = vmatprep.subr.bf16.mxu0 0
        %2239 = vmatpush1.bf16.xpose.msra.mxu0 0
        %2240 = vmatprep.subr.bf16.mxu0 0
        %2241 = vmatpush1.bf16.xpose.msra.mxu0 0
        %2242 = vmatprep.subr.bf16.mxu0 0
        %2243 = vmatpush1.bf16.xpose.msra.mxu0 0
        %2244 = vmatprep.subr.bf16.mxu0 0
        %2245 = vmatpush1.bf16.xpose.msra.mxu0 0
        %2246 = vmatprep.subr.bf16.mxu0 0
        %2247 = vmatpush1.bf16.xpose.msra.mxu0 %v2230
        %2248 = vmatprep.subr.bf16.mxu0 0
        %2249 = vmatpush2.bf16.xpose.msra.mxu0 0
        %2250 = vmatprep.subr.bf16.mxu0 0
        %2251 = vmatpush2.bf16.xpose.msra.mxu0 0
        %2252 = vmatprep.subr.bf16.mxu0 0
        %2253 = vmatpush2.bf16.xpose.msra.mxu0 0
        %2254 = vmatprep.subr.bf16.mxu0 0
        %2255 = vmatpush2.bf16.xpose.msra.mxu0 0
        %2256 = vmatprep.subr.bf16.mxu0 0
        %2257 = vmatpush2.bf16.xpose.msra.mxu0 0
        %2258 = vmatprep.subr.bf16.mxu0 0
        %2259 = vmatpush2.bf16.xpose.msra.mxu0 0
        %2260 = vmatprep.subr.bf16.mxu0 0
        %2261 = vmatpush2.bf16.xpose.msra.mxu0 0
        %2262 = vmatprep.subr.bf16.mxu0 0
        %2263 = vmatpush2.bf16.xpose.msra.mxu0 0
        %2264 = vmatprep.mubr.bf16.mxu0 0
        %2265 = vmatmul.mubr.bf16.gmra.mxu0 %v2227
        %v2266 = vpop.f32.mrf.mxu0
        %v2267 = vadd.f32 0.0, %v2266
        %v2268 = vpop.f32.mrf.mxu0
        %v2269 = vpop.f32.mrf.mxu0
        %v2270 = vpop.f32.mrf.mxu0
        %2271 = vdwg.mxu0
        %v2272 = vsel %vm1351, %v2267, -inf
        %2273 = vmax.xlane.f32.xlu0 %v2272
        %v2274 = vpop.xlane.xlu0 %2273
        %v2275 = vsub.f32 %v2267, %v2274
        %v2276 = vmul.f32 %v2275, 1.442695
        %v2277 = vpow.pop %v2276
        %v2278 = vsel %vm1351, %v2277, 0.0
        %2279 = vadd.xlane.f32.xlu0 %v2278
        %v2280 = vpop.xlane.xlu0 %2279
        %v2281 = vpack.c.bf16 %v2277, %v2277
        %2283 = vrot.lane.b32.xlu0 %v2046, 120
        %v2284 = vpop.permute.xlu0 %2283
        %v2286 = vsel %vm1351, %v2281, 0
        %v2289 = vsel %vm1411, %v2284, 0
        %2291 = vmatprep.subr.bf16.mxu0 0
        %2292 = vmatpush1.bf16.msra.mxu0 0
        %2293 = vmatprep.subr.bf16.mxu0 0
        %2294 = vmatpush1.bf16.msra.mxu0 0
        %2295 = vmatprep.subr.bf16.mxu0 0
        %2296 = vmatpush1.bf16.msra.mxu0 0
        %2297 = vmatprep.subr.bf16.mxu0 0
        %2298 = vmatpush1.bf16.msra.mxu0 0
        %2299 = vmatprep.subr.bf16.mxu0 0
        %2300 = vmatpush1.bf16.msra.mxu0 0
        %2301 = vmatprep.subr.bf16.mxu0 0
        %2302 = vmatpush1.bf16.msra.mxu0 0
        %2303 = vmatprep.subr.bf16.mxu0 0
        %2304 = vmatpush1.bf16.msra.mxu0 0
        %2305 = vmatprep.subr.bf16.mxu0 0
        %2306 = vmatpush1.bf16.msra.mxu0 %v2289
        %2307 = vmatprep.subr.bf16.mxu0 0
        %2308 = vmatpush2.bf16.msra.mxu0 0
        %2309 = vmatprep.subr.bf16.mxu0 0
        %2310 = vmatpush2.bf16.msra.mxu0 0
        %2311 = vmatprep.subr.bf16.mxu0 0
        %2312 = vmatpush2.bf16.msra.mxu0 0
        %2313 = vmatprep.subr.bf16.mxu0 0
        %2314 = vmatpush2.bf16.msra.mxu0 0
        %2315 = vmatprep.subr.bf16.mxu0 0
        %2316 = vmatpush2.bf16.msra.mxu0 0
        %2317 = vmatprep.subr.bf16.mxu0 0
        %2318 = vmatpush2.bf16.msra.mxu0 0
        %2319 = vmatprep.subr.bf16.mxu0 0
        %2320 = vmatpush2.bf16.msra.mxu0 0
        %2321 = vmatprep.subr.bf16.mxu0 0
        %2322 = vmatpush2.bf16.msra.mxu0 0
        %2323 = vmatprep.mubr.bf16.mxu0 0
        %2324 = vmatmul.mubr.bf16.gmra.mxu0 %v2286
        %v2325 = vpop.f32.mrf.mxu0
        %v2326 = vadd.f32 0.0, %v2325
        %v2327 = vpop.f32.mrf.mxu0
        %v2328 = vpop.f32.mrf.mxu0
        %v2329 = vpop.f32.mrf.mxu0
        %2330 = vdwg.mxu0
        %v2331 = vrcp.pop %v2280
        %v2332 = vmul.f32 %v2326, %v2331
        %2334 = vrot.lane.b32.xlu0 %v2332, 8
        %v2335 = vpop.permute.xlu0 %2334
        %2337 = vst.msk [vmem:[#allocation2] sm:$0xff] %vm1575, %v2335
        %2338 = vrot.lane.b32.xlu0 %v2114, 112
        %v2339 = vpop.permute.xlu0 %2338
        %2340 = vrot.lane.b32.xlu0 %v1982, 112
        %v2341 = vpop.permute.xlu0 %2340
        %v2343 = vsel %vm1351, %v2339, 0
        %v2346 = vsel %vm1351, %v2341, 0
        %2348 = vmatprep.subr.bf16.mxu0 0
        %2349 = vmatpush1.bf16.xpose.msra.mxu0 0
        %2350 = vmatprep.subr.bf16.mxu0 0
        %2351 = vmatpush1.bf16.xpose.msra.mxu0 0
        %2352 = vmatprep.subr.bf16.mxu0 0
        %2353 = vmatpush1.bf16.xpose.msra.mxu0 0
        %2354 = vmatprep.subr.bf16.mxu0 0
        %2355 = vmatpush1.bf16.xpose.msra.mxu0 0
        %2356 = vmatprep.subr.bf16.mxu0 0
        %2357 = vmatpush1.bf16.xpose.msra.mxu0 0
        %2358 = vmatprep.subr.bf16.mxu0 0
        %2359 = vmatpush1.bf16.xpose.msra.mxu0 0
        %2360 = vmatprep.subr.bf16.mxu0 0
        %2361 = vmatpush1.bf16.xpose.msra.mxu0 0
        %2362 = vmatprep.subr.bf16.mxu0 0
        %2363 = vmatpush1.bf16.xpose.msra.mxu0 %v2346
        %2364 = vmatprep.subr.bf16.mxu0 0
        %2365 = vmatpush2.bf16.xpose.msra.mxu0 0
        %2366 = vmatprep.subr.bf16.mxu0 0
        %2367 = vmatpush2.bf16.xpose.msra.mxu0 0
        %2368 = vmatprep.subr.bf16.mxu0 0
        %2369 = vmatpush2.bf16.xpose.msra.mxu0 0
        %2370 = vmatprep.subr.bf16.mxu0 0
        %2371 = vmatpush2.bf16.xpose.msra.mxu0 0
        %2372 = vmatprep.subr.bf16.mxu0 0
        %2373 = vmatpush2.bf16.xpose.msra.mxu0 0
        %2374 = vmatprep.subr.bf16.mxu0 0
        %2375 = vmatpush2.bf16.xpose.msra.mxu0 0
        %2376 = vmatprep.subr.bf16.mxu0 0
        %2377 = vmatpush2.bf16.xpose.msra.mxu0 0
        %2378 = vmatprep.subr.bf16.mxu0 0
        %2379 = vmatpush2.bf16.xpose.msra.mxu0 0
        %2380 = vmatprep.mubr.bf16.mxu0 0
        %2381 = vmatmul.mubr.bf16.gmra.mxu0 %v2343
        %v2382 = vpop.f32.mrf.mxu0
        %v2383 = vadd.f32 0.0, %v2382
        %v2384 = vpop.f32.mrf.mxu0
        %v2385 = vpop.f32.mrf.mxu0
        %v2386 = vpop.f32.mrf.mxu0
        %2387 = vdwg.mxu0
        %v2388 = vsel %vm1351, %v2383, -inf
        %2389 = vmax.xlane.f32.xlu0 %v2388
        %v2390 = vpop.xlane.xlu0 %2389
        %v2391 = vsub.f32 %v2383, %v2390
        %v2392 = vmul.f32 %v2391, 1.442695
        %v2393 = vpow.pop %v2392
        %v2394 = vsel %vm1351, %v2393, 0.0
        %2395 = vadd.xlane.f32.xlu0 %v2394
        %v2396 = vpop.xlane.xlu0 %2395
        %v2397 = vpack.c.bf16 %v2393, %v2393
        %2398 = vrot.lane.b32.xlu0 %v2046, 112
        %v2399 = vpop.permute.xlu0 %2398
        %v2401 = vsel %vm1351, %v2397, 0
        %v2404 = vsel %vm1411, %v2399, 0
        %2406 = vmatprep.subr.bf16.mxu0 0
        %2407 = vmatpush1.bf16.msra.mxu0 0
        %2408 = vmatprep.subr.bf16.mxu0 0
        %2409 = vmatpush1.bf16.msra.mxu0 0
        %2410 = vmatprep.subr.bf16.mxu0 0
        %2411 = vmatpush1.bf16.msra.mxu0 0
        %2412 = vmatprep.subr.bf16.mxu0 0
        %2413 = vmatpush1.bf16.msra.mxu0 0
        %2414 = vmatprep.subr.bf16.mxu0 0
        %2415 = vmatpush1.bf16.msra.mxu0 0
        %2416 = vmatprep.subr.bf16.mxu0 0
        %2417 = vmatpush1.bf16.msra.mxu0 0
        %2418 = vmatprep.subr.bf16.mxu0 0
        %2419 = vmatpush1.bf16.msra.mxu0 0
        %2420 = vmatprep.subr.bf16.mxu0 0
        %2421 = vmatpush1.bf16.msra.mxu0 %v2404
        %2422 = vmatprep.subr.bf16.mxu0 0
        %2423 = vmatpush2.bf16.msra.mxu0 0
        %2424 = vmatprep.subr.bf16.mxu0 0
        %2425 = vmatpush2.bf16.msra.mxu0 0
        %2426 = vmatprep.subr.bf16.mxu0 0
        %2427 = vmatpush2.bf16.msra.mxu0 0
        %2428 = vmatprep.subr.bf16.mxu0 0
        %2429 = vmatpush2.bf16.msra.mxu0 0
        %2430 = vmatprep.subr.bf16.mxu0 0
        %2431 = vmatpush2.bf16.msra.mxu0 0
        %2432 = vmatprep.subr.bf16.mxu0 0
        %2433 = vmatpush2.bf16.msra.mxu0 0
        %2434 = vmatprep.subr.bf16.mxu0 0
        %2435 = vmatpush2.bf16.msra.mxu0 0
        %2436 = vmatprep.subr.bf16.mxu0 0
        %2437 = vmatpush2.bf16.msra.mxu0 0
        %2438 = vmatprep.mubr.bf16.mxu0 0
        %2439 = vmatmul.mubr.bf16.gmra.mxu0 %v2401
        %v2440 = vpop.f32.mrf.mxu0
        %v2441 = vadd.f32 0.0, %v2440
        %v2442 = vpop.f32.mrf.mxu0
        %v2443 = vpop.f32.mrf.mxu0
        %v2444 = vpop.f32.mrf.mxu0
        %2445 = vdwg.mxu0
        %v2446 = vrcp.pop %v2396
        %v2447 = vmul.f32 %v2441, %v2446
        %2449 = vrot.lane.b32.xlu0 %v2447, 16
        %v2450 = vpop.permute.xlu0 %2449
        %2452 = vst.msk [vmem:[#allocation2] sm:$0xff] %vm1691, %v2450
        %2453 = vrot.lane.b32.xlu0 %v2114, 104
        %v2454 = vpop.permute.xlu0 %2453
        %2455 = vrot.lane.b32.xlu0 %v1982, 104
        %v2456 = vpop.permute.xlu0 %2455
        %v2458 = vsel %vm1351, %v2454, 0
        %v2461 = vsel %vm1351, %v2456, 0
        %2463 = vmatprep.subr.bf16.mxu0 0
        %2464 = vmatpush1.bf16.xpose.msra.mxu0 0
        %2465 = vmatprep.subr.bf16.mxu0 0
        %2466 = vmatpush1.bf16.xpose.msra.mxu0 0
        %2467 = vmatprep.subr.bf16.mxu0 0
        %2468 = vmatpush1.bf16.xpose.msra.mxu0 0
        %2469 = vmatprep.subr.bf16.mxu0 0
        %2470 = vmatpush1.bf16.xpose.msra.mxu0 0
        %2471 = vmatprep.subr.bf16.mxu0 0
        %2472 = vmatpush1.bf16.xpose.msra.mxu0 0
        %2473 = vmatprep.subr.bf16.mxu0 0
        %2474 = vmatpush1.bf16.xpose.msra.mxu0 0
        %2475 = vmatprep.subr.bf16.mxu0 0
        %2476 = vmatpush1.bf16.xpose.msra.mxu0 0
        %2477 = vmatprep.subr.bf16.mxu0 0
        %2478 = vmatpush1.bf16.xpose.msra.mxu0 %v2461
        %2479 = vmatprep.subr.bf16.mxu0 0
        %2480 = vmatpush2.bf16.xpose.msra.mxu0 0
        %2481 = vmatprep.subr.bf16.mxu0 0
        %2482 = vmatpush2.bf16.xpose.msra.mxu0 0
        %2483 = vmatprep.subr.bf16.mxu0 0
        %2484 = vmatpush2.bf16.xpose.msra.mxu0 0
        %2485 = vmatprep.subr.bf16.mxu0 0
        %2486 = vmatpush2.bf16.xpose.msra.mxu0 0
        %2487 = vmatprep.subr.bf16.mxu0 0
        %2488 = vmatpush2.bf16.xpose.msra.mxu0 0
        %2489 = vmatprep.subr.bf16.mxu0 0
        %2490 = vmatpush2.bf16.xpose.msra.mxu0 0
        %2491 = vmatprep.subr.bf16.mxu0 0
        %2492 = vmatpush2.bf16.xpose.msra.mxu0 0
        %2493 = vmatprep.subr.bf16.mxu0 0
        %2494 = vmatpush2.bf16.xpose.msra.mxu0 0
        %2495 = vmatprep.mubr.bf16.mxu0 0
        %2496 = vmatmul.mubr.bf16.gmra.mxu0 %v2458
        %v2497 = vpop.f32.mrf.mxu0
        %v2498 = vadd.f32 0.0, %v2497
        %v2499 = vpop.f32.mrf.mxu0
        %v2500 = vpop.f32.mrf.mxu0
        %v2501 = vpop.f32.mrf.mxu0
        %2502 = vdwg.mxu0
        %v2503 = vsel %vm1351, %v2498, -inf
        %2504 = vmax.xlane.f32.xlu0 %v2503
        %v2505 = vpop.xlane.xlu0 %2504
        %v2506 = vsub.f32 %v2498, %v2505
        %v2507 = vmul.f32 %v2506, 1.442695
        %v2508 = vpow.pop %v2507
        %v2509 = vsel %vm1351, %v2508, 0.0
        %2510 = vadd.xlane.f32.xlu0 %v2509
        %v2511 = vpop.xlane.xlu0 %2510
        %v2512 = vpack.c.bf16 %v2508, %v2508
        %2513 = vrot.lane.b32.xlu0 %v2046, 104
        %v2514 = vpop.permute.xlu0 %2513
        %v2516 = vsel %vm1351, %v2512, 0
        %v2519 = vsel %vm1411, %v2514, 0
        %2521 = vmatprep.subr.bf16.mxu0 0
        %2522 = vmatpush1.bf16.msra.mxu0 0
        %2523 = vmatprep.subr.bf16.mxu0 0
        %2524 = vmatpush1.bf16.msra.mxu0 0
        %2525 = vmatprep.subr.bf16.mxu0 0
        %2526 = vmatpush1.bf16.msra.mxu0 0
        %2527 = vmatprep.subr.bf16.mxu0 0
        %2528 = vmatpush1.bf16.msra.mxu0 0
        %2529 = vmatprep.subr.bf16.mxu0 0
        %2530 = vmatpush1.bf16.msra.mxu0 0
        %2531 = vmatprep.subr.bf16.mxu0 0
        %2532 = vmatpush1.bf16.msra.mxu0 0
        %2533 = vmatprep.subr.bf16.mxu0 0
        %2534 = vmatpush1.bf16.msra.mxu0 0
        %2535 = vmatprep.subr.bf16.mxu0 0
        %2536 = vmatpush1.bf16.msra.mxu0 %v2519
        %2537 = vmatprep.subr.bf16.mxu0 0
        %2538 = vmatpush2.bf16.msra.mxu0 0
        %2539 = vmatprep.subr.bf16.mxu0 0
        %2540 = vmatpush2.bf16.msra.mxu0 0
        %2541 = vmatprep.subr.bf16.mxu0 0
        %2542 = vmatpush2.bf16.msra.mxu0 0
        %2543 = vmatprep.subr.bf16.mxu0 0
        %2544 = vmatpush2.bf16.msra.mxu0 0
        %2545 = vmatprep.subr.bf16.mxu0 0
        %2546 = vmatpush2.bf16.msra.mxu0 0
        %2547 = vmatprep.subr.bf16.mxu0 0
        %2548 = vmatpush2.bf16.msra.mxu0 0
        %2549 = vmatprep.subr.bf16.mxu0 0
        %2550 = vmatpush2.bf16.msra.mxu0 0
        %2551 = vmatprep.subr.bf16.mxu0 0
        %2552 = vmatpush2.bf16.msra.mxu0 0
        %2553 = vmatprep.mubr.bf16.mxu0 0
        %2554 = vmatmul.mubr.bf16.gmra.mxu0 %v2516
        %v2555 = vpop.f32.mrf.mxu0
        %v2556 = vadd.f32 0.0, %v2555
        %v2557 = vpop.f32.mrf.mxu0
        %v2558 = vpop.f32.mrf.mxu0
        %v2559 = vpop.f32.mrf.mxu0
        %2560 = vdwg.mxu0
        %v2561 = vrcp.pop %v2511
        %v2562 = vmul.f32 %v2556, %v2561
        %2564 = vrot.lane.b32.xlu0 %v2562, 24
        %v2565 = vpop.permute.xlu0 %2564
        %2567 = vst.msk [vmem:[#allocation2] sm:$0xff] %vm1807, %v2565
        %v2568 = vld [vmem:[#allocation2] sm:$0xff]
        %v2569 = vpack.c.bf16 %v2568, %v2568
        %v2570 = vld [vmem:[#allocation25] sm:$0xf]
        %v2571 = vld [vmem:[#allocation25 + $0x4] sm:$0xf]
        %v2572 = vld [vmem:[#allocation25 + $0x8] sm:$0xf]
        %v2573 = vld [vmem:[#allocation25 + $0xc] sm:$0xf]
        %v2574 = vld [vmem:[%s43] sm:$0x1]
        %v2576 = vlaneseq
        %v2577 = vshrl.u32 %v2576, 7
        %v2578 = vsub.s32 0, %v2577
        %v2579 = vrot.slane %v2574, %v2578
        %v2585 = vunpack.c.l.b16 %v2570
        %v2586 = vunpack.c.l.b16 %v2571
        %v2587 = vunpack.c.l.b16 %v2572
        %v2588 = vunpack.c.l.b16 %v2573
        %v2589 = vpack.c.b16 %v2586, %v2585
        %v2590 = vpack.c.b16 %v2588, %v2587
        %v2594 = vsel %vm1175, %v2569, 0
        %2596 = vmatprep.subr.bf16.mxu0 0
        %2597 = vmatpush1.bf16.msra.mxu0 0
        %2598 = vmatprep.subr.bf16.mxu0 0
        %2599 = vmatpush1.bf16.msra.mxu0 0
        %2600 = vmatprep.subr.bf16.mxu0 0
        %2601 = vmatpush1.bf16.msra.mxu0 0
        %2602 = vmatprep.subr.bf16.mxu0 0
        %2603 = vmatpush1.bf16.msra.mxu0 0
        %2604 = vmatprep.subr.bf16.mxu0 0
        %2605 = vmatpush1.bf16.msra.mxu0 0
        %2606 = vmatprep.subr.bf16.mxu0 0
        %2607 = vmatpush1.bf16.msra.mxu0 0
        %2608 = vmatprep.subr.bf16.mxu0 0
        %2609 = vmatpush1.bf16.msra.mxu0 %v2590
        %2610 = vmatprep.subr.bf16.mxu0 0
        %2611 = vmatpush1.bf16.msra.mxu0 %v2589
        %2612 = vmatprep.subr.bf16.mxu0 0
        %2613 = vmatpush2.bf16.msra.mxu0 0
        %2614 = vmatprep.subr.bf16.mxu0 0
        %2615 = vmatpush2.bf16.msra.mxu0 0
        %2616 = vmatprep.subr.bf16.mxu0 0
        %2617 = vmatpush2.bf16.msra.mxu0 0
        %2618 = vmatprep.subr.bf16.mxu0 0
        %2619 = vmatpush2.bf16.msra.mxu0 0
        %2620 = vmatprep.subr.bf16.mxu0 0
        %2621 = vmatpush2.bf16.msra.mxu0 0
        %2622 = vmatprep.subr.bf16.mxu0 0
        %2623 = vmatpush2.bf16.msra.mxu0 0
        %2624 = vmatprep.subr.bf16.mxu0 0
        %2625 = vmatpush2.bf16.msra.mxu0 0
        %2626 = vmatprep.subr.bf16.mxu0 0
        %2627 = vmatpush2.bf16.msra.mxu0 0
        %2628 = vmatprep.mubr.bf16.mxu0 0
        %2629 = vmatmul.mubr.bf16.gmra.mxu0 %v2594
        %v2630 = vpop.f32.mrf.mxu0
        %v2631 = vadd.f32 %v2579, %v2630
        %v2632 = vpop.f32.mrf.mxu0
        %v2633 = vpop.f32.mrf.mxu0
        %v2634 = vpop.f32.mrf.mxu0
        %2635 = vdwg.mxu0
        %v2636 = vadd.f32 %v2631, %v1914
        %v2637 = vld [vmem:[%s45] sm:$0x1]
        %v2638 = vld [vmem:[%s47] sm:$0x1]
        %v2639 = vsel %vm1175, %v2636, 0.0
        %2640 = vadd.xlane.f32.xlu0 %v2639
        %v2641 = vpop.xlane.xlu0 %2640
        %v2642 = vmul.f32 %v2641, %v1883
        %v2643 = vsub.f32 %v2636, %v2642
        %v2644 = vmul.f32 %v2643, %v2643
        %v2645 = vsel %vm1175, %v2644, 0.0
        %2646 = vadd.xlane.f32.xlu0 %v2645
        %v2647 = vpop.xlane.xlu0 %2646
        %v2648 = vmul.f32 %v2647, %v1883
        %v2649 = vadd.f32 %v2648, 1e-05
        %v2650 = vrsqrt.pop %v2649
        %v2651 = vmul.f32 %v2649, %v2650
        %vm2652 = vcmp.eq.f32.partialorder %v2649, inf
        %v2653 = vsel %vm2652, %v2649, %v2651
        %vm2654 = vcmp.eq.f32.partialorder %v2649, 0.0
        %v2655 = vand.u32 %v2649, 2147483648
        %v2656 = vsel %vm2654, %v2655, %v2653
        %v2657 = vrcp.pop %v2656
        %v2658 = vmul.f32 %v2643, %v2657
        %v2660 = vlaneseq
        %v2661 = vshrl.u32 %v2660, 7
        %v2662 = vsub.s32 0, %v2661
        %v2663 = vrot.slane %v2637, %v2662
        %v2665 = vmul.f32 %v2663, %v2658
        %v2667 = vlaneseq
        %v2668 = vshrl.u32 %v2667, 7
        %v2669 = vsub.s32 0, %v2668
        %v2670 = vrot.slane %v2638, %v2669
        %v2672 = vadd.f32 %v2665, %v2670
        %v2673 = vpack.c.bf16 %v2672, %v2672
        %v2674 = vld [vmem:[#allocation27] sm:$0xf]
        %v2675 = vld [vmem:[#allocation27 + $0x4] sm:$0xf]
        %v2676 = vld [vmem:[#allocation27 + $0x8] sm:$0xf]
        %v2677 = vld [vmem:[#allocation27 + $0xc] sm:$0xf]
        %v2678 = vld [vmem:[%s51] sm:$0x1]
        %v2680 = vlaneseq
        %v2681 = vshrl.u32 %v2680, 7
        %v2682 = vsub.s32 0, %v2681
        %v2683 = vrot.slane %v2678, %v2682
        %v2689 = vunpack.c.l.b16 %v2674
        %v2690 = vunpack.c.l.b16 %v2675
        %v2691 = vunpack.c.l.b16 %v2676
        %v2692 = vunpack.c.l.b16 %v2677
        %v2693 = vpack.c.b16 %v2690, %v2689
        %v2694 = vpack.c.b16 %v2692, %v2691
        %v2698 = vsel %vm1175, %v2673, 0
        %2700 = vmatprep.subr.bf16.mxu0 0
        %2701 = vmatpush1.bf16.msra.mxu0 0
        %2702 = vmatprep.subr.bf16.mxu0 0
        %2703 = vmatpush1.bf16.msra.mxu0 0
        %2704 = vmatprep.subr.bf16.mxu0 0
        %2705 = vmatpush1.bf16.msra.mxu0 0
        %2706 = vmatprep.subr.bf16.mxu0 0
        %2707 = vmatpush1.bf16.msra.mxu0 0
        %2708 = vmatprep.subr.bf16.mxu0 0
        %2709 = vmatpush1.bf16.msra.mxu0 0
        %2710 = vmatprep.subr.bf16.mxu0 0
        %2711 = vmatpush1.bf16.msra.mxu0 0
        %2712 = vmatprep.subr.bf16.mxu0 0
        %2713 = vmatpush1.bf16.msra.mxu0 %v2694
        %2714 = vmatprep.subr.bf16.mxu0 0
        %2715 = vmatpush1.bf16.msra.mxu0 %v2693
        %2716 = vmatprep.subr.bf16.mxu0 0
        %2717 = vmatpush2.bf16.msra.mxu0 0
        %2718 = vmatprep.subr.bf16.mxu0 0
        %2719 = vmatpush2.bf16.msra.mxu0 0
        %2720 = vmatprep.subr.bf16.mxu0 0
        %2721 = vmatpush2.bf16.msra.mxu0 0
        %2722 = vmatprep.subr.bf16.mxu0 0
        %2723 = vmatpush2.bf16.msra.mxu0 0
        %2724 = vmatprep.subr.bf16.mxu0 0
        %2725 = vmatpush2.bf16.msra.mxu0 0
        %2726 = vmatprep.subr.bf16.mxu0 0
        %2727 = vmatpush2.bf16.msra.mxu0 0
        %2728 = vmatprep.subr.bf16.mxu0 0
        %2729 = vmatpush2.bf16.msra.mxu0 0
        %2730 = vmatprep.subr.bf16.mxu0 0
        %2731 = vmatpush2.bf16.msra.mxu0 0
        %2732 = vmatprep.mubr.bf16.mxu0 0
        %2733 = vmatmul.mubr.bf16.gmra.mxu0 %v2698
        %v2734 = vpop.f32.mrf.mxu0
        %v2735 = vadd.f32 %v2683, %v2734
        %v2736 = vpop.f32.mrf.mxu0
        %v2737 = vpop.f32.mrf.mxu0
        %v2738 = vpop.f32.mrf.mxu0
        %2739 = vdwg.mxu0
        %v2740 = vmax.f32 %v2735, 0.0
        %v2741 = vpack.c.bf16 %v2740, %v2740
        %v2742 = vld [vmem:[%s53] sm:$0xf]
        %v2743 = vld [vmem:[%s53 + $0x4] sm:$0xf]
        %v2744 = vld [vmem:[%s53 + $0x8] sm:$0xf]
        %v2745 = vld [vmem:[%s53 + $0xc] sm:$0xf]
        %v2746 = vld [vmem:[%s53 + $0x10] sm:$0xf]
        %v2747 = vld [vmem:[%s53 + $0x14] sm:$0xf]
        %v2748 = vld [vmem:[%s53 + $0x18] sm:$0xf]
        %v2749 = vld [vmem:[%s53 + $0x1c] sm:$0xf]
        %v2750 = vld [vmem:[%s55] sm:$0x1]
        %v2752 = vlaneseq
        %v2753 = vshrl.u32 %v2752, 7
        %v2754 = vsub.s32 0, %v2753
        %v2755 = vrot.slane %v2750, %v2754
        %v2765 = vunpack.c.l.b16 %v2742
        %v2766 = vunpack.c.l.b16 %v2743
        %v2767 = vunpack.c.l.b16 %v2744
        %v2768 = vunpack.c.l.b16 %v2745
        %v2769 = vunpack.c.l.b16 %v2746
        %v2770 = vunpack.c.l.b16 %v2747
        %v2771 = vunpack.c.l.b16 %v2748
        %v2772 = vunpack.c.l.b16 %v2749
        %v2773 = vpack.c.b16 %v2766, %v2765
        %v2774 = vpack.c.b16 %v2768, %v2767
        %v2775 = vpack.c.b16 %v2770, %v2769
        %v2776 = vpack.c.b16 %v2772, %v2771
        %vm2781 = vcmask 523264
        %v2783 = vsel %vm2781, %v2741, 0
        %2785 = vmatprep.subr.bf16.mxu0 0
        %2786 = vmatpush1.bf16.msra.mxu0 0
        %2787 = vmatprep.subr.bf16.mxu0 0
        %2788 = vmatpush1.bf16.msra.mxu0 0
        %2789 = vmatprep.subr.bf16.mxu0 0
        %2790 = vmatpush1.bf16.msra.mxu0 0
        %2791 = vmatprep.subr.bf16.mxu0 0
        %2792 = vmatpush1.bf16.msra.mxu0 0
        %2793 = vmatprep.subr.bf16.mxu0 0
        %2794 = vmatpush1.bf16.msra.mxu0 %v2776
        %2795 = vmatprep.subr.bf16.mxu0 0
        %2796 = vmatpush1.bf16.msra.mxu0 %v2775
        %2797 = vmatprep.subr.bf16.mxu0 0
        %2798 = vmatpush1.bf16.msra.mxu0 %v2774
        %2799 = vmatprep.subr.bf16.mxu0 0
        %2800 = vmatpush1.bf16.msra.mxu0 %v2773
        %2801 = vmatprep.subr.bf16.mxu0 0
        %2802 = vmatpush2.bf16.msra.mxu0 0
        %2803 = vmatprep.subr.bf16.mxu0 0
        %2804 = vmatpush2.bf16.msra.mxu0 0
        %2805 = vmatprep.subr.bf16.mxu0 0
        %2806 = vmatpush2.bf16.msra.mxu0 0
        %2807 = vmatprep.subr.bf16.mxu0 0
        %2808 = vmatpush2.bf16.msra.mxu0 0
        %2809 = vmatprep.subr.bf16.mxu0 0
        %2810 = vmatpush2.bf16.msra.mxu0 0
        %2811 = vmatprep.subr.bf16.mxu0 0
        %2812 = vmatpush2.bf16.msra.mxu0 0
        %2813 = vmatprep.subr.bf16.mxu0 0
        %2814 = vmatpush2.bf16.msra.mxu0 0
        %2815 = vmatprep.subr.bf16.mxu0 0
        %2816 = vmatpush2.bf16.msra.mxu0 0
        %2817 = vmatprep.mubr.bf16.mxu0 0
        %2818 = vmatmul.mubr.bf16.gmra.mxu0 %v2783
        %v2819 = vpop.f32.mrf.mxu0
        %v2820 = vadd.f32 %v2755, %v2819
        %v2821 = vpop.f32.mrf.mxu0
        %v2822 = vpop.f32.mrf.mxu0
        %v2823 = vpop.f32.mrf.mxu0
        %2824 = vdwg.mxu0
        %v2825 = vadd.f32 %v2820, %v2672
        %v2826 = vld [vmem:[%s57] sm:$0x1]
        %v2827 = vld [vmem:[%s59] sm:$0x1]
        %v2828 = vsel %vm1175, %v2825, 0.0
        %2829 = vadd.xlane.f32.xlu0 %v2828
        %v2830 = vpop.xlane.xlu0 %2829
        %v2831 = vmul.f32 %v2830, %v1883
        %v2832 = vsub.f32 %v2825, %v2831
        %v2833 = vmul.f32 %v2832, %v2832
        %v2834 = vsel %vm1175, %v2833, 0.0
        %2835 = vadd.xlane.f32.xlu0 %v2834
        %v2836 = vpop.xlane.xlu0 %2835
        %v2837 = vmul.f32 %v2836, %v1883
        %v2838 = vadd.f32 %v2837, 1e-05
        %v2839 = vrsqrt.pop %v2838
        %v2840 = vmul.f32 %v2838, %v2839
        %vm2841 = vcmp.eq.f32.partialorder %v2838, inf
        %v2842 = vsel %vm2841, %v2838, %v2840
        %vm2843 = vcmp.eq.f32.partialorder %v2838, 0.0
        %v2844 = vand.u32 %v2838, 2147483648
        %v2845 = vsel %vm2843, %v2844, %v2842
        %v2846 = vrcp.pop %v2845
        %v2847 = vmul.f32 %v2832, %v2846
        %v2849 = vlaneseq
        %v2850 = vshrl.u32 %v2849, 7
        %v2851 = vsub.s32 0, %v2850
        %v2852 = vrot.slane %v2826, %v2851
        %v2854 = vmul.f32 %v2852, %v2847
        %v2856 = vlaneseq
        %v2857 = vshrl.u32 %v2856, 7
        %v2858 = vsub.s32 0, %v2857
        %v2859 = vrot.slane %v2827, %v2858
        %v2861 = vadd.f32 %v2854, %v2859
        %2862 = vst.msk [vmem:[%s1138] sm:$0xff] %vm1175, %v2861
        %s2863 = sand.u32 %s733, 1
        %s2864 = scalar_lea.sflag [#allocation6], %s2863
        %s2865 = sand.u32 %s733, 1
        %s2866 = smul.addr %s2865, 8
        %s2867 = scalar_lea.vmem [#allocation28], %s2866
        // Predicated region
        $region201: #{tpu_custom_call.1} parent=139 // pred_check
          %p2868 = pneg %p743
        $region202: #{tpu_custom_call.1} parent=139 // pred_check_branch
          %2870 = sbr.rel (%p2868) target = $region204
        $region203: #{tpu_custom_call.1} parent=139 // pred_region
          %s2872 = ssub.s32 128, 128
          %2873 = vsyncadd %s2864, %s2872
          %s2874 = smul.addr %s85, 128
          %s2875 = scalar_lea.hbm %s61, %s2874
          %s2877 = sshll.u32 %s2867, 4
          %s2878 = int_to_ptr.vmem [resolvable:$true] %s2877
          %2880 = dma.vmem_to_hbm [thread:$0]  %s2878, 128, %s2875, %s2864
        $region204: #{tpu_custom_call.1} parent=139 // pred_fallthru
          _
      $region140: #{tpu_custom_call.1} parent=5 // pred_fallthru
        _
      %p2881 = scmp.le.s32.totalorder 2, %s80
      // Predicated region
      $region205: #{tpu_custom_call.1} parent=5 // pred_check
        %p2882 = pneg %p2881
      $region206: #{tpu_custom_call.1} parent=5 // pred_check_branch
        %2884 = sbr.rel (%p2882) target = $region208
      $region207: #{tpu_custom_call.1} parent=5 // pred_region
        %s2885 = ssub.s32 %s80, 2
        // Predicated region
        $region209: #{tpu_custom_call.1} parent=207 // pred_check
          %p2886 = pneg %p749
        $region210: #{tpu_custom_call.1} parent=207 // pred_check_branch
          %2888 = sbr.rel (%p2886) target = $region212
        $region211: #{tpu_custom_call.1} parent=207 // pred_region
          %s2889 = sand.u32 %s734, 1
          %s2890 = scalar_lea.sflag [#allocation6], %s2889
          %s2891 = sand.u32 %s734, 1
          %s2892 = smul.addr %s2891, 8
          %s2893 = scalar_lea.vmem [#allocation28], %s2892
          %2894 = dma.done %s2890, 128
        $region212: #{tpu_custom_call.1} parent=207 // pred_fallthru
          _
      $region208: #{tpu_custom_call.1} parent=5 // pred_fallthru
        _
    $region6: #{tpu_custom_call.1} parent=1 // loop_footer
      %s84 = sadd.s32 1, %s80
    $region7: #{tpu_custom_call.1} parent=1 // loop_footer_branch
      %79 = sbr.rel target = $region3
    $region8: #{tpu_custom_call.1} parent=1 // loop_exit
      _
    %2895 = vsyncpa [#allocation5], 1
    %s2896 = scalar_lea.sflag [#allocation5], 1
    %2897 = vsyncpa %s2896, 1
    %2898 = vsyncpa [#allocation8], 1
    %2899 = vsyncpa [#allocation11], 1
    %2900 = vsyncpa [#allocation14], 1
    %2901 = vsyncpa [#allocation17], 1
    %2902 = vsyncpa [#allocation20], 1
    %2903 = vsyncpa [#allocation23], 1
    %2904 = vsyncpa [#allocation26], 1
    %2905 = vsyncpa [#allocation6], 1
    %s2906 = scalar_lea.sflag [#allocation6], 1
    %2907 = vsyncpa %s2906, 1

</llo_original>
